<compile_context>
chip_gen: v7x
topology: tpu7x:2x2x1
jax: 0.10.0
libtpu: 0.0.40
codegen_flags: <defaults>
</compile_context>

<pallas_src>
import functools

import jax
import jax.numpy as jnp
from jax.experimental import pallas as pl
from jax.experimental.pallas import tpu as pltpu


def block_kernel(x_ref, mask_ref, g1_ref, b1_ref, wqkv_ref, wp_ref, bp_ref,
                 g2_ref, b2_ref, w1_ref, bw1_ref, w2_ref, bw2_ref,
                 o_ref, *, num_heads, head_dim, eps, approx_recip):
    """One grid step == `bt` batch elements; full Block forward fused."""
    bt, T, C = x_ref.shape
    R = bt * T
    cdtype = wqkv_ref.dtype                       # matmul compute dtype (bf16)

    xf = x_ref[...].astype(jnp.float32).reshape(R, C)   # (R, C) f32

    def layer_norm(z, g_ref, b_ref):
        mu = jnp.mean(z, axis=-1, keepdims=True)
        var = jnp.mean(jnp.square(z - mu), axis=-1, keepdims=True)
        zn = (z - mu) * jax.lax.rsqrt(var + eps)
        return zn * g_ref[...].astype(jnp.float32) + b_ref[...].astype(jnp.float32)

    # ---------------- LayerNorm 1 + fused QKV projection --------------------
    ln1 = layer_norm(xf, g1_ref, b1_ref)
    qkv = jnp.dot(ln1.astype(cdtype), wqkv_ref[...],
                  preferred_element_type=jnp.float32)          # (R, 3C) f32
    k_all = qkv[:, 0:C]
    q_all = qkv[:, C:2 * C]
    v_all = qkv[:, 2 * C:3 * C]

    # ---------------- per-head attention with fused output projection -------
    scale = 1.0 / float(C * C)                    # matches reference: / C**2
    mask_bias = mask_ref[...]                     # (T, T) f32: 0 keep / -1e30 masked
    contract_last = (((1,), (1,)), ((), ()))      # k @ q^T without explicit transpose

    proj_parts = []
    for b in range(bt):                           # static unroll, bt is small
        r0 = b * T
        proj_b = jnp.zeros((T, C), jnp.float32)   # lane-dense f32 accumulator
        for h in range(num_heads):                # static unroll, H is small
            lo = h * head_dim
            # scale folded into k (T*hd mults instead of T*T per head)
            kh = (k_all[r0:r0 + T, lo:lo + head_dim] * scale).astype(cdtype)
            qh = q_all[r0:r0 + T, lo:lo + head_dim].astype(cdtype)
            vh = v_all[r0:r0 + T, lo:lo + head_dim].astype(cdtype)

            # weight = k @ q^T / C**2   (reference's unusual ordering, kept exactly)
            w = jax.lax.dot_general(kh, qh, contract_last,
                                    preferred_element_type=jnp.float32)  # (T, T)
            w = w + mask_bias

            # softmax over last axis; EUP (approx) reciprocal off the VALU path
            w = w - jnp.max(w, axis=-1, keepdims=True)
            e = jnp.exp(w)
            inv = pl.reciprocal(jnp.sum(e, axis=-1, keepdims=True),
                                approx=approx_recip)
            p = e * inv
            # attention-prob dropout: identity (eval mode)

            ph = jnp.dot(p.astype(cdtype), vh,
                         preferred_element_type=jnp.float32)             # (T, hd)
            # fold the output projection into the head loop (no lane concat)
            proj_b = proj_b + jnp.dot(ph.astype(cdtype),
                                      wp_ref[lo:lo + head_dim, :],
                                      preferred_element_type=jnp.float32)  # (T, C)
        proj_parts.append(proj_b)

    proj = proj_parts[0] if bt == 1 else jnp.concatenate(proj_parts, axis=0)  # (R, C)
    # output dropout: identity (eval mode)
    x1 = xf + proj + bp_ref[...].astype(jnp.float32)                     # residual, f32

    # ---------------- LayerNorm 2 + FeedForward + residual ------------------
    ln2 = layer_norm(x1, g2_ref, b2_ref)
    h1 = jnp.dot(ln2.astype(cdtype), w1_ref[...],
                 preferred_element_type=jnp.float32)
    h1 = jnp.maximum(h1 + bw1_ref[...].astype(jnp.float32), 0.0)          # (R, 4C)
    ff = jnp.dot(h1.astype(cdtype), w2_ref[...],
                 preferred_element_type=jnp.float32)
    ff = ff + bw2_ref[...].astype(jnp.float32)
    # FFN dropout: identity (eval mode)

    o_ref[...] = (x1 + ff).reshape(bt, T, C).astype(o_ref.dtype)          # lane-dense write


def _pick_batch_tile(B, T, target_rows=256):
    """Block enough batch elements per step to fill MXU rows, but keep >=2 grid
    steps when B allows so both v7x TensorCores get work."""
    divisors = [d for d in range(1, B + 1) if B % d == 0]
    fitting = [d for d in divisors if d * T <= target_rows] or [1]
    bt = max(fitting)
    while bt > 1 and B // bt < 2:
        smaller = [d for d in divisors if d < bt]
        bt = max(smaller) if smaller else 1
    return bt


def _const_index_map(nd):
    return lambda *_args, _nd=nd: (0,) * _nd


def _weight_spec(arr, single_buffer):
    """Full-array spec; constant index_map => single buffering is sufficient."""
    if single_buffer:
        return pl.BlockSpec(arr.shape, _const_index_map(arr.ndim),
                            pipeline_mode=pl.Buffered(buffer_count=1))
    return pl.BlockSpec(arr.shape, _const_index_map(arr.ndim))


def transformer_block(x, params, *, num_heads, head_dim, eps=1e-5,
                      batch_tile=None, approx_recip=True):
    """params = (g1, b1, wqkv, wp, bp, g2, b2, w1, bw1, w2, bw2).
    wqkv must be stacked exactly as [Wk | Wq | Wv] with shape (C, 3C)."""
    B, T, C = x.shape
    g1, b1, wqkv, wp, bp, g2, b2, w1, bw1, w2, bw2 = params
    assert wqkv.shape == (C, 3 * C), "wqkv must be [Wk | Wq | Wv] of shape (C, 3C)"

    bt = _pick_batch_tile(B, T) if batch_tile is None else batch_tile
    assert B % bt == 0, "batch tile must divide batch"
    grid = (B // bt,)
    R = bt * T

    # Causal additive bias, computed once (not per grid step): 0 keep / -1e30 masked.
    tril = jnp.tril(jnp.ones((T, T), dtype=jnp.bool_))
    mask_bias = jnp.where(tril, 0.0, -1e30).astype(jnp.float32)

    kernel = functools.partial(block_kernel, num_heads=num_heads,
                               head_dim=head_dim, eps=eps,
                               approx_recip=approx_recip)

    # ------- explicit VMEM budget (weights single-buffered + f32 temporaries)
    w_item = jnp.dtype(wqkv.dtype).itemsize
    weight_bytes = (wqkv.size + wp.size + w1.size + w2.size) * w_item
    bias_bytes = (g1.size + b1.size + bp.size + g2.size + b2.size
                  + bw1.size + bw2.size) * 4
    io_bytes = 2 * 2 * bt * T * C * jnp.dtype(x.dtype).itemsize  # in+out, double-buffered
    tmp_bytes = 4 * (R * 3 * C + R * 4 * C + 6 * R * C + 3 * T * T)
    vmem_limit = int(2 * (weight_bytes + bias_bytes + io_bytes + tmp_bytes + T * T * 4))
    vmem_limit = min(max(vmem_limit, 32 * 2 ** 20), 60 * 2 ** 20)  # headroom under v7x 64 MiB

    # ------- advisory cost estimate for the XLA scheduler --------------------
    flops = int(B * (24 * T * C * C + 4 * T * T * C))
    transcendentals = int(B * num_heads * T * T)
    bytes_accessed = int(2 * x.size * jnp.dtype(x.dtype).itemsize
                         + sum(int(p.size) * jnp.dtype(p.dtype).itemsize for p in params)
                         + T * T * 4)
    cost = pl.CostEstimate(flops=flops, transcendentals=transcendentals,
                           bytes_accessed=bytes_accessed)

    operands = (x, mask_bias, g1, b1, wqkv, wp, bp, g2, b2, w1, bw1, w2, bw2)

    def build_call(single_buffer_weights):
        consts = [mask_bias, g1, b1, wqkv, wp, bp, g2, b2, w1, bw1, w2, bw2]
        in_specs = [pl.BlockSpec((bt, T, C), lambda i: (i, 0, 0))] + \
                   [_weight_spec(a, single_buffer_weights) for a in consts]
        return pl.pallas_call(
            kernel,
            out_shape=jax.ShapeDtypeStruct((B, T, C), x.dtype),
            grid=grid,
            in_specs=in_specs,
            out_specs=pl.BlockSpec((bt, T, C), lambda i: (i, 0, 0)),
            compiler_params=pltpu.CompilerParams(
                dimension_semantics=("parallel",),      # megacore over batch tiles
                vmem_limit_bytes=vmem_limit),
            cost_estimate=cost,
        )

    try:
        return build_call(single_buffer_weights=True)(*operands)
    except Exception:
        # TODO(synk): pl.Buffered(1) single-buffering of constant-index weights is
        # a newer Pallas feature; fall back to default double-buffering if the
        # installed JAX does not support it.
        return build_call(single_buffer_weights=False)(*operands)


def block_reference(x, params, *, num_heads, head_dim, eps=1e-5):
    """Pure-JAX reference mirroring the PyTorch module, with matmul operands
    cast to the weights' dtype (bf16) + f32 accumulation like the kernel."""
    g1, b1, wqkv, wp, bp, g2, b2, w1, bw1, w2, bw2 = params
    B, T, C = x.shape
    cd = wqkv.dtype

    def mm(a, w):
        return jnp.dot(a.astype(cd), w.astype(cd),
                       preferred_element_type=jnp.float32)

    def ln(z, g, beta):
        mu = jnp.mean(z, -1, keepdims=True)
        var = jnp.mean((z - mu) ** 2, -1, keepdims=True)
        return (z - mu) / jnp.sqrt(var + eps) * g + beta

    xf = x.astype(jnp.float32)
    h = ln(xf, g1[0], b1[0])
    qkv = mm(h.reshape(B * T, C), wqkv).reshape(B, T, 3 * C)
    k, q, v = qkv[..., :C], qkv[..., C:2 * C], qkv[..., 2 * C:]
    mask = jnp.tril(jnp.ones((T, T), bool))
    outs = []
    for hh in range(num_heads):
        sl = slice(hh * head_dim, (hh + 1) * head_dim)
        kh, qh, vh = k[..., sl], q[..., sl], v[..., sl]
        w = jnp.einsum('bid,bjd->bij', kh.astype(cd), qh.astype(cd),
                       preferred_element_type=jnp.float32) / float(C ** 2)
        w = jnp.where(mask, w, -jnp.inf)
        p = jax.nn.softmax(w, axis=-1)
        outs.append(jnp.einsum('bij,bjd->bid', p.astype(cd), vh.astype(cd),
                               preferred_element_type=jnp.float32))
    attn = jnp.concatenate(outs, -1)
    proj = mm(attn.reshape(B * T, C), wp).reshape(B, T, C) + bp[0]
    x1 = xf + proj
    h2 = ln(x1, g2[0], b2[0])
    h1 = jnp.maximum(mm(h2.reshape(B * T, C), w1) + bw1[0], 0.0)
    ff = (mm(h1, w2) + bw2[0]).reshape(B, T, C)
    return x1 + ff


if __name__ == "__main__":
    # small shapes consistent with the module
    B, T = 4, 8                  # batch, block_size (sequence length)
    C = 32                       # embedding_dim
    H = 4                        # num_heads
    hd = C // H                  # head_dim

    key = jax.random.PRNGKey(0)
    ks = jax.random.split(key, 10)

    x = jax.random.normal(ks[0], (B, T, C), dtype=jnp.float32)

    # deterministic synthetic parameters (not a checkpoint load);
    # matmul weights pre-cast to bf16 (f32 accumulation happens in the kernel)
    cdtype = jnp.bfloat16
    g1 = jnp.ones((1, C), jnp.float32)
    b1 = 0.05 * jax.random.normal(ks[1], (1, C), dtype=jnp.float32)
    wqkv = (0.1 * jax.random.normal(ks[2], (C, 3 * C), dtype=jnp.float32)).astype(cdtype)  # [Wk|Wq|Wv]
    wp = (0.1 * jax.random.normal(ks[3], (C, C), dtype=jnp.float32)).astype(cdtype)
    bp = 0.1 * jax.random.normal(ks[4], (1, C), dtype=jnp.float32)
    g2 = jnp.ones((1, C), jnp.float32)
    b2 = 0.05 * jax.random.normal(ks[5], (1, C), dtype=jnp.float32)
    w1 = (0.1 * jax.random.normal(ks[6], (C, 4 * C), dtype=jnp.float32)).astype(cdtype)
    bw1 = 0.1 * jax.random.normal(ks[7], (1, 4 * C), dtype=jnp.float32)
    w2 = (0.1 * jax.random.normal(ks[8], (4 * C, C), dtype=jnp.float32)).astype(cdtype)
    bw2 = 0.1 * jax.random.normal(ks[9], (1, C), dtype=jnp.float32)

    params = (g1, b1, wqkv, wp, bp, g2, b2, w1, bw1, w2, bw2)

    out = transformer_block(x, params, num_heads=H, head_dim=hd)
    jax.block_until_ready(out)
    assert out.shape == (B, T, C)

    ref = block_reference(x, params, num_heads=H, head_dim=hd)
    max_diff = float(jnp.max(jnp.abs(out - ref)))
    # tolerance covers pl.reciprocal(approx=True) in the softmax and bf16
    # accumulation-order differences vs the XLA reference
    assert max_diff < 2e-2, f"mismatch vs reference: max|diff|={max_diff}"

    print("KERNEL_OK")
</pallas_src>

<mosaic_0001>
module attributes {stable_mosaic.version = 11 : i64} {
  func.func @block_kernel(%arg0: i32, %arg1: memref<2x8x32xf32, #tpu.memory_space<vmem>>, %arg2: memref<8x8xf32, #tpu.memory_space<vmem>>, %arg3: memref<1x32xf32, #tpu.memory_space<vmem>>, %arg4: memref<1x32xf32, #tpu.memory_space<vmem>>, %arg5: memref<32x96xbf16, #tpu.memory_space<vmem>>, %arg6: memref<32x32xbf16, #tpu.memory_space<vmem>>, %arg7: memref<1x32xf32, #tpu.memory_space<vmem>>, %arg8: memref<1x32xf32, #tpu.memory_space<vmem>>, %arg9: memref<1x32xf32, #tpu.memory_space<vmem>>, %arg10: memref<32x128xbf16, #tpu.memory_space<vmem>>, %arg11: memref<1x128xf32, #tpu.memory_space<vmem>>, %arg12: memref<128x32xbf16, #tpu.memory_space<vmem>>, %arg13: memref<1x32xf32, #tpu.memory_space<vmem>>, %arg14: memref<2x8x32xf32, #tpu.memory_space<vmem>>) attributes {dimension_semantics = [#tpu.dimension_semantics<parallel>], iteration_bounds = array<i64: 2>, scalar_prefetch = 0 : i64, scratch_operands = 0 : i64, tpu.core_type = #tpu.core_type<tc>, window_params = [{transform_indices = @transform_0, window_bounds = array<i64: 2, 8, 32>}, {pipeline_mode = #tpu.pipeline_mode<synchronous>, transform_indices = @transform_1, window_bounds = array<i64: 8, 8>}, {pipeline_mode = #tpu.pipeline_mode<synchronous>, transform_indices = @transform_2, window_bounds = array<i64: 1, 32>}, {pipeline_mode = #tpu.pipeline_mode<synchronous>, transform_indices = @transform_3, window_bounds = array<i64: 1, 32>}, {pipeline_mode = #tpu.pipeline_mode<synchronous>, transform_indices = @transform_4, window_bounds = array<i64: 32, 96>}, {pipeline_mode = #tpu.pipeline_mode<synchronous>, transform_indices = @transform_5, window_bounds = array<i64: 32, 32>}, {pipeline_mode = #tpu.pipeline_mode<synchronous>, transform_indices = @transform_6, window_bounds = array<i64: 1, 32>}, {pipeline_mode = #tpu.pipeline_mode<synchronous>, transform_indices = @transform_7, window_bounds = array<i64: 1, 32>}, {pipeline_mode = #tpu.pipeline_mode<synchronous>, transform_indices = @transform_8, window_bounds = array<i64: 1, 32>}, {pipeline_mode = #tpu.pipeline_mode<synchronous>, transform_indices = @transform_9, window_bounds = array<i64: 32, 128>}, {pipeline_mode = #tpu.pipeline_mode<synchronous>, transform_indices = @transform_10, window_bounds = array<i64: 1, 128>}, {pipeline_mode = #tpu.pipeline_mode<synchronous>, transform_indices = @transform_11, window_bounds = array<i64: 128, 32>}, {pipeline_mode = #tpu.pipeline_mode<synchronous>, transform_indices = @transform_12, window_bounds = array<i64: 1, 32>}, {transform_indices = @transform_13, window_bounds = array<i64: 2, 8, 32>}]} {
    %c0 = arith.constant 0 : index
    %c0_0 = arith.constant 0 : index
    %c0_1 = arith.constant 0 : index
    %0 = vector.load %arg1[%c0, %c0_0, %c0_1] : memref<2x8x32xf32, #tpu.memory_space<vmem>>, vector<2x8x32xf32>
    %1 = vector.shape_cast %0 : vector<2x8x32xf32> to vector<16x32xf32>
    %cst = arith.constant dense<0.000000e+00> : vector<16xf32>
    %2 = vector.multi_reduction <add>, %1, %cst [1] : vector<16x32xf32> to vector<16xf32>
    %3 = vector.shape_cast %2 : vector<16xf32> to vector<16x1xf32>
    %cst_2 = arith.constant 3.200000e+01 : f32
    %4 = vector.broadcast %cst_2 : f32 to vector<16x1xf32>
    %5 = arith.divf %3, %4 : vector<16x1xf32>
    %6 = vector.broadcast %5 : vector<16x1xf32> to vector<16x32xf32>
    %7 = arith.subf %1, %6 : vector<16x32xf32>
    %8 = arith.mulf %7, %7 : vector<16x32xf32>
    %cst_3 = arith.constant dense<0.000000e+00> : vector<16xf32>
    %9 = vector.multi_reduction <add>, %8, %cst_3 [1] : vector<16x32xf32> to vector<16xf32>
    %10 = vector.shape_cast %9 : vector<16xf32> to vector<16x1xf32>
    %cst_4 = arith.constant 3.200000e+01 : f32
    %11 = vector.broadcast %cst_4 : f32 to vector<16x1xf32>
    %12 = arith.divf %10, %11 : vector<16x1xf32>
    %13 = vector.broadcast %5 : vector<16x1xf32> to vector<16x32xf32>
    %14 = arith.subf %1, %13 : vector<16x32xf32>
    %cst_5 = arith.constant 9.99999974E-6 : f32
    %15 = vector.broadcast %cst_5 : f32 to vector<16x1xf32>
    %16 = arith.addf %12, %15 : vector<16x1xf32>
    %17 = math.rsqrt %16 : vector<16x1xf32>
    %18 = vector.broadcast %17 : vector<16x1xf32> to vector<16x32xf32>
    %19 = arith.mulf %14, %18 : vector<16x32xf32>
    %c0_6 = arith.constant 0 : index
    %c0_7 = arith.constant 0 : index
    %20 = vector.load %arg3[%c0_6, %c0_7] : memref<1x32xf32, #tpu.memory_space<vmem>>, vector<1x32xf32>
    %21 = vector.broadcast %20 : vector<1x32xf32> to vector<16x32xf32>
    %22 = arith.mulf %19, %21 : vector<16x32xf32>
    %c0_8 = arith.constant 0 : index
    %c0_9 = arith.constant 0 : index
    %23 = vector.load %arg4[%c0_8, %c0_9] : memref<1x32xf32, #tpu.memory_space<vmem>>, vector<1x32xf32>
    %24 = vector.broadcast %23 : vector<1x32xf32> to vector<16x32xf32>
    %25 = arith.addf %22, %24 : vector<16x32xf32>
    %26 = arith.truncf %25 : vector<16x32xf32> to vector<16x32xbf16>
    %c0_10 = arith.constant 0 : index
    %c0_11 = arith.constant 0 : index
    %27 = vector.load %arg5[%c0_10, %c0_11] : memref<32x96xbf16, #tpu.memory_space<vmem>>, vector<32x96xbf16>
    %cst_12 = arith.constant dense<0.000000e+00> : vector<16x96xf32>
    %28 = tpu.matmul %26, %27, %cst_12 {dimension_numbers = #tpu.dot_dimension_numbers<[1], [0], [0], [1], [0, 0, 1, 1], [], []>} : vector<16x32xbf16>, vector<32x96xbf16>, vector<16x96xf32> -> vector<16x96xf32>
    %29 = vector.extract_strided_slice %28 {offsets = [0, 0], sizes = [16, 32], strides = [1, 1]} : vector<16x96xf32> to vector<16x32xf32>
    %30 = vector.extract_strided_slice %28 {offsets = [0, 32], sizes = [16, 32], strides = [1, 1]} : vector<16x96xf32> to vector<16x32xf32>
    %31 = vector.extract_strided_slice %28 {offsets = [0, 64], sizes = [16, 32], strides = [1, 1]} : vector<16x96xf32> to vector<16x32xf32>
    %c0_13 = arith.constant 0 : index
    %c0_14 = arith.constant 0 : index
    %32 = vector.load %arg2[%c0_13, %c0_14] : memref<8x8xf32, #tpu.memory_space<vmem>>, vector<8x8xf32>
    %cst_15 = arith.constant 0.000000e+00 : f32
    %33 = vector.broadcast %cst_15 : f32 to vector<8x32xf32>
    %34 = vector.extract_strided_slice %29 {offsets = [0, 0], sizes = [8, 8], strides = [1, 1]} : vector<16x32xf32> to vector<8x8xf32>
    %cst_16 = arith.constant 9.765625E-4 : f32
    %35 = vector.broadcast %cst_16 : f32 to vector<8x8xf32>
    %36 = arith.mulf %34, %35 : vector<8x8xf32>
    %37 = arith.truncf %36 : vector<8x8xf32> to vector<8x8xbf16>
    %38 = vector.extract_strided_slice %30 {offsets = [0, 0], sizes = [8, 8], strides = [1, 1]} : vector<16x32xf32> to vector<8x8xf32>
    %39 = arith.truncf %38 : vector<8x8xf32> to vector<8x8xbf16>
    %40 = vector.extract_strided_slice %31 {offsets = [0, 0], sizes = [8, 8], strides = [1, 1]} : vector<16x32xf32> to vector<8x8xf32>
    %41 = arith.truncf %40 : vector<8x8xf32> to vector<8x8xbf16>
    %cst_17 = arith.constant dense<0.000000e+00> : vector<8x8xf32>
    %42 = tpu.matmul %37, %39, %cst_17 {dimension_numbers = #tpu.dot_dimension_numbers<[1], [1], [0], [0], [0, 0, 1, 0], [], []>} : vector<8x8xbf16>, vector<8x8xbf16>, vector<8x8xf32> -> vector<8x8xf32>
    %43 = arith.addf %42, %32 : vector<8x8xf32>
    %cst_18 = arith.constant dense<0xFF800000> : vector<8xf32>
    %44 = vector.multi_reduction <maximumf>, %43, %cst_18 [1] : vector<8x8xf32> to vector<8xf32>
    %45 = vector.shape_cast %44 : vector<8xf32> to vector<8x1xf32>
    %46 = vector.broadcast %45 : vector<8x1xf32> to vector<8x8xf32>
    %47 = arith.subf %43, %46 : vector<8x8xf32>
    %48 = math.exp %47 : vector<8x8xf32>
    %cst_19 = arith.constant dense<0.000000e+00> : vector<8xf32>
    %49 = vector.multi_reduction <add>, %48, %cst_19 [1] : vector<8x8xf32> to vector<8xf32>
    %50 = vector.shape_cast %49 : vector<8xf32> to vector<8x1xf32>
    %51 = tpu.reciprocal %50 {approx = true} : vector<8x1xf32> -> vector<8x1xf32>
    %52 = vector.broadcast %51 : vector<8x1xf32> to vector<8x8xf32>
    %53 = arith.mulf %48, %52 : vector<8x8xf32>
    %54 = arith.truncf %53 : vector<8x8xf32> to vector<8x8xbf16>
    %cst_20 = arith.constant dense<0.000000e+00> : vector<8x8xf32>
    %55 = tpu.matmul %54, %41, %cst_20 {dimension_numbers = #tpu.dot_dimension_numbers<[1], [0], [0], [1], [0, 0, 1, 1], [], []>} : vector<8x8xbf16>, vector<8x8xbf16>, vector<8x8xf32> -> vector<8x8xf32>
    %56 = arith.truncf %55 : vector<8x8xf32> to vector<8x8xbf16>
    %c0_21 = arith.constant 0 : index
    %c0_22 = arith.constant 0 : index
    %57 = vector.load %arg6[%c0_21, %c0_22] : memref<32x32xbf16, #tpu.memory_space<vmem>>, vector<8x32xbf16>
    %cst_23 = arith.constant dense<0.000000e+00> : vector<8x32xf32>
    %58 = tpu.matmul %56, %57, %cst_23 {dimension_numbers = #tpu.dot_dimension_numbers<[1], [0], [0], [1], [0, 0, 1, 1], [], []>} : vector<8x8xbf16>, vector<8x32xbf16>, vector<8x32xf32> -> vector<8x32xf32>
    %59 = arith.addf %33, %58 : vector<8x32xf32>
    %60 = vector.extract_strided_slice %29 {offsets = [0, 8], sizes = [8, 8], strides = [1, 1]} : vector<16x32xf32> to vector<8x8xf32>
    %cst_24 = arith.constant 9.765625E-4 : f32
    %61 = vector.broadcast %cst_24 : f32 to vector<8x8xf32>
    %62 = arith.mulf %60, %61 : vector<8x8xf32>
    %63 = arith.truncf %62 : vector<8x8xf32> to vector<8x8xbf16>
    %64 = vector.extract_strided_slice %30 {offsets = [0, 8], sizes = [8, 8], strides = [1, 1]} : vector<16x32xf32> to vector<8x8xf32>
    %65 = arith.truncf %64 : vector<8x8xf32> to vector<8x8xbf16>
    %66 = vector.extract_strided_slice %31 {offsets = [0, 8], sizes = [8, 8], strides = [1, 1]} : vector<16x32xf32> to vector<8x8xf32>
    %67 = arith.truncf %66 : vector<8x8xf32> to vector<8x8xbf16>
    %cst_25 = arith.constant dense<0.000000e+00> : vector<8x8xf32>
    %68 = tpu.matmul %63, %65, %cst_25 {dimension_numbers = #tpu.dot_dimension_numbers<[1], [1], [0], [0], [0, 0, 1, 0], [], []>} : vector<8x8xbf16>, vector<8x8xbf16>, vector<8x8xf32> -> vector<8x8xf32>
    %69 = arith.addf %68, %32 : vector<8x8xf32>
    %cst_26 = arith.constant dense<0xFF800000> : vector<8xf32>
    %70 = vector.multi_reduction <maximumf>, %69, %cst_26 [1] : vector<8x8xf32> to vector<8xf32>
    %71 = vector.shape_cast %70 : vector<8xf32> to vector<8x1xf32>
    %72 = vector.broadcast %71 : vector<8x1xf32> to vector<8x8xf32>
    %73 = arith.subf %69, %72 : vector<8x8xf32>
    %74 = math.exp %73 : vector<8x8xf32>
    %cst_27 = arith.constant dense<0.000000e+00> : vector<8xf32>
    %75 = vector.multi_reduction <add>, %74, %cst_27 [1] : vector<8x8xf32> to vector<8xf32>
    %76 = vector.shape_cast %75 : vector<8xf32> to vector<8x1xf32>
    %77 = tpu.reciprocal %76 {approx = true} : vector<8x1xf32> -> vector<8x1xf32>
    %78 = vector.broadcast %77 : vector<8x1xf32> to vector<8x8xf32>
    %79 = arith.mulf %74, %78 : vector<8x8xf32>
    %80 = arith.truncf %79 : vector<8x8xf32> to vector<8x8xbf16>
    %cst_28 = arith.constant dense<0.000000e+00> : vector<8x8xf32>
    %81 = tpu.matmul %80, %67, %cst_28 {dimension_numbers = #tpu.dot_dimension_numbers<[1], [0], [0], [1], [0, 0, 1, 1], [], []>} : vector<8x8xbf16>, vector<8x8xbf16>, vector<8x8xf32> -> vector<8x8xf32>
    %82 = arith.truncf %81 : vector<8x8xf32> to vector<8x8xbf16>
    %c8 = arith.constant 8 : index
    %c0_29 = arith.constant 0 : index
    %83 = vector.load %arg6[%c8, %c0_29] : memref<32x32xbf16, #tpu.memory_space<vmem>>, vector<8x32xbf16>
    %cst_30 = arith.constant dense<0.000000e+00> : vector<8x32xf32>
    %84 = tpu.matmul %82, %83, %cst_30 {dimension_numbers = #tpu.dot_dimension_numbers<[1], [0], [0], [1], [0, 0, 1, 1], [], []>} : vector<8x8xbf16>, vector<8x32xbf16>, vector<8x32xf32> -> vector<8x32xf32>
    %85 = arith.addf %59, %84 : vector<8x32xf32>
    %86 = vector.extract_strided_slice %29 {offsets = [0, 16], sizes = [8, 8], strides = [1, 1]} : vector<16x32xf32> to vector<8x8xf32>
    %cst_31 = arith.constant 9.765625E-4 : f32
    %87 = vector.broadcast %cst_31 : f32 to vector<8x8xf32>
    %88 = arith.mulf %86, %87 : vector<8x8xf32>
    %89 = arith.truncf %88 : vector<8x8xf32> to vector<8x8xbf16>
    %90 = vector.extract_strided_slice %30 {offsets = [0, 16], sizes = [8, 8], strides = [1, 1]} : vector<16x32xf32> to vector<8x8xf32>
    %91 = arith.truncf %90 : vector<8x8xf32> to vector<8x8xbf16>
    %92 = vector.extract_strided_slice %31 {offsets = [0, 16], sizes = [8, 8], strides = [1, 1]} : vector<16x32xf32> to vector<8x8xf32>
    %93 = arith.truncf %92 : vector<8x8xf32> to vector<8x8xbf16>
    %cst_32 = arith.constant dense<0.000000e+00> : vector<8x8xf32>
    %94 = tpu.matmul %89, %91, %cst_32 {dimension_numbers = #tpu.dot_dimension_numbers<[1], [1], [0], [0], [0, 0, 1, 0], [], []>} : vector<8x8xbf16>, vector<8x8xbf16>, vector<8x8xf32> -> vector<8x8xf32>
    %95 = arith.addf %94, %32 : vector<8x8xf32>
    %cst_33 = arith.constant dense<0xFF800000> : vector<8xf32>
    %96 = vector.multi_reduction <maximumf>, %95, %cst_33 [1] : vector<8x8xf32> to vector<8xf32>
    %97 = vector.shape_cast %96 : vector<8xf32> to vector<8x1xf32>
    %98 = vector.broadcast %97 : vector<8x1xf32> to vector<8x8xf32>
    %99 = arith.subf %95, %98 : vector<8x8xf32>
    %100 = math.exp %99 : vector<8x8xf32>
    %cst_34 = arith.constant dense<0.000000e+00> : vector<8xf32>
    %101 = vector.multi_reduction <add>, %100, %cst_34 [1] : vector<8x8xf32> to vector<8xf32>
    %102 = vector.shape_cast %101 : vector<8xf32> to vector<8x1xf32>
    %103 = tpu.reciprocal %102 {approx = true} : vector<8x1xf32> -> vector<8x1xf32>
    %104 = vector.broadcast %103 : vector<8x1xf32> to vector<8x8xf32>
    %105 = arith.mulf %100, %104 : vector<8x8xf32>
    %106 = arith.truncf %105 : vector<8x8xf32> to vector<8x8xbf16>
    %cst_35 = arith.constant dense<0.000000e+00> : vector<8x8xf32>
    %107 = tpu.matmul %106, %93, %cst_35 {dimension_numbers = #tpu.dot_dimension_numbers<[1], [0], [0], [1], [0, 0, 1, 1], [], []>} : vector<8x8xbf16>, vector<8x8xbf16>, vector<8x8xf32> -> vector<8x8xf32>
    %108 = arith.truncf %107 : vector<8x8xf32> to vector<8x8xbf16>
    %c16 = arith.constant 16 : index
    %c0_36 = arith.constant 0 : index
    %109 = vector.load %arg6[%c16, %c0_36] : memref<32x32xbf16, #tpu.memory_space<vmem>>, vector<8x32xbf16>
    %cst_37 = arith.constant dense<0.000000e+00> : vector<8x32xf32>
    %110 = tpu.matmul %108, %109, %cst_37 {dimension_numbers = #tpu.dot_dimension_numbers<[1], [0], [0], [1], [0, 0, 1, 1], [], []>} : vector<8x8xbf16>, vector<8x32xbf16>, vector<8x32xf32> -> vector<8x32xf32>
    %111 = arith.addf %85, %110 : vector<8x32xf32>
    %112 = vector.extract_strided_slice %29 {offsets = [0, 24], sizes = [8, 8], strides = [1, 1]} : vector<16x32xf32> to vector<8x8xf32>
    %cst_38 = arith.constant 9.765625E-4 : f32
    %113 = vector.broadcast %cst_38 : f32 to vector<8x8xf32>
    %114 = arith.mulf %112, %113 : vector<8x8xf32>
    %115 = arith.truncf %114 : vector<8x8xf32> to vector<8x8xbf16>
    %116 = vector.extract_strided_slice %30 {offsets = [0, 24], sizes = [8, 8], strides = [1, 1]} : vector<16x32xf32> to vector<8x8xf32>
    %117 = arith.truncf %116 : vector<8x8xf32> to vector<8x8xbf16>
    %118 = vector.extract_strided_slice %31 {offsets = [0, 24], sizes = [8, 8], strides = [1, 1]} : vector<16x32xf32> to vector<8x8xf32>
    %119 = arith.truncf %118 : vector<8x8xf32> to vector<8x8xbf16>
    %cst_39 = arith.constant dense<0.000000e+00> : vector<8x8xf32>
    %120 = tpu.matmul %115, %117, %cst_39 {dimension_numbers = #tpu.dot_dimension_numbers<[1], [1], [0], [0], [0, 0, 1, 0], [], []>} : vector<8x8xbf16>, vector<8x8xbf16>, vector<8x8xf32> -> vector<8x8xf32>
    %121 = arith.addf %120, %32 : vector<8x8xf32>
    %cst_40 = arith.constant dense<0xFF800000> : vector<8xf32>
    %122 = vector.multi_reduction <maximumf>, %121, %cst_40 [1] : vector<8x8xf32> to vector<8xf32>
    %123 = vector.shape_cast %122 : vector<8xf32> to vector<8x1xf32>
    %124 = vector.broadcast %123 : vector<8x1xf32> to vector<8x8xf32>
    %125 = arith.subf %121, %124 : vector<8x8xf32>
    %126 = math.exp %125 : vector<8x8xf32>
    %cst_41 = arith.constant dense<0.000000e+00> : vector<8xf32>
    %127 = vector.multi_reduction <add>, %126, %cst_41 [1] : vector<8x8xf32> to vector<8xf32>
    %128 = vector.shape_cast %127 : vector<8xf32> to vector<8x1xf32>
    %129 = tpu.reciprocal %128 {approx = true} : vector<8x1xf32> -> vector<8x1xf32>
    %130 = vector.broadcast %129 : vector<8x1xf32> to vector<8x8xf32>
    %131 = arith.mulf %126, %130 : vector<8x8xf32>
    %132 = arith.truncf %131 : vector<8x8xf32> to vector<8x8xbf16>
    %cst_42 = arith.constant dense<0.000000e+00> : vector<8x8xf32>
    %133 = tpu.matmul %132, %119, %cst_42 {dimension_numbers = #tpu.dot_dimension_numbers<[1], [0], [0], [1], [0, 0, 1, 1], [], []>} : vector<8x8xbf16>, vector<8x8xbf16>, vector<8x8xf32> -> vector<8x8xf32>
    %134 = arith.truncf %133 : vector<8x8xf32> to vector<8x8xbf16>
    %c24 = arith.constant 24 : index
    %c0_43 = arith.constant 0 : index
    %135 = vector.load %arg6[%c24, %c0_43] : memref<32x32xbf16, #tpu.memory_space<vmem>>, vector<8x32xbf16>
    %cst_44 = arith.constant dense<0.000000e+00> : vector<8x32xf32>
    %136 = tpu.matmul %134, %135, %cst_44 {dimension_numbers = #tpu.dot_dimension_numbers<[1], [0], [0], [1], [0, 0, 1, 1], [], []>} : vector<8x8xbf16>, vector<8x32xbf16>, vector<8x32xf32> -> vector<8x32xf32>
    %137 = arith.addf %111, %136 : vector<8x32xf32>
    %cst_45 = arith.constant 0.000000e+00 : f32
    %138 = vector.broadcast %cst_45 : f32 to vector<8x32xf32>
    %139 = vector.extract_strided_slice %29 {offsets = [8, 0], sizes = [8, 8], strides = [1, 1]} : vector<16x32xf32> to vector<8x8xf32>
    %cst_46 = arith.constant 9.765625E-4 : f32
    %140 = vector.broadcast %cst_46 : f32 to vector<8x8xf32>
    %141 = arith.mulf %139, %140 : vector<8x8xf32>
    %142 = arith.truncf %141 : vector<8x8xf32> to vector<8x8xbf16>
    %143 = vector.extract_strided_slice %30 {offsets = [8, 0], sizes = [8, 8], strides = [1, 1]} : vector<16x32xf32> to vector<8x8xf32>
    %144 = arith.truncf %143 : vector<8x8xf32> to vector<8x8xbf16>
    %145 = vector.extract_strided_slice %31 {offsets = [8, 0], sizes = [8, 8], strides = [1, 1]} : vector<16x32xf32> to vector<8x8xf32>
    %146 = arith.truncf %145 : vector<8x8xf32> to vector<8x8xbf16>
    %cst_47 = arith.constant dense<0.000000e+00> : vector<8x8xf32>
    %147 = tpu.matmul %142, %144, %cst_47 {dimension_numbers = #tpu.dot_dimension_numbers<[1], [1], [0], [0], [0, 0, 1, 0], [], []>} : vector<8x8xbf16>, vector<8x8xbf16>, vector<8x8xf32> -> vector<8x8xf32>
    %148 = arith.addf %147, %32 : vector<8x8xf32>
    %cst_48 = arith.constant dense<0xFF800000> : vector<8xf32>
    %149 = vector.multi_reduction <maximumf>, %148, %cst_48 [1] : vector<8x8xf32> to vector<8xf32>
    %150 = vector.shape_cast %149 : vector<8xf32> to vector<8x1xf32>
    %151 = vector.broadcast %150 : vector<8x1xf32> to vector<8x8xf32>
    %152 = arith.subf %148, %151 : vector<8x8xf32>
    %153 = math.exp %152 : vector<8x8xf32>
    %cst_49 = arith.constant dense<0.000000e+00> : vector<8xf32>
    %154 = vector.multi_reduction <add>, %153, %cst_49 [1] : vector<8x8xf32> to vector<8xf32>
    %155 = vector.shape_cast %154 : vector<8xf32> to vector<8x1xf32>
    %156 = tpu.reciprocal %155 {approx = true} : vector<8x1xf32> -> vector<8x1xf32>
    %157 = vector.broadcast %156 : vector<8x1xf32> to vector<8x8xf32>
    %158 = arith.mulf %153, %157 : vector<8x8xf32>
    %159 = arith.truncf %158 : vector<8x8xf32> to vector<8x8xbf16>
    %cst_50 = arith.constant dense<0.000000e+00> : vector<8x8xf32>
    %160 = tpu.matmul %159, %146, %cst_50 {dimension_numbers = #tpu.dot_dimension_numbers<[1], [0], [0], [1], [0, 0, 1, 1], [], []>} : vector<8x8xbf16>, vector<8x8xbf16>, vector<8x8xf32> -> vector<8x8xf32>
    %161 = arith.truncf %160 : vector<8x8xf32> to vector<8x8xbf16>
    %c0_51 = arith.constant 0 : index
    %c0_52 = arith.constant 0 : index
    %162 = vector.load %arg6[%c0_51, %c0_52] : memref<32x32xbf16, #tpu.memory_space<vmem>>, vector<8x32xbf16>
    %cst_53 = arith.constant dense<0.000000e+00> : vector<8x32xf32>
    %163 = tpu.matmul %161, %162, %cst_53 {dimension_numbers = #tpu.dot_dimension_numbers<[1], [0], [0], [1], [0, 0, 1, 1], [], []>} : vector<8x8xbf16>, vector<8x32xbf16>, vector<8x32xf32> -> vector<8x32xf32>
    %164 = arith.addf %138, %163 : vector<8x32xf32>
    %165 = vector.extract_strided_slice %29 {offsets = [8, 8], sizes = [8, 8], strides = [1, 1]} : vector<16x32xf32> to vector<8x8xf32>
    %cst_54 = arith.constant 9.765625E-4 : f32
    %166 = vector.broadcast %cst_54 : f32 to vector<8x8xf32>
    %167 = arith.mulf %165, %166 : vector<8x8xf32>
    %168 = arith.truncf %167 : vector<8x8xf32> to vector<8x8xbf16>
    %169 = vector.extract_strided_slice %30 {offsets = [8, 8], sizes = [8, 8], strides = [1, 1]} : vector<16x32xf32> to vector<8x8xf32>
    %170 = arith.truncf %169 : vector<8x8xf32> to vector<8x8xbf16>
    %171 = vector.extract_strided_slice %31 {offsets = [8, 8], sizes = [8, 8], strides = [1, 1]} : vector<16x32xf32> to vector<8x8xf32>
    %172 = arith.truncf %171 : vector<8x8xf32> to vector<8x8xbf16>
    %cst_55 = arith.constant dense<0.000000e+00> : vector<8x8xf32>
    %173 = tpu.matmul %168, %170, %cst_55 {dimension_numbers = #tpu.dot_dimension_numbers<[1], [1], [0], [0], [0, 0, 1, 0], [], []>} : vector<8x8xbf16>, vector<8x8xbf16>, vector<8x8xf32> -> vector<8x8xf32>
    %174 = arith.addf %173, %32 : vector<8x8xf32>
    %cst_56 = arith.constant dense<0xFF800000> : vector<8xf32>
    %175 = vector.multi_reduction <maximumf>, %174, %cst_56 [1] : vector<8x8xf32> to vector<8xf32>
    %176 = vector.shape_cast %175 : vector<8xf32> to vector<8x1xf32>
    %177 = vector.broadcast %176 : vector<8x1xf32> to vector<8x8xf32>
    %178 = arith.subf %174, %177 : vector<8x8xf32>
    %179 = math.exp %178 : vector<8x8xf32>
    %cst_57 = arith.constant dense<0.000000e+00> : vector<8xf32>
    %180 = vector.multi_reduction <add>, %179, %cst_57 [1] : vector<8x8xf32> to vector<8xf32>
    %181 = vector.shape_cast %180 : vector<8xf32> to vector<8x1xf32>
    %182 = tpu.reciprocal %181 {approx = true} : vector<8x1xf32> -> vector<8x1xf32>
    %183 = vector.broadcast %182 : vector<8x1xf32> to vector<8x8xf32>
    %184 = arith.mulf %179, %183 : vector<8x8xf32>
    %185 = arith.truncf %184 : vector<8x8xf32> to vector<8x8xbf16>
    %cst_58 = arith.constant dense<0.000000e+00> : vector<8x8xf32>
    %186 = tpu.matmul %185, %172, %cst_58 {dimension_numbers = #tpu.dot_dimension_numbers<[1], [0], [0], [1], [0, 0, 1, 1], [], []>} : vector<8x8xbf16>, vector<8x8xbf16>, vector<8x8xf32> -> vector<8x8xf32>
    %187 = arith.truncf %186 : vector<8x8xf32> to vector<8x8xbf16>
    %c8_59 = arith.constant 8 : index
    %c0_60 = arith.constant 0 : index
    %188 = vector.load %arg6[%c8_59, %c0_60] : memref<32x32xbf16, #tpu.memory_space<vmem>>, vector<8x32xbf16>
    %cst_61 = arith.constant dense<0.000000e+00> : vector<8x32xf32>
    %189 = tpu.matmul %187, %188, %cst_61 {dimension_numbers = #tpu.dot_dimension_numbers<[1], [0], [0], [1], [0, 0, 1, 1], [], []>} : vector<8x8xbf16>, vector<8x32xbf16>, vector<8x32xf32> -> vector<8x32xf32>
    %190 = arith.addf %164, %189 : vector<8x32xf32>
    %191 = vector.extract_strided_slice %29 {offsets = [8, 16], sizes = [8, 8], strides = [1, 1]} : vector<16x32xf32> to vector<8x8xf32>
    %cst_62 = arith.constant 9.765625E-4 : f32
    %192 = vector.broadcast %cst_62 : f32 to vector<8x8xf32>
    %193 = arith.mulf %191, %192 : vector<8x8xf32>
    %194 = arith.truncf %193 : vector<8x8xf32> to vector<8x8xbf16>
    %195 = vector.extract_strided_slice %30 {offsets = [8, 16], sizes = [8, 8], strides = [1, 1]} : vector<16x32xf32> to vector<8x8xf32>
    %196 = arith.truncf %195 : vector<8x8xf32> to vector<8x8xbf16>
    %197 = vector.extract_strided_slice %31 {offsets = [8, 16], sizes = [8, 8], strides = [1, 1]} : vector<16x32xf32> to vector<8x8xf32>
    %198 = arith.truncf %197 : vector<8x8xf32> to vector<8x8xbf16>
    %cst_63 = arith.constant dense<0.000000e+00> : vector<8x8xf32>
    %199 = tpu.matmul %194, %196, %cst_63 {dimension_numbers = #tpu.dot_dimension_numbers<[1], [1], [0], [0], [0, 0, 1, 0], [], []>} : vector<8x8xbf16>, vector<8x8xbf16>, vector<8x8xf32> -> vector<8x8xf32>
    %200 = arith.addf %199, %32 : vector<8x8xf32>
    %cst_64 = arith.constant dense<0xFF800000> : vector<8xf32>
    %201 = vector.multi_reduction <maximumf>, %200, %cst_64 [1] : vector<8x8xf32> to vector<8xf32>
    %202 = vector.shape_cast %201 : vector<8xf32> to vector<8x1xf32>
    %203 = vector.broadcast %202 : vector<8x1xf32> to vector<8x8xf32>
    %204 = arith.subf %200, %203 : vector<8x8xf32>
    %205 = math.exp %204 : vector<8x8xf32>
    %cst_65 = arith.constant dense<0.000000e+00> : vector<8xf32>
    %206 = vector.multi_reduction <add>, %205, %cst_65 [1] : vector<8x8xf32> to vector<8xf32>
    %207 = vector.shape_cast %206 : vector<8xf32> to vector<8x1xf32>
    %208 = tpu.reciprocal %207 {approx = true} : vector<8x1xf32> -> vector<8x1xf32>
    %209 = vector.broadcast %208 : vector<8x1xf32> to vector<8x8xf32>
    %210 = arith.mulf %205, %209 : vector<8x8xf32>
    %211 = arith.truncf %210 : vector<8x8xf32> to vector<8x8xbf16>
    %cst_66 = arith.constant dense<0.000000e+00> : vector<8x8xf32>
    %212 = tpu.matmul %211, %198, %cst_66 {dimension_numbers = #tpu.dot_dimension_numbers<[1], [0], [0], [1], [0, 0, 1, 1], [], []>} : vector<8x8xbf16>, vector<8x8xbf16>, vector<8x8xf32> -> vector<8x8xf32>
    %213 = arith.truncf %212 : vector<8x8xf32> to vector<8x8xbf16>
    %c16_67 = arith.constant 16 : index
    %c0_68 = arith.constant 0 : index
    %214 = vector.load %arg6[%c16_67, %c0_68] : memref<32x32xbf16, #tpu.memory_space<vmem>>, vector<8x32xbf16>
    %cst_69 = arith.constant dense<0.000000e+00> : vector<8x32xf32>
    %215 = tpu.matmul %213, %214, %cst_69 {dimension_numbers = #tpu.dot_dimension_numbers<[1], [0], [0], [1], [0, 0, 1, 1], [], []>} : vector<8x8xbf16>, vector<8x32xbf16>, vector<8x32xf32> -> vector<8x32xf32>
    %216 = arith.addf %190, %215 : vector<8x32xf32>
    %217 = vector.extract_strided_slice %29 {offsets = [8, 24], sizes = [8, 8], strides = [1, 1]} : vector<16x32xf32> to vector<8x8xf32>
    %cst_70 = arith.constant 9.765625E-4 : f32
    %218 = vector.broadcast %cst_70 : f32 to vector<8x8xf32>
    %219 = arith.mulf %217, %218 : vector<8x8xf32>
    %220 = arith.truncf %219 : vector<8x8xf32> to vector<8x8xbf16>
    %221 = vector.extract_strided_slice %30 {offsets = [8, 24], sizes = [8, 8], strides = [1, 1]} : vector<16x32xf32> to vector<8x8xf32>
    %222 = arith.truncf %221 : vector<8x8xf32> to vector<8x8xbf16>
    %223 = vector.extract_strided_slice %31 {offsets = [8, 24], sizes = [8, 8], strides = [1, 1]} : vector<16x32xf32> to vector<8x8xf32>
    %224 = arith.truncf %223 : vector<8x8xf32> to vector<8x8xbf16>
    %cst_71 = arith.constant dense<0.000000e+00> : vector<8x8xf32>
    %225 = tpu.matmul %220, %222, %cst_71 {dimension_numbers = #tpu.dot_dimension_numbers<[1], [1], [0], [0], [0, 0, 1, 0], [], []>} : vector<8x8xbf16>, vector<8x8xbf16>, vector<8x8xf32> -> vector<8x8xf32>
    %226 = arith.addf %225, %32 : vector<8x8xf32>
    %cst_72 = arith.constant dense<0xFF800000> : vector<8xf32>
    %227 = vector.multi_reduction <maximumf>, %226, %cst_72 [1] : vector<8x8xf32> to vector<8xf32>
    %228 = vector.shape_cast %227 : vector<8xf32> to vector<8x1xf32>
    %229 = vector.broadcast %228 : vector<8x1xf32> to vector<8x8xf32>
    %230 = arith.subf %226, %229 : vector<8x8xf32>
    %231 = math.exp %230 : vector<8x8xf32>
    %cst_73 = arith.constant dense<0.000000e+00> : vector<8xf32>
    %232 = vector.multi_reduction <add>, %231, %cst_73 [1] : vector<8x8xf32> to vector<8xf32>
    %233 = vector.shape_cast %232 : vector<8xf32> to vector<8x1xf32>
    %234 = tpu.reciprocal %233 {approx = true} : vector<8x1xf32> -> vector<8x1xf32>
    %235 = vector.broadcast %234 : vector<8x1xf32> to vector<8x8xf32>
    %236 = arith.mulf %231, %235 : vector<8x8xf32>
    %237 = arith.truncf %236 : vector<8x8xf32> to vector<8x8xbf16>
    %cst_74 = arith.constant dense<0.000000e+00> : vector<8x8xf32>
    %238 = tpu.matmul %237, %224, %cst_74 {dimension_numbers = #tpu.dot_dimension_numbers<[1], [0], [0], [1], [0, 0, 1, 1], [], []>} : vector<8x8xbf16>, vector<8x8xbf16>, vector<8x8xf32> -> vector<8x8xf32>
    %239 = arith.truncf %238 : vector<8x8xf32> to vector<8x8xbf16>
    %c24_75 = arith.constant 24 : index
    %c0_76 = arith.constant 0 : index
    %240 = vector.load %arg6[%c24_75, %c0_76] : memref<32x32xbf16, #tpu.memory_space<vmem>>, vector<8x32xbf16>
    %cst_77 = arith.constant dense<0.000000e+00> : vector<8x32xf32>
    %241 = tpu.matmul %239, %240, %cst_77 {dimension_numbers = #tpu.dot_dimension_numbers<[1], [0], [0], [1], [0, 0, 1, 1], [], []>} : vector<8x8xbf16>, vector<8x32xbf16>, vector<8x32xf32> -> vector<8x32xf32>
    %242 = arith.addf %216, %241 : vector<8x32xf32>
    %243 = tpu.concatenate %137, %242 in 0 : vector<8x32xf32>, vector<8x32xf32> -> vector<16x32xf32>
    %244 = arith.addf %1, %243 : vector<16x32xf32>
    %c0_78 = arith.constant 0 : index
    %c0_79 = arith.constant 0 : index
    %245 = vector.load %arg7[%c0_78, %c0_79] : memref<1x32xf32, #tpu.memory_space<vmem>>, vector<1x32xf32>
    %246 = vector.broadcast %245 : vector<1x32xf32> to vector<16x32xf32>
    %247 = arith.addf %244, %246 : vector<16x32xf32>
    %cst_80 = arith.constant dense<0.000000e+00> : vector<16xf32>
    %248 = vector.multi_reduction <add>, %247, %cst_80 [1] : vector<16x32xf32> to vector<16xf32>
    %249 = vector.shape_cast %248 : vector<16xf32> to vector<16x1xf32>
    %cst_81 = arith.constant 3.200000e+01 : f32
    %250 = vector.broadcast %cst_81 : f32 to vector<16x1xf32>
    %251 = arith.divf %249, %250 : vector<16x1xf32>
    %252 = vector.broadcast %251 : vector<16x1xf32> to vector<16x32xf32>
    %253 = arith.subf %247, %252 : vector<16x32xf32>
    %254 = arith.mulf %253, %253 : vector<16x32xf32>
    %cst_82 = arith.constant dense<0.000000e+00> : vector<16xf32>
    %255 = vector.multi_reduction <add>, %254, %cst_82 [1] : vector<16x32xf32> to vector<16xf32>
    %256 = vector.shape_cast %255 : vector<16xf32> to vector<16x1xf32>
    %cst_83 = arith.constant 3.200000e+01 : f32
    %257 = vector.broadcast %cst_83 : f32 to vector<16x1xf32>
    %258 = arith.divf %256, %257 : vector<16x1xf32>
    %259 = vector.broadcast %251 : vector<16x1xf32> to vector<16x32xf32>
    %260 = arith.subf %247, %259 : vector<16x32xf32>
    %cst_84 = arith.constant 9.99999974E-6 : f32
    %261 = vector.broadcast %cst_84 : f32 to vector<16x1xf32>
    %262 = arith.addf %258, %261 : vector<16x1xf32>
    %263 = math.rsqrt %262 : vector<16x1xf32>
    %264 = vector.broadcast %263 : vector<16x1xf32> to vector<16x32xf32>
    %265 = arith.mulf %260, %264 : vector<16x32xf32>
    %c0_85 = arith.constant 0 : index
    %c0_86 = arith.constant 0 : index
    %266 = vector.load %arg8[%c0_85, %c0_86] : memref<1x32xf32, #tpu.memory_space<vmem>>, vector<1x32xf32>
    %267 = vector.broadcast %266 : vector<1x32xf32> to vector<16x32xf32>
    %268 = arith.mulf %265, %267 : vector<16x32xf32>
    %c0_87 = arith.constant 0 : index
    %c0_88 = arith.constant 0 : index
    %269 = vector.load %arg9[%c0_87, %c0_88] : memref<1x32xf32, #tpu.memory_space<vmem>>, vector<1x32xf32>
    %270 = vector.broadcast %269 : vector<1x32xf32> to vector<16x32xf32>
    %271 = arith.addf %268, %270 : vector<16x32xf32>
    %272 = arith.truncf %271 : vector<16x32xf32> to vector<16x32xbf16>
    %c0_89 = arith.constant 0 : index
    %c0_90 = arith.constant 0 : index
    %273 = vector.load %arg10[%c0_89, %c0_90] : memref<32x128xbf16, #tpu.memory_space<vmem>>, vector<32x128xbf16>
    %cst_91 = arith.constant dense<0.000000e+00> : vector<16x128xf32>
    %274 = tpu.matmul %272, %273, %cst_91 {dimension_numbers = #tpu.dot_dimension_numbers<[1], [0], [0], [1], [0, 0, 1, 1], [], []>} : vector<16x32xbf16>, vector<32x128xbf16>, vector<16x128xf32> -> vector<16x128xf32>
    %c0_92 = arith.constant 0 : index
    %c0_93 = arith.constant 0 : index
    %275 = vector.load %arg11[%c0_92, %c0_93] : memref<1x128xf32, #tpu.memory_space<vmem>>, vector<1x128xf32>
    %276 = vector.broadcast %275 : vector<1x128xf32> to vector<16x128xf32>
    %277 = arith.addf %274, %276 : vector<16x128xf32>
    %cst_94 = arith.constant 0.000000e+00 : f32
    %278 = vector.broadcast %cst_94 : f32 to vector<16x128xf32>
    %279 = arith.maximumf %277, %278 : vector<16x128xf32>
    %280 = arith.truncf %279 : vector<16x128xf32> to vector<16x128xbf16>
    %c0_95 = arith.constant 0 : index
    %c0_96 = arith.constant 0 : index
    %281 = vector.load %arg12[%c0_95, %c0_96] : memref<128x32xbf16, #tpu.memory_space<vmem>>, vector<128x32xbf16>
    %cst_97 = arith.constant dense<0.000000e+00> : vector<16x32xf32>
    %282 = tpu.matmul %280, %281, %cst_97 {dimension_numbers = #tpu.dot_dimension_numbers<[1], [0], [0], [1], [0, 0, 1, 1], [], []>} : vector<16x128xbf16>, vector<128x32xbf16>, vector<16x32xf32> -> vector<16x32xf32>
    %c0_98 = arith.constant 0 : index
    %c0_99 = arith.constant 0 : index
    %283 = vector.load %arg13[%c0_98, %c0_99] : memref<1x32xf32, #tpu.memory_space<vmem>>, vector<1x32xf32>
    %284 = vector.broadcast %283 : vector<1x32xf32> to vector<16x32xf32>
    %285 = arith.addf %282, %284 : vector<16x32xf32>
    %286 = arith.addf %247, %285 : vector<16x32xf32>
    %287 = vector.shape_cast %286 : vector<16x32xf32> to vector<2x8x32xf32>
    %c0_100 = arith.constant 0 : index
    %c0_101 = arith.constant 0 : index
    %c0_102 = arith.constant 0 : index
    %288 = vector.load %arg14[%c0_100, %c0_101, %c0_102] : memref<2x8x32xf32, #tpu.memory_space<vmem>>, vector<2x8x32xf32>
    tpu.vector_store %arg14[%c0_100, %c0_101, %c0_102], %287 {strides = array<i32>} : memref<2x8x32xf32, #tpu.memory_space<vmem>>, vector<2x8x32xf32>,
    return
  }
  func.func @transform_0(%arg0: i32) -> (i32, i32, i32) {
    %c0_i32 = arith.constant 0 : i32
    %c0_i32_0 = arith.constant 0 : i32
    %c0_i32_1 = arith.constant 0 : i32
    return %arg0, %c0_i32, %c0_i32_0 : i32, i32, i32
  }
  func.func @transform_1(%arg0: i32) -> (i32, i32) {
    %c0_i32 = arith.constant 0 : i32
    %c0_i32_0 = arith.constant 0 : i32
    %c0_i32_1 = arith.constant 0 : i32
    return %c0_i32, %c0_i32_0 : i32, i32
  }
  func.func @transform_2(%arg0: i32) -> (i32, i32) {
    %c0_i32 = arith.constant 0 : i32
    %c0_i32_0 = arith.constant 0 : i32
    %c0_i32_1 = arith.constant 0 : i32
    return %c0_i32, %c0_i32_0 : i32, i32
  }
  func.func @transform_3(%arg0: i32) -> (i32, i32) {
    %c0_i32 = arith.constant 0 : i32
    %c0_i32_0 = arith.constant 0 : i32
    %c0_i32_1 = arith.constant 0 : i32
    return %c0_i32, %c0_i32_0 : i32, i32
  }
  func.func @transform_4(%arg0: i32) -> (i32, i32) {
    %c0_i32 = arith.constant 0 : i32
    %c0_i32_0 = arith.constant 0 : i32
    %c0_i32_1 = arith.constant 0 : i32
    return %c0_i32, %c0_i32_0 : i32, i32
  }
  func.func @transform_5(%arg0: i32) -> (i32, i32) {
    %c0_i32 = arith.constant 0 : i32
    %c0_i32_0 = arith.constant 0 : i32
    %c0_i32_1 = arith.constant 0 : i32
    return %c0_i32, %c0_i32_0 : i32, i32
  }
  func.func @transform_6(%arg0: i32) -> (i32, i32) {
    %c0_i32 = arith.constant 0 : i32
    %c0_i32_0 = arith.constant 0 : i32
    %c0_i32_1 = arith.constant 0 : i32
    return %c0_i32, %c0_i32_0 : i32, i32
  }
  func.func @transform_7(%arg0: i32) -> (i32, i32) {
    %c0_i32 = arith.constant 0 : i32
    %c0_i32_0 = arith.constant 0 : i32
    %c0_i32_1 = arith.constant 0 : i32
    return %c0_i32, %c0_i32_0 : i32, i32
  }
  func.func @transform_8(%arg0: i32) -> (i32, i32) {
    %c0_i32 = arith.constant 0 : i32
    %c0_i32_0 = arith.constant 0 : i32
    %c0_i32_1 = arith.constant 0 : i32
    return %c0_i32, %c0_i32_0 : i32, i32
  }
  func.func @transform_9(%arg0: i32) -> (i32, i32) {
    %c0_i32 = arith.constant 0 : i32
    %c0_i32_0 = arith.constant 0 : i32
    %c0_i32_1 = arith.constant 0 : i32
    return %c0_i32, %c0_i32_0 : i32, i32
  }
  func.func @transform_10(%arg0: i32) -> (i32, i32) {
    %c0_i32 = arith.constant 0 : i32
    %c0_i32_0 = arith.constant 0 : i32
    %c0_i32_1 = arith.constant 0 : i32
    return %c0_i32, %c0_i32_0 : i32, i32
  }
  func.func @transform_11(%arg0: i32) -> (i32, i32) {
    %c0_i32 = arith.constant 0 : i32
    %c0_i32_0 = arith.constant 0 : i32
    %c0_i32_1 = arith.constant 0 : i32
    return %c0_i32, %c0_i32_0 : i32, i32
  }
  func.func @transform_12(%arg0: i32) -> (i32, i32) {
    %c0_i32 = arith.constant 0 : i32
    %c0_i32_0 = arith.constant 0 : i32
    %c0_i32_1 = arith.constant 0 : i32
    return %c0_i32, %c0_i32_0 : i32, i32
  }
  func.func @transform_13(%arg0: i32) -> (i32, i32, i32) {
    %c0_i32 = arith.constant 0 : i32
    %c0_i32_0 = arith.constant 0 : i32
    %c0_i32_1 = arith.constant 0 : i32
    return %arg0, %c0_i32, %c0_i32_0 : i32, i32, i32
  }
}

module attributes {stable_mosaic.version = 11 : i64} {
  func.func @block_kernel(%arg0: i32, %arg1: memref<2x8x32xf32, #tpu.memory_space<vmem>>, %arg2: memref<8x8xf32, #tpu.memory_space<vmem>>, %arg3: memref<1x32xf32, #tpu.memory_space<vmem>>, %arg4: memref<1x32xf32, #tpu.memory_space<vmem>>, %arg5: memref<32x96xbf16, #tpu.memory_space<vmem>>, %arg6: memref<32x32xbf16, #tpu.memory_space<vmem>>, %arg7: memref<1x32xf32, #tpu.memory_space<vmem>>, %arg8: memref<1x32xf32, #tpu.memory_space<vmem>>, %arg9: memref<1x32xf32, #tpu.memory_space<vmem>>, %arg10: memref<32x128xbf16, #tpu.memory_space<vmem>>, %arg11: memref<1x128xf32, #tpu.memory_space<vmem>>, %arg12: memref<128x32xbf16, #tpu.memory_space<vmem>>, %arg13: memref<1x32xf32, #tpu.memory_space<vmem>>, %arg14: memref<2x8x32xf32, #tpu.memory_space<vmem>>) attributes {dimension_semantics = [#tpu.dimension_semantics<parallel>], iteration_bounds = array<i64: 2>, scalar_prefetch = 0 : i64, scratch_operands = 0 : i64, tpu.core_type = #tpu.core_type<tc>, window_params = [{transform_indices = @transform_0, window_bounds = array<i64: 2, 8, 32>}, {pipeline_mode = #tpu.pipeline_mode<synchronous>, transform_indices = @transform_1, window_bounds = array<i64: 8, 8>}, {pipeline_mode = #tpu.pipeline_mode<synchronous>, transform_indices = @transform_2, window_bounds = array<i64: 1, 32>}, {pipeline_mode = #tpu.pipeline_mode<synchronous>, transform_indices = @transform_3, window_bounds = array<i64: 1, 32>}, {pipeline_mode = #tpu.pipeline_mode<synchronous>, transform_indices = @transform_4, window_bounds = array<i64: 32, 96>}, {pipeline_mode = #tpu.pipeline_mode<synchronous>, transform_indices = @transform_5, window_bounds = array<i64: 32, 32>}, {pipeline_mode = #tpu.pipeline_mode<synchronous>, transform_indices = @transform_6, window_bounds = array<i64: 1, 32>}, {pipeline_mode = #tpu.pipeline_mode<synchronous>, transform_indices = @transform_7, window_bounds = array<i64: 1, 32>}, {pipeline_mode = #tpu.pipeline_mode<synchronous>, transform_indices = @transform_8, window_bounds = array<i64: 1, 32>}, {pipeline_mode = #tpu.pipeline_mode<synchronous>, transform_indices = @transform_9, window_bounds = array<i64: 32, 128>}, {pipeline_mode = #tpu.pipeline_mode<synchronous>, transform_indices = @transform_10, window_bounds = array<i64: 1, 128>}, {pipeline_mode = #tpu.pipeline_mode<synchronous>, transform_indices = @transform_11, window_bounds = array<i64: 128, 32>}, {pipeline_mode = #tpu.pipeline_mode<synchronous>, transform_indices = @transform_12, window_bounds = array<i64: 1, 32>}, {transform_indices = @transform_13, window_bounds = array<i64: 2, 8, 32>}]} {
    %c0 = arith.constant 0 : index
    %c0_0 = arith.constant 0 : index
    %c0_1 = arith.constant 0 : index
    %0 = vector.load %arg1[%c0, %c0_0, %c0_1] : memref<2x8x32xf32, #tpu.memory_space<vmem>>, vector<2x8x32xf32>
    %1 = vector.shape_cast %0 : vector<2x8x32xf32> to vector<16x32xf32>
    %cst = arith.constant dense<0.000000e+00> : vector<16xf32>
    %2 = vector.multi_reduction <add>, %1, %cst [1] : vector<16x32xf32> to vector<16xf32>
    %3 = vector.shape_cast %2 : vector<16xf32> to vector<16x1xf32>
    %cst_2 = arith.constant 3.200000e+01 : f32
    %4 = vector.broadcast %cst_2 : f32 to vector<16x1xf32>
    %5 = arith.divf %3, %4 : vector<16x1xf32>
    %6 = vector.broadcast %5 : vector<16x1xf32> to vector<16x32xf32>
    %7 = arith.subf %1, %6 : vector<16x32xf32>
    %8 = arith.mulf %7, %7 : vector<16x32xf32>
    %cst_3 = arith.constant dense<0.000000e+00> : vector<16xf32>
    %9 = vector.multi_reduction <add>, %8, %cst_3 [1] : vector<16x32xf32> to vector<16xf32>
    %10 = vector.shape_cast %9 : vector<16xf32> to vector<16x1xf32>
    %cst_4 = arith.constant 3.200000e+01 : f32
    %11 = vector.broadcast %cst_4 : f32 to vector<16x1xf32>
    %12 = arith.divf %10, %11 : vector<16x1xf32>
    %13 = vector.broadcast %5 : vector<16x1xf32> to vector<16x32xf32>
    %14 = arith.subf %1, %13 : vector<16x32xf32>
    %cst_5 = arith.constant 9.99999974E-6 : f32
    %15 = vector.broadcast %cst_5 : f32 to vector<16x1xf32>
    %16 = arith.addf %12, %15 : vector<16x1xf32>
    %17 = math.rsqrt %16 : vector<16x1xf32>
    %18 = vector.broadcast %17 : vector<16x1xf32> to vector<16x32xf32>
    %19 = arith.mulf %14, %18 : vector<16x32xf32>
    %c0_6 = arith.constant 0 : index
    %c0_7 = arith.constant 0 : index
    %20 = vector.load %arg3[%c0_6, %c0_7] : memref<1x32xf32, #tpu.memory_space<vmem>>, vector<1x32xf32>
    %21 = vector.broadcast %20 : vector<1x32xf32> to vector<16x32xf32>
    %22 = arith.mulf %19, %21 : vector<16x32xf32>
    %c0_8 = arith.constant 0 : index
    %c0_9 = arith.constant 0 : index
    %23 = vector.load %arg4[%c0_8, %c0_9] : memref<1x32xf32, #tpu.memory_space<vmem>>, vector<1x32xf32>
    %24 = vector.broadcast %23 : vector<1x32xf32> to vector<16x32xf32>
    %25 = arith.addf %22, %24 : vector<16x32xf32>
    %26 = arith.truncf %25 : vector<16x32xf32> to vector<16x32xbf16>
    %c0_10 = arith.constant 0 : index
    %c0_11 = arith.constant 0 : index
    %27 = vector.load %arg5[%c0_10, %c0_11] : memref<32x96xbf16, #tpu.memory_space<vmem>>, vector<32x96xbf16>
    %cst_12 = arith.constant dense<0.000000e+00> : vector<16x96xf32>
    %28 = tpu.matmul %26, %27, %cst_12 {dimension_numbers = #tpu.dot_dimension_numbers<[1], [0], [0], [1], [0, 0, 1, 1], [], []>} : vector<16x32xbf16>, vector<32x96xbf16>, vector<16x96xf32> -> vector<16x96xf32>
    %29 = vector.extract_strided_slice %28 {offsets = [0, 0], sizes = [16, 32], strides = [1, 1]} : vector<16x96xf32> to vector<16x32xf32>
    %30 = vector.extract_strided_slice %28 {offsets = [0, 32], sizes = [16, 32], strides = [1, 1]} : vector<16x96xf32> to vector<16x32xf32>
    %31 = vector.extract_strided_slice %28 {offsets = [0, 64], sizes = [16, 32], strides = [1, 1]} : vector<16x96xf32> to vector<16x32xf32>
    %c0_13 = arith.constant 0 : index
    %c0_14 = arith.constant 0 : index
    %32 = vector.load %arg2[%c0_13, %c0_14] : memref<8x8xf32, #tpu.memory_space<vmem>>, vector<8x8xf32>
    %cst_15 = arith.constant 0.000000e+00 : f32
    %33 = vector.broadcast %cst_15 : f32 to vector<8x32xf32>
    %34 = vector.extract_strided_slice %29 {offsets = [0, 0], sizes = [8, 8], strides = [1, 1]} : vector<16x32xf32> to vector<8x8xf32>
    %cst_16 = arith.constant 9.765625E-4 : f32
    %35 = vector.broadcast %cst_16 : f32 to vector<8x8xf32>
    %36 = arith.mulf %34, %35 : vector<8x8xf32>
    %37 = arith.truncf %36 : vector<8x8xf32> to vector<8x8xbf16>
    %38 = vector.extract_strided_slice %30 {offsets = [0, 0], sizes = [8, 8], strides = [1, 1]} : vector<16x32xf32> to vector<8x8xf32>
    %39 = arith.truncf %38 : vector<8x8xf32> to vector<8x8xbf16>
    %40 = vector.extract_strided_slice %31 {offsets = [0, 0], sizes = [8, 8], strides = [1, 1]} : vector<16x32xf32> to vector<8x8xf32>
    %41 = arith.truncf %40 : vector<8x8xf32> to vector<8x8xbf16>
    %cst_17 = arith.constant dense<0.000000e+00> : vector<8x8xf32>
    %42 = tpu.matmul %37, %39, %cst_17 {dimension_numbers = #tpu.dot_dimension_numbers<[1], [1], [0], [0], [0, 0, 1, 0], [], []>} : vector<8x8xbf16>, vector<8x8xbf16>, vector<8x8xf32> -> vector<8x8xf32>
    %43 = arith.addf %42, %32 : vector<8x8xf32>
    %cst_18 = arith.constant dense<0xFF800000> : vector<8xf32>
    %44 = vector.multi_reduction <maximumf>, %43, %cst_18 [1] : vector<8x8xf32> to vector<8xf32>
    %45 = vector.shape_cast %44 : vector<8xf32> to vector<8x1xf32>
    %46 = vector.broadcast %45 : vector<8x1xf32> to vector<8x8xf32>
    %47 = arith.subf %43, %46 : vector<8x8xf32>
    %48 = math.exp %47 : vector<8x8xf32>
    %cst_19 = arith.constant dense<0.000000e+00> : vector<8xf32>
    %49 = vector.multi_reduction <add>, %48, %cst_19 [1] : vector<8x8xf32> to vector<8xf32>
    %50 = vector.shape_cast %49 : vector<8xf32> to vector<8x1xf32>
    %51 = tpu.reciprocal %50 {approx = true} : vector<8x1xf32> -> vector<8x1xf32>
    %52 = vector.broadcast %51 : vector<8x1xf32> to vector<8x8xf32>
    %53 = arith.mulf %48, %52 : vector<8x8xf32>
    %54 = arith.truncf %53 : vector<8x8xf32> to vector<8x8xbf16>
    %cst_20 = arith.constant dense<0.000000e+00> : vector<8x8xf32>
    %55 = tpu.matmul %54, %41, %cst_20 {dimension_numbers = #tpu.dot_dimension_numbers<[1], [0], [0], [1], [0, 0, 1, 1], [], []>} : vector<8x8xbf16>, vector<8x8xbf16>, vector<8x8xf32> -> vector<8x8xf32>
    %56 = arith.truncf %55 : vector<8x8xf32> to vector<8x8xbf16>
    %c0_21 = arith.constant 0 : index
    %c0_22 = arith.constant 0 : index
    %57 = vector.load %arg6[%c0_21, %c0_22] : memref<32x32xbf16, #tpu.memory_space<vmem>>, vector<8x32xbf16>
    %cst_23 = arith.constant dense<0.000000e+00> : vector<8x32xf32>
    %58 = tpu.matmul %56, %57, %cst_23 {dimension_numbers = #tpu.dot_dimension_numbers<[1], [0], [0], [1], [0, 0, 1, 1], [], []>} : vector<8x8xbf16>, vector<8x32xbf16>, vector<8x32xf32> -> vector<8x32xf32>
    %59 = arith.addf %33, %58 : vector<8x32xf32>
    %60 = vector.extract_strided_slice %29 {offsets = [0, 8], sizes = [8, 8], strides = [1, 1]} : vector<16x32xf32> to vector<8x8xf32>
    %cst_24 = arith.constant 9.765625E-4 : f32
    %61 = vector.broadcast %cst_24 : f32 to vector<8x8xf32>
    %62 = arith.mulf %60, %61 : vector<8x8xf32>
    %63 = arith.truncf %62 : vector<8x8xf32> to vector<8x8xbf16>
    %64 = vector.extract_strided_slice %30 {offsets = [0, 8], sizes = [8, 8], strides = [1, 1]} : vector<16x32xf32> to vector<8x8xf32>
    %65 = arith.truncf %64 : vector<8x8xf32> to vector<8x8xbf16>
    %66 = vector.extract_strided_slice %31 {offsets = [0, 8], sizes = [8, 8], strides = [1, 1]} : vector<16x32xf32> to vector<8x8xf32>
    %67 = arith.truncf %66 : vector<8x8xf32> to vector<8x8xbf16>
    %cst_25 = arith.constant dense<0.000000e+00> : vector<8x8xf32>
    %68 = tpu.matmul %63, %65, %cst_25 {dimension_numbers = #tpu.dot_dimension_numbers<[1], [1], [0], [0], [0, 0, 1, 0], [], []>} : vector<8x8xbf16>, vector<8x8xbf16>, vector<8x8xf32> -> vector<8x8xf32>
    %69 = arith.addf %68, %32 : vector<8x8xf32>
    %cst_26 = arith.constant dense<0xFF800000> : vector<8xf32>
    %70 = vector.multi_reduction <maximumf>, %69, %cst_26 [1] : vector<8x8xf32> to vector<8xf32>
    %71 = vector.shape_cast %70 : vector<8xf32> to vector<8x1xf32>
    %72 = vector.broadcast %71 : vector<8x1xf32> to vector<8x8xf32>
    %73 = arith.subf %69, %72 : vector<8x8xf32>
    %74 = math.exp %73 : vector<8x8xf32>
    %cst_27 = arith.constant dense<0.000000e+00> : vector<8xf32>
    %75 = vector.multi_reduction <add>, %74, %cst_27 [1] : vector<8x8xf32> to vector<8xf32>
    %76 = vector.shape_cast %75 : vector<8xf32> to vector<8x1xf32>
    %77 = tpu.reciprocal %76 {approx = true} : vector<8x1xf32> -> vector<8x1xf32>
    %78 = vector.broadcast %77 : vector<8x1xf32> to vector<8x8xf32>
    %79 = arith.mulf %74, %78 : vector<8x8xf32>
    %80 = arith.truncf %79 : vector<8x8xf32> to vector<8x8xbf16>
    %cst_28 = arith.constant dense<0.000000e+00> : vector<8x8xf32>
    %81 = tpu.matmul %80, %67, %cst_28 {dimension_numbers = #tpu.dot_dimension_numbers<[1], [0], [0], [1], [0, 0, 1, 1], [], []>} : vector<8x8xbf16>, vector<8x8xbf16>, vector<8x8xf32> -> vector<8x8xf32>
    %82 = arith.truncf %81 : vector<8x8xf32> to vector<8x8xbf16>
    %c8 = arith.constant 8 : index
    %c0_29 = arith.constant 0 : index
    %83 = vector.load %arg6[%c8, %c0_29] : memref<32x32xbf16, #tpu.memory_space<vmem>>, vector<8x32xbf16>
    %cst_30 = arith.constant dense<0.000000e+00> : vector<8x32xf32>
    %84 = tpu.matmul %82, %83, %cst_30 {dimension_numbers = #tpu.dot_dimension_numbers<[1], [0], [0], [1], [0, 0, 1, 1], [], []>} : vector<8x8xbf16>, vector<8x32xbf16>, vector<8x32xf32> -> vector<8x32xf32>
    %85 = arith.addf %59, %84 : vector<8x32xf32>
    %86 = vector.extract_strided_slice %29 {offsets = [0, 16], sizes = [8, 8], strides = [1, 1]} : vector<16x32xf32> to vector<8x8xf32>
    %cst_31 = arith.constant 9.765625E-4 : f32
    %87 = vector.broadcast %cst_31 : f32 to vector<8x8xf32>
    %88 = arith.mulf %86, %87 : vector<8x8xf32>
    %89 = arith.truncf %88 : vector<8x8xf32> to vector<8x8xbf16>
    %90 = vector.extract_strided_slice %30 {offsets = [0, 16], sizes = [8, 8], strides = [1, 1]} : vector<16x32xf32> to vector<8x8xf32>
    %91 = arith.truncf %90 : vector<8x8xf32> to vector<8x8xbf16>
    %92 = vector.extract_strided_slice %31 {offsets = [0, 16], sizes = [8, 8], strides = [1, 1]} : vector<16x32xf32> to vector<8x8xf32>
    %93 = arith.truncf %92 : vector<8x8xf32> to vector<8x8xbf16>
    %cst_32 = arith.constant dense<0.000000e+00> : vector<8x8xf32>
    %94 = tpu.matmul %89, %91, %cst_32 {dimension_numbers = #tpu.dot_dimension_numbers<[1], [1], [0], [0], [0, 0, 1, 0], [], []>} : vector<8x8xbf16>, vector<8x8xbf16>, vector<8x8xf32> -> vector<8x8xf32>
    %95 = arith.addf %94, %32 : vector<8x8xf32>
    %cst_33 = arith.constant dense<0xFF800000> : vector<8xf32>
    %96 = vector.multi_reduction <maximumf>, %95, %cst_33 [1] : vector<8x8xf32> to vector<8xf32>
    %97 = vector.shape_cast %96 : vector<8xf32> to vector<8x1xf32>
    %98 = vector.broadcast %97 : vector<8x1xf32> to vector<8x8xf32>
    %99 = arith.subf %95, %98 : vector<8x8xf32>
    %100 = math.exp %99 : vector<8x8xf32>
    %cst_34 = arith.constant dense<0.000000e+00> : vector<8xf32>
    %101 = vector.multi_reduction <add>, %100, %cst_34 [1] : vector<8x8xf32> to vector<8xf32>
    %102 = vector.shape_cast %101 : vector<8xf32> to vector<8x1xf32>
    %103 = tpu.reciprocal %102 {approx = true} : vector<8x1xf32> -> vector<8x1xf32>
    %104 = vector.broadcast %103 : vector<8x1xf32> to vector<8x8xf32>
    %105 = arith.mulf %100, %104 : vector<8x8xf32>
    %106 = arith.truncf %105 : vector<8x8xf32> to vector<8x8xbf16>
    %cst_35 = arith.constant dense<0.000000e+00> : vector<8x8xf32>
    %107 = tpu.matmul %106, %93, %cst_35 {dimension_numbers = #tpu.dot_dimension_numbers<[1], [0], [0], [1], [0, 0, 1, 1], [], []>} : vector<8x8xbf16>, vector<8x8xbf16>, vector<8x8xf32> -> vector<8x8xf32>
    %108 = arith.truncf %107 : vector<8x8xf32> to vector<8x8xbf16>
    %c16 = arith.constant 16 : index
    %c0_36 = arith.constant 0 : index
    %109 = vector.load %arg6[%c16, %c0_36] : memref<32x32xbf16, #tpu.memory_space<vmem>>, vector<8x32xbf16>
    %cst_37 = arith.constant dense<0.000000e+00> : vector<8x32xf32>
    %110 = tpu.matmul %108, %109, %cst_37 {dimension_numbers = #tpu.dot_dimension_numbers<[1], [0], [0], [1], [0, 0, 1, 1], [], []>} : vector<8x8xbf16>, vector<8x32xbf16>, vector<8x32xf32> -> vector<8x32xf32>
    %111 = arith.addf %85, %110 : vector<8x32xf32>
    %112 = vector.extract_strided_slice %29 {offsets = [0, 24], sizes = [8, 8], strides = [1, 1]} : vector<16x32xf32> to vector<8x8xf32>
    %cst_38 = arith.constant 9.765625E-4 : f32
    %113 = vector.broadcast %cst_38 : f32 to vector<8x8xf32>
    %114 = arith.mulf %112, %113 : vector<8x8xf32>
    %115 = arith.truncf %114 : vector<8x8xf32> to vector<8x8xbf16>
    %116 = vector.extract_strided_slice %30 {offsets = [0, 24], sizes = [8, 8], strides = [1, 1]} : vector<16x32xf32> to vector<8x8xf32>
    %117 = arith.truncf %116 : vector<8x8xf32> to vector<8x8xbf16>
    %118 = vector.extract_strided_slice %31 {offsets = [0, 24], sizes = [8, 8], strides = [1, 1]} : vector<16x32xf32> to vector<8x8xf32>
    %119 = arith.truncf %118 : vector<8x8xf32> to vector<8x8xbf16>
    %cst_39 = arith.constant dense<0.000000e+00> : vector<8x8xf32>
    %120 = tpu.matmul %115, %117, %cst_39 {dimension_numbers = #tpu.dot_dimension_numbers<[1], [1], [0], [0], [0, 0, 1, 0], [], []>} : vector<8x8xbf16>, vector<8x8xbf16>, vector<8x8xf32> -> vector<8x8xf32>
    %121 = arith.addf %120, %32 : vector<8x8xf32>
    %cst_40 = arith.constant dense<0xFF800000> : vector<8xf32>
    %122 = vector.multi_reduction <maximumf>, %121, %cst_40 [1] : vector<8x8xf32> to vector<8xf32>
    %123 = vector.shape_cast %122 : vector<8xf32> to vector<8x1xf32>
    %124 = vector.broadcast %123 : vector<8x1xf32> to vector<8x8xf32>
    %125 = arith.subf %121, %124 : vector<8x8xf32>
    %126 = math.exp %125 : vector<8x8xf32>
    %cst_41 = arith.constant dense<0.000000e+00> : vector<8xf32>
    %127 = vector.multi_reduction <add>, %126, %cst_41 [1] : vector<8x8xf32> to vector<8xf32>
    %128 = vector.shape_cast %127 : vector<8xf32> to vector<8x1xf32>
    %129 = tpu.reciprocal %128 {approx = true} : vector<8x1xf32> -> vector<8x1xf32>
    %130 = vector.broadcast %129 : vector<8x1xf32> to vector<8x8xf32>
    %131 = arith.mulf %126, %130 : vector<8x8xf32>
    %132 = arith.truncf %131 : vector<8x8xf32> to vector<8x8xbf16>
    %cst_42 = arith.constant dense<0.000000e+00> : vector<8x8xf32>
    %133 = tpu.matmul %132, %119, %cst_42 {dimension_numbers = #tpu.dot_dimension_numbers<[1], [0], [0], [1], [0, 0, 1, 1], [], []>} : vector<8x8xbf16>, vector<8x8xbf16>, vector<8x8xf32> -> vector<8x8xf32>
    %134 = arith.truncf %133 : vector<8x8xf32> to vector<8x8xbf16>
    %c24 = arith.constant 24 : index
    %c0_43 = arith.constant 0 : index
    %135 = vector.load %arg6[%c24, %c0_43] : memref<32x32xbf16, #tpu.memory_space<vmem>>, vector<8x32xbf16>
    %cst_44 = arith.constant dense<0.000000e+00> : vector<8x32xf32>
    %136 = tpu.matmul %134, %135, %cst_44 {dimension_numbers = #tpu.dot_dimension_numbers<[1], [0], [0], [1], [0, 0, 1, 1], [], []>} : vector<8x8xbf16>, vector<8x32xbf16>, vector<8x32xf32> -> vector<8x32xf32>
    %137 = arith.addf %111, %136 : vector<8x32xf32>
    %cst_45 = arith.constant 0.000000e+00 : f32
    %138 = vector.broadcast %cst_45 : f32 to vector<8x32xf32>
    %139 = vector.extract_strided_slice %29 {offsets = [8, 0], sizes = [8, 8], strides = [1, 1]} : vector<16x32xf32> to vector<8x8xf32>
    %cst_46 = arith.constant 9.765625E-4 : f32
    %140 = vector.broadcast %cst_46 : f32 to vector<8x8xf32>
    %141 = arith.mulf %139, %140 : vector<8x8xf32>
    %142 = arith.truncf %141 : vector<8x8xf32> to vector<8x8xbf16>
    %143 = vector.extract_strided_slice %30 {offsets = [8, 0], sizes = [8, 8], strides = [1, 1]} : vector<16x32xf32> to vector<8x8xf32>
    %144 = arith.truncf %143 : vector<8x8xf32> to vector<8x8xbf16>
    %145 = vector.extract_strided_slice %31 {offsets = [8, 0], sizes = [8, 8], strides = [1, 1]} : vector<16x32xf32> to vector<8x8xf32>
    %146 = arith.truncf %145 : vector<8x8xf32> to vector<8x8xbf16>
    %cst_47 = arith.constant dense<0.000000e+00> : vector<8x8xf32>
    %147 = tpu.matmul %142, %144, %cst_47 {dimension_numbers = #tpu.dot_dimension_numbers<[1], [1], [0], [0], [0, 0, 1, 0], [], []>} : vector<8x8xbf16>, vector<8x8xbf16>, vector<8x8xf32> -> vector<8x8xf32>
    %148 = arith.addf %147, %32 : vector<8x8xf32>
    %cst_48 = arith.constant dense<0xFF800000> : vector<8xf32>
    %149 = vector.multi_reduction <maximumf>, %148, %cst_48 [1] : vector<8x8xf32> to vector<8xf32>
    %150 = vector.shape_cast %149 : vector<8xf32> to vector<8x1xf32>
    %151 = vector.broadcast %150 : vector<8x1xf32> to vector<8x8xf32>
    %152 = arith.subf %148, %151 : vector<8x8xf32>
    %153 = math.exp %152 : vector<8x8xf32>
    %cst_49 = arith.constant dense<0.000000e+00> : vector<8xf32>
    %154 = vector.multi_reduction <add>, %153, %cst_49 [1] : vector<8x8xf32> to vector<8xf32>
    %155 = vector.shape_cast %154 : vector<8xf32> to vector<8x1xf32>
    %156 = tpu.reciprocal %155 {approx = true} : vector<8x1xf32> -> vector<8x1xf32>
    %157 = vector.broadcast %156 : vector<8x1xf32> to vector<8x8xf32>
    %158 = arith.mulf %153, %157 : vector<8x8xf32>
    %159 = arith.truncf %158 : vector<8x8xf32> to vector<8x8xbf16>
    %cst_50 = arith.constant dense<0.000000e+00> : vector<8x8xf32>
    %160 = tpu.matmul %159, %146, %cst_50 {dimension_numbers = #tpu.dot_dimension_numbers<[1], [0], [0], [1], [0, 0, 1, 1], [], []>} : vector<8x8xbf16>, vector<8x8xbf16>, vector<8x8xf32> -> vector<8x8xf32>
    %161 = arith.truncf %160 : vector<8x8xf32> to vector<8x8xbf16>
    %c0_51 = arith.constant 0 : index
    %c0_52 = arith.constant 0 : index
    %162 = vector.load %arg6[%c0_51, %c0_52] : memref<32x32xbf16, #tpu.memory_space<vmem>>, vector<8x32xbf16>
    %cst_53 = arith.constant dense<0.000000e+00> : vector<8x32xf32>
    %163 = tpu.matmul %161, %162, %cst_53 {dimension_numbers = #tpu.dot_dimension_numbers<[1], [0], [0], [1], [0, 0, 1, 1], [], []>} : vector<8x8xbf16>, vector<8x32xbf16>, vector<8x32xf32> -> vector<8x32xf32>
    %164 = arith.addf %138, %163 : vector<8x32xf32>
    %165 = vector.extract_strided_slice %29 {offsets = [8, 8], sizes = [8, 8], strides = [1, 1]} : vector<16x32xf32> to vector<8x8xf32>
    %cst_54 = arith.constant 9.765625E-4 : f32
    %166 = vector.broadcast %cst_54 : f32 to vector<8x8xf32>
    %167 = arith.mulf %165, %166 : vector<8x8xf32>
    %168 = arith.truncf %167 : vector<8x8xf32> to vector<8x8xbf16>
    %169 = vector.extract_strided_slice %30 {offsets = [8, 8], sizes = [8, 8], strides = [1, 1]} : vector<16x32xf32> to vector<8x8xf32>
    %170 = arith.truncf %169 : vector<8x8xf32> to vector<8x8xbf16>
    %171 = vector.extract_strided_slice %31 {offsets = [8, 8], sizes = [8, 8], strides = [1, 1]} : vector<16x32xf32> to vector<8x8xf32>
    %172 = arith.truncf %171 : vector<8x8xf32> to vector<8x8xbf16>
    %cst_55 = arith.constant dense<0.000000e+00> : vector<8x8xf32>
    %173 = tpu.matmul %168, %170, %cst_55 {dimension_numbers = #tpu.dot_dimension_numbers<[1], [1], [0], [0], [0, 0, 1, 0], [], []>} : vector<8x8xbf16>, vector<8x8xbf16>, vector<8x8xf32> -> vector<8x8xf32>
    %174 = arith.addf %173, %32 : vector<8x8xf32>
    %cst_56 = arith.constant dense<0xFF800000> : vector<8xf32>
    %175 = vector.multi_reduction <maximumf>, %174, %cst_56 [1] : vector<8x8xf32> to vector<8xf32>
    %176 = vector.shape_cast %175 : vector<8xf32> to vector<8x1xf32>
    %177 = vector.broadcast %176 : vector<8x1xf32> to vector<8x8xf32>
    %178 = arith.subf %174, %177 : vector<8x8xf32>
    %179 = math.exp %178 : vector<8x8xf32>
    %cst_57 = arith.constant dense<0.000000e+00> : vector<8xf32>
    %180 = vector.multi_reduction <add>, %179, %cst_57 [1] : vector<8x8xf32> to vector<8xf32>
    %181 = vector.shape_cast %180 : vector<8xf32> to vector<8x1xf32>
    %182 = tpu.reciprocal %181 {approx = true} : vector<8x1xf32> -> vector<8x1xf32>
    %183 = vector.broadcast %182 : vector<8x1xf32> to vector<8x8xf32>
    %184 = arith.mulf %179, %183 : vector<8x8xf32>
    %185 = arith.truncf %184 : vector<8x8xf32> to vector<8x8xbf16>
    %cst_58 = arith.constant dense<0.000000e+00> : vector<8x8xf32>
    %186 = tpu.matmul %185, %172, %cst_58 {dimension_numbers = #tpu.dot_dimension_numbers<[1], [0], [0], [1], [0, 0, 1, 1], [], []>} : vector<8x8xbf16>, vector<8x8xbf16>, vector<8x8xf32> -> vector<8x8xf32>
    %187 = arith.truncf %186 : vector<8x8xf32> to vector<8x8xbf16>
    %c8_59 = arith.constant 8 : index
    %c0_60 = arith.constant 0 : index
    %188 = vector.load %arg6[%c8_59, %c0_60] : memref<32x32xbf16, #tpu.memory_space<vmem>>, vector<8x32xbf16>
    %cst_61 = arith.constant dense<0.000000e+00> : vector<8x32xf32>
    %189 = tpu.matmul %187, %188, %cst_61 {dimension_numbers = #tpu.dot_dimension_numbers<[1], [0], [0], [1], [0, 0, 1, 1], [], []>} : vector<8x8xbf16>, vector<8x32xbf16>, vector<8x32xf32> -> vector<8x32xf32>
    %190 = arith.addf %164, %189 : vector<8x32xf32>
    %191 = vector.extract_strided_slice %29 {offsets = [8, 16], sizes = [8, 8], strides = [1, 1]} : vector<16x32xf32> to vector<8x8xf32>
    %cst_62 = arith.constant 9.765625E-4 : f32
    %192 = vector.broadcast %cst_62 : f32 to vector<8x8xf32>
    %193 = arith.mulf %191, %192 : vector<8x8xf32>
    %194 = arith.truncf %193 : vector<8x8xf32> to vector<8x8xbf16>
    %195 = vector.extract_strided_slice %30 {offsets = [8, 16], sizes = [8, 8], strides = [1, 1]} : vector<16x32xf32> to vector<8x8xf32>
    %196 = arith.truncf %195 : vector<8x8xf32> to vector<8x8xbf16>
    %197 = vector.extract_strided_slice %31 {offsets = [8, 16], sizes = [8, 8], strides = [1, 1]} : vector<16x32xf32> to vector<8x8xf32>
    %198 = arith.truncf %197 : vector<8x8xf32> to vector<8x8xbf16>
    %cst_63 = arith.constant dense<0.000000e+00> : vector<8x8xf32>
    %199 = tpu.matmul %194, %196, %cst_63 {dimension_numbers = #tpu.dot_dimension_numbers<[1], [1], [0], [0], [0, 0, 1, 0], [], []>} : vector<8x8xbf16>, vector<8x8xbf16>, vector<8x8xf32> -> vector<8x8xf32>
    %200 = arith.addf %199, %32 : vector<8x8xf32>
    %cst_64 = arith.constant dense<0xFF800000> : vector<8xf32>
    %201 = vector.multi_reduction <maximumf>, %200, %cst_64 [1] : vector<8x8xf32> to vector<8xf32>
    %202 = vector.shape_cast %201 : vector<8xf32> to vector<8x1xf32>
    %203 = vector.broadcast %202 : vector<8x1xf32> to vector<8x8xf32>
    %204 = arith.subf %200, %203 : vector<8x8xf32>
    %205 = math.exp %204 : vector<8x8xf32>
    %cst_65 = arith.constant dense<0.000000e+00> : vector<8xf32>
    %206 = vector.multi_reduction <add>, %205, %cst_65 [1] : vector<8x8xf32> to vector<8xf32>
    %207 = vector.shape_cast %206 : vector<8xf32> to vector<8x1xf32>
    %208 = tpu.reciprocal %207 {approx = true} : vector<8x1xf32> -> vector<8x1xf32>
    %209 = vector.broadcast %208 : vector<8x1xf32> to vector<8x8xf32>
    %210 = arith.mulf %205, %209 : vector<8x8xf32>
    %211 = arith.truncf %210 : vector<8x8xf32> to vector<8x8xbf16>
    %cst_66 = arith.constant dense<0.000000e+00> : vector<8x8xf32>
    %212 = tpu.matmul %211, %198, %cst_66 {dimension_numbers = #tpu.dot_dimension_numbers<[1], [0], [0], [1], [0, 0, 1, 1], [], []>} : vector<8x8xbf16>, vector<8x8xbf16>, vector<8x8xf32> -> vector<8x8xf32>
    %213 = arith.truncf %212 : vector<8x8xf32> to vector<8x8xbf16>
    %c16_67 = arith.constant 16 : index
    %c0_68 = arith.constant 0 : index
    %214 = vector.load %arg6[%c16_67, %c0_68] : memref<32x32xbf16, #tpu.memory_space<vmem>>, vector<8x32xbf16>
    %cst_69 = arith.constant dense<0.000000e+00> : vector<8x32xf32>
    %215 = tpu.matmul %213, %214, %cst_69 {dimension_numbers = #tpu.dot_dimension_numbers<[1], [0], [0], [1], [0, 0, 1, 1], [], []>} : vector<8x8xbf16>, vector<8x32xbf16>, vector<8x32xf32> -> vector<8x32xf32>
    %216 = arith.addf %190, %215 : vector<8x32xf32>
    %217 = vector.extract_strided_slice %29 {offsets = [8, 24], sizes = [8, 8], strides = [1, 1]} : vector<16x32xf32> to vector<8x8xf32>
    %cst_70 = arith.constant 9.765625E-4 : f32
    %218 = vector.broadcast %cst_70 : f32 to vector<8x8xf32>
    %219 = arith.mulf %217, %218 : vector<8x8xf32>
    %220 = arith.truncf %219 : vector<8x8xf32> to vector<8x8xbf16>
    %221 = vector.extract_strided_slice %30 {offsets = [8, 24], sizes = [8, 8], strides = [1, 1]} : vector<16x32xf32> to vector<8x8xf32>
    %222 = arith.truncf %221 : vector<8x8xf32> to vector<8x8xbf16>
    %223 = vector.extract_strided_slice %31 {offsets = [8, 24], sizes = [8, 8], strides = [1, 1]} : vector<16x32xf32> to vector<8x8xf32>
    %224 = arith.truncf %223 : vector<8x8xf32> to vector<8x8xbf16>
    %cst_71 = arith.constant dense<0.000000e+00> : vector<8x8xf32>
    %225 = tpu.matmul %220, %222, %cst_71 {dimension_numbers = #tpu.dot_dimension_numbers<[1], [1], [0], [0], [0, 0, 1, 0], [], []>} : vector<8x8xbf16>, vector<8x8xbf16>, vector<8x8xf32> -> vector<8x8xf32>
    %226 = arith.addf %225, %32 : vector<8x8xf32>
    %cst_72 = arith.constant dense<0xFF800000> : vector<8xf32>
    %227 = vector.multi_reduction <maximumf>, %226, %cst_72 [1] : vector<8x8xf32> to vector<8xf32>
    %228 = vector.shape_cast %227 : vector<8xf32> to vector<8x1xf32>
    %229 = vector.broadcast %228 : vector<8x1xf32> to vector<8x8xf32>
    %230 = arith.subf %226, %229 : vector<8x8xf32>
    %231 = math.exp %230 : vector<8x8xf32>
    %cst_73 = arith.constant dense<0.000000e+00> : vector<8xf32>
    %232 = vector.multi_reduction <add>, %231, %cst_73 [1] : vector<8x8xf32> to vector<8xf32>
    %233 = vector.shape_cast %232 : vector<8xf32> to vector<8x1xf32>
    %234 = tpu.reciprocal %233 {approx = true} : vector<8x1xf32> -> vector<8x1xf32>
    %235 = vector.broadcast %234 : vector<8x1xf32> to vector<8x8xf32>
    %236 = arith.mulf %231, %235 : vector<8x8xf32>
    %237 = arith.truncf %236 : vector<8x8xf32> to vector<8x8xbf16>
    %cst_74 = arith.constant dense<0.000000e+00> : vector<8x8xf32>
    %238 = tpu.matmul %237, %224, %cst_74 {dimension_numbers = #tpu.dot_dimension_numbers<[1], [0], [0], [1], [0, 0, 1, 1], [], []>} : vector<8x8xbf16>, vector<8x8xbf16>, vector<8x8xf32> -> vector<8x8xf32>
    %239 = arith.truncf %238 : vector<8x8xf32> to vector<8x8xbf16>
    %c24_75 = arith.constant 24 : index
    %c0_76 = arith.constant 0 : index
    %240 = vector.load %arg6[%c24_75, %c0_76] : memref<32x32xbf16, #tpu.memory_space<vmem>>, vector<8x32xbf16>
    %cst_77 = arith.constant dense<0.000000e+00> : vector<8x32xf32>
    %241 = tpu.matmul %239, %240, %cst_77 {dimension_numbers = #tpu.dot_dimension_numbers<[1], [0], [0], [1], [0, 0, 1, 1], [], []>} : vector<8x8xbf16>, vector<8x32xbf16>, vector<8x32xf32> -> vector<8x32xf32>
    %242 = arith.addf %216, %241 : vector<8x32xf32>
    %243 = tpu.concatenate %137, %242 in 0 : vector<8x32xf32>, vector<8x32xf32> -> vector<16x32xf32>
    %244 = arith.addf %1, %243 : vector<16x32xf32>
    %c0_78 = arith.constant 0 : index
    %c0_79 = arith.constant 0 : index
    %245 = vector.load %arg7[%c0_78, %c0_79] : memref<1x32xf32, #tpu.memory_space<vmem>>, vector<1x32xf32>
    %246 = vector.broadcast %245 : vector<1x32xf32> to vector<16x32xf32>
    %247 = arith.addf %244, %246 : vector<16x32xf32>
    %cst_80 = arith.constant dense<0.000000e+00> : vector<16xf32>
    %248 = vector.multi_reduction <add>, %247, %cst_80 [1] : vector<16x32xf32> to vector<16xf32>
    %249 = vector.shape_cast %248 : vector<16xf32> to vector<16x1xf32>
    %cst_81 = arith.constant 3.200000e+01 : f32
    %250 = vector.broadcast %cst_81 : f32 to vector<16x1xf32>
    %251 = arith.divf %249, %250 : vector<16x1xf32>
    %252 = vector.broadcast %251 : vector<16x1xf32> to vector<16x32xf32>
    %253 = arith.subf %247, %252 : vector<16x32xf32>
    %254 = arith.mulf %253, %253 : vector<16x32xf32>
    %cst_82 = arith.constant dense<0.000000e+00> : vector<16xf32>
    %255 = vector.multi_reduction <add>, %254, %cst_82 [1] : vector<16x32xf32> to vector<16xf32>
    %256 = vector.shape_cast %255 : vector<16xf32> to vector<16x1xf32>
    %cst_83 = arith.constant 3.200000e+01 : f32
    %257 = vector.broadcast %cst_83 : f32 to vector<16x1xf32>
    %258 = arith.divf %256, %257 : vector<16x1xf32>
    %259 = vector.broadcast %251 : vector<16x1xf32> to vector<16x32xf32>
    %260 = arith.subf %247, %259 : vector<16x32xf32>
    %cst_84 = arith.constant 9.99999974E-6 : f32
    %261 = vector.broadcast %cst_84 : f32 to vector<16x1xf32>
    %262 = arith.addf %258, %261 : vector<16x1xf32>
    %263 = math.rsqrt %262 : vector<16x1xf32>
    %264 = vector.broadcast %263 : vector<16x1xf32> to vector<16x32xf32>
    %265 = arith.mulf %260, %264 : vector<16x32xf32>
    %c0_85 = arith.constant 0 : index
    %c0_86 = arith.constant 0 : index
    %266 = vector.load %arg8[%c0_85, %c0_86] : memref<1x32xf32, #tpu.memory_space<vmem>>, vector<1x32xf32>
    %267 = vector.broadcast %266 : vector<1x32xf32> to vector<16x32xf32>
    %268 = arith.mulf %265, %267 : vector<16x32xf32>
    %c0_87 = arith.constant 0 : index
    %c0_88 = arith.constant 0 : index
    %269 = vector.load %arg9[%c0_87, %c0_88] : memref<1x32xf32, #tpu.memory_space<vmem>>, vector<1x32xf32>
    %270 = vector.broadcast %269 : vector<1x32xf32> to vector<16x32xf32>
    %271 = arith.addf %268, %270 : vector<16x32xf32>
    %272 = arith.truncf %271 : vector<16x32xf32> to vector<16x32xbf16>
    %c0_89 = arith.constant 0 : index
    %c0_90 = arith.constant 0 : index
    %273 = vector.load %arg10[%c0_89, %c0_90] : memref<32x128xbf16, #tpu.memory_space<vmem>>, vector<32x128xbf16>
    %cst_91 = arith.constant dense<0.000000e+00> : vector<16x128xf32>
    %274 = tpu.matmul %272, %273, %cst_91 {dimension_numbers = #tpu.dot_dimension_numbers<[1], [0], [0], [1], [0, 0, 1, 1], [], []>} : vector<16x32xbf16>, vector<32x128xbf16>, vector<16x128xf32> -> vector<16x128xf32>
    %c0_92 = arith.constant 0 : index
    %c0_93 = arith.constant 0 : index
    %275 = vector.load %arg11[%c0_92, %c0_93] : memref<1x128xf32, #tpu.memory_space<vmem>>, vector<1x128xf32>
    %276 = vector.broadcast %275 : vector<1x128xf32> to vector<16x128xf32>
    %277 = arith.addf %274, %276 : vector<16x128xf32>
    %cst_94 = arith.constant 0.000000e+00 : f32
    %278 = vector.broadcast %cst_94 : f32 to vector<16x128xf32>
    %279 = arith.maximumf %277, %278 : vector<16x128xf32>
    %280 = arith.truncf %279 : vector<16x128xf32> to vector<16x128xbf16>
    %c0_95 = arith.constant 0 : index
    %c0_96 = arith.constant 0 : index
    %281 = vector.load %arg12[%c0_95, %c0_96] : memref<128x32xbf16, #tpu.memory_space<vmem>>, vector<128x32xbf16>
    %cst_97 = arith.constant dense<0.000000e+00> : vector<16x32xf32>
    %282 = tpu.matmul %280, %281, %cst_97 {dimension_numbers = #tpu.dot_dimension_numbers<[1], [0], [0], [1], [0, 0, 1, 1], [], []>} : vector<16x128xbf16>, vector<128x32xbf16>, vector<16x32xf32> -> vector<16x32xf32>
    %c0_98 = arith.constant 0 : index
    %c0_99 = arith.constant 0 : index
    %283 = vector.load %arg13[%c0_98, %c0_99] : memref<1x32xf32, #tpu.memory_space<vmem>>, vector<1x32xf32>
    %284 = vector.broadcast %283 : vector<1x32xf32> to vector<16x32xf32>
    %285 = arith.addf %282, %284 : vector<16x32xf32>
    %286 = arith.addf %247, %285 : vector<16x32xf32>
    %287 = vector.shape_cast %286 : vector<16x32xf32> to vector<2x8x32xf32>
    %c0_100 = arith.constant 0 : index
    %c0_101 = arith.constant 0 : index
    %c0_102 = arith.constant 0 : index
    %288 = vector.load %arg14[%c0_100, %c0_101, %c0_102] : memref<2x8x32xf32, #tpu.memory_space<vmem>>, vector<2x8x32xf32>
    tpu.vector_store %arg14[%c0_100, %c0_101, %c0_102], %287 {strides = array<i32>} : memref<2x8x32xf32, #tpu.memory_space<vmem>>, vector<2x8x32xf32>,
    return
  }
  func.func @transform_0(%arg0: i32) -> (i32, i32, i32) {
    %c0_i32 = arith.constant 0 : i32
    %c0_i32_0 = arith.constant 0 : i32
    %c0_i32_1 = arith.constant 0 : i32
    return %arg0, %c0_i32, %c0_i32_0 : i32, i32, i32
  }
  func.func @transform_1(%arg0: i32) -> (i32, i32) {
    %c0_i32 = arith.constant 0 : i32
    %c0_i32_0 = arith.constant 0 : i32
    %c0_i32_1 = arith.constant 0 : i32
    return %c0_i32, %c0_i32_0 : i32, i32
  }
  func.func @transform_2(%arg0: i32) -> (i32, i32) {
    %c0_i32 = arith.constant 0 : i32
    %c0_i32_0 = arith.constant 0 : i32
    %c0_i32_1 = arith.constant 0 : i32
    return %c0_i32, %c0_i32_0 : i32, i32
  }
  func.func @transform_3(%arg0: i32) -> (i32, i32) {
    %c0_i32 = arith.constant 0 : i32
    %c0_i32_0 = arith.constant 0 : i32
    %c0_i32_1 = arith.constant 0 : i32
    return %c0_i32, %c0_i32_0 : i32, i32
  }
  func.func @transform_4(%arg0: i32) -> (i32, i32) {
    %c0_i32 = arith.constant 0 : i32
    %c0_i32_0 = arith.constant 0 : i32
    %c0_i32_1 = arith.constant 0 : i32
    return %c0_i32, %c0_i32_0 : i32, i32
  }
  func.func @transform_5(%arg0: i32) -> (i32, i32) {
    %c0_i32 = arith.constant 0 : i32
    %c0_i32_0 = arith.constant 0 : i32
    %c0_i32_1 = arith.constant 0 : i32
    return %c0_i32, %c0_i32_0 : i32, i32
  }
  func.func @transform_6(%arg0: i32) -> (i32, i32) {
    %c0_i32 = arith.constant 0 : i32
    %c0_i32_0 = arith.constant 0 : i32
    %c0_i32_1 = arith.constant 0 : i32
    return %c0_i32, %c0_i32_0 : i32, i32
  }
  func.func @transform_7(%arg0: i32) -> (i32, i32) {
    %c0_i32 = arith.constant 0 : i32
    %c0_i32_0 = arith.constant 0 : i32
    %c0_i32_1 = arith.constant 0 : i32
    return %c0_i32, %c0_i32_0 : i32, i32
  }
  func.func @transform_8(%arg0: i32) -> (i32, i32) {
    %c0_i32 = arith.constant 0 : i32
    %c0_i32_0 = arith.constant 0 : i32
    %c0_i32_1 = arith.constant 0 : i32
    return %c0_i32, %c0_i32_0 : i32, i32
  }
  func.func @transform_9(%arg0: i32) -> (i32, i32) {
    %c0_i32 = arith.constant 0 : i32
    %c0_i32_0 = arith.constant 0 : i32
    %c0_i32_1 = arith.constant 0 : i32
    return %c0_i32, %c0_i32_0 : i32, i32
  }
  func.func @transform_10(%arg0: i32) -> (i32, i32) {
    %c0_i32 = arith.constant 0 : i32
    %c0_i32_0 = arith.constant 0 : i32
    %c0_i32_1 = arith.constant 0 : i32
    return %c0_i32, %c0_i32_0 : i32, i32
  }
  func.func @transform_11(%arg0: i32) -> (i32, i32) {
    %c0_i32 = arith.constant 0 : i32
    %c0_i32_0 = arith.constant 0 : i32
    %c0_i32_1 = arith.constant 0 : i32
    return %c0_i32, %c0_i32_0 : i32, i32
  }
  func.func @transform_12(%arg0: i32) -> (i32, i32) {
    %c0_i32 = arith.constant 0 : i32
    %c0_i32_0 = arith.constant 0 : i32
    %c0_i32_1 = arith.constant 0 : i32
    return %c0_i32, %c0_i32_0 : i32, i32
  }
  func.func @transform_13(%arg0: i32) -> (i32, i32, i32) {
    %c0_i32 = arith.constant 0 : i32
    %c0_i32_0 = arith.constant 0 : i32
    %c0_i32_1 = arith.constant 0 : i32
    return %arg0, %c0_i32, %c0_i32_0 : i32, i32, i32
  }
}

</mosaic_0001>

<llo_original>
// kernel: tpu_custom_call.1
$region0: #{tpu_custom_call.1}
  #allocation0 [shape = 'u32[]', space=smem, size = 0x4, offset = 0x4, fixed_abs, tag = 'smem constant byte address 0x4 - core index']
  #allocation1 [shape = 'u32[144,128]{1,0:T(1,128)}', space=vmem, size = 0x12000, scoped, tag = 'internal scratch']
  %s0 = inlined_call_operand.vmem [shape: f32[4,8,32], index: 0, kind: input, shape index: {}]
  %s1 = inlined_call_operand.hbm [shape: f32[8,8], index: 1, kind: input, shape index: {}]
  %s2 = inlined_call_operand.vmem [shape: f32[1,32], index: 2, kind: input, shape index: {}]
  %s3 = inlined_call_operand.vmem [shape: f32[1,32], index: 3, kind: input, shape index: {}]
  %s4 = inlined_call_operand.vmem [shape: bf16[32,96], index: 4, kind: input, shape index: {}]
  %s5 = inlined_call_operand.vmem [shape: bf16[32,32], index: 5, kind: input, shape index: {}]
  %s6 = inlined_call_operand.vmem [shape: f32[1,32], index: 6, kind: input, shape index: {}]
  %s7 = inlined_call_operand.vmem [shape: f32[1,32], index: 7, kind: input, shape index: {}]
  %s8 = inlined_call_operand.vmem [shape: f32[1,32], index: 8, kind: input, shape index: {}]
  %s9 = inlined_call_operand.vmem [shape: bf16[32,128], index: 9, kind: input, shape index: {}]
  %s10 = inlined_call_operand.vmem [shape: f32[1,128], index: 10, kind: input, shape index: {}]
  %s11 = inlined_call_operand.vmem [shape: bf16[128,32], index: 11, kind: input, shape index: {}]
  %s12 = inlined_call_operand.vmem [shape: f32[1,32], index: 12, kind: input, shape index: {}]
  %s13 = inlined_call_operand.hbm [shape: f32[4,8,32], index: 13, kind: output, shape index: {}]
  %s14 = sld [smem:[#allocation0]]
  $region89: #{tpu_custom_call.1} parent=0
    _
  %s16 = ssub.s32 1, %s14
  %s17 = scalar_select 0, %s16, %s14
  $region1: #{tpu_custom_call.1} parent=0
    #allocation2 [shape = 'u8[4096]{0}', space=vmem, size = 0x1000, scoped, tag = 'input window, operand 1, single buffered']
    #allocation3 [shape = 's32[2]{0}', space=sflag, size = 0x8, scoped, tag = 'scoped memory for tpu_custom_call.1']
    #allocation4 [shape = 's32[2]{0}', space=sflag, size = 0x8, scoped, tag = 'scoped memory for tpu_custom_call.1']
    #allocation5 [shape = 'u8[16384]{0}', space=vmem, size = 0x4000, scoped, tag = 'output window, operand 0']
    %18 = vsyncpa [#allocation3], 0
    %19 = vsyncpa [#allocation4], 0
    %s20 = scalar_lea.sflag [#allocation4], 1
    %21 = vsyncpa %s20, 0
    loop: start=0, step=1, limit=4
    $region2: #{tpu_custom_call.1} parent=1 // loop_pre_header
      _
    $region3: #{tpu_custom_call.1} parent=1 // loop_header
      %s23 = sphi 0, %s27
      %p24 = scmp.ge.s32.totalorder %s23, 4
      %s33 = sphi 0, %s35
      %s36 = sphi 0, %s33
      %s37 = sphi 0, %s36
      %s53 = sphi 0, %s37
      %s57 = sphi 0, %s57
      %s59 = sphi 0, %s57
      %s60 = sphi 0, %s59
      %s74 = sphi 0, %s60
      %s78 = sphi 0, %s78
      %s80 = sphi 0, %s78
      %s81 = sphi 0, %s80
      %s95 = sphi 0, %s81
      %s99 = sphi 0, %s99
      %s101 = sphi 0, %s99
      %s102 = sphi 0, %s101
      %s116 = sphi 0, %s102
      %s120 = sphi 0, %s120
      %s122 = sphi 0, %s120
      %s123 = sphi 0, %s122
      %s137 = sphi 0, %s123
      %s141 = sphi 0, %s141
      %s143 = sphi 0, %s141
      %s144 = sphi 0, %s143
      %s158 = sphi 0, %s144
      %s162 = sphi 0, %s162
      %s164 = sphi 0, %s162
      %s165 = sphi 0, %s164
      %s179 = sphi 0, %s165
      %s183 = sphi 0, %s183
      %s185 = sphi 0, %s183
      %s186 = sphi 0, %s185
      %s200 = sphi 0, %s186
      %s204 = sphi 0, %s204
      %s206 = sphi 0, %s204
      %s207 = sphi 0, %s206
      %s221 = sphi 0, %s207
      %s225 = sphi 0, %s225
      %s227 = sphi 0, %s225
      %s228 = sphi 0, %s227
      %s242 = sphi 0, %s228
      %s246 = sphi 0, %s246
      %s248 = sphi 0, %s246
      %s249 = sphi 0, %s248
      %s263 = sphi 0, %s249
      %s267 = sphi 0, %s267
      %s269 = sphi 0, %s267
      %s270 = sphi 0, %s269
      %s284 = sphi 0, %s270
      %s288 = sphi 0, %s288
      %s290 = sphi 0, %s288
      %s291 = sphi 0, %s290
      %s305 = sphi 0, %s291
      %s311 = sphi 0, %s313
      %s314 = sphi 0, %s311
      %s315 = sphi 0, %s314
      %s331 = sphi 0, %s315
    $region4: #{tpu_custom_call.1} parent=1 // loop_header_branch
      %26 = sbr.rel (%p24) target = $region8
    $region5: #{tpu_custom_call.1} parent=1 // loop_body
      %s28 = ssub.s32 %s23, 1
      %s29 = ssub.s32 %s23, 2
      %s30 = sadd.s32 %s23, 1
      %s31 = ssub.s32 %s23, %s30
      %p32 = scmp.eq.s32.totalorder %s31, 0
      %s34 = sadd.s32 %s33, 1
      %s35 = scalar_select %p32, %s33, %s34
      %p38 = pneg %p32
      %p39 = scmp.eq.s32.totalorder %s23, 1
      %p40 = por %p38, %p39
      %p41 = scmp.ne.s32.totalorder %s33, %s36
      %p42 = scmp.eq.s32.totalorder %s23, 0
      %p43 = por %p41, %p42
      %p44 = scmp.ne.s32.totalorder %s33, %s36
      %p45 = scmp.eq.s32.totalorder %s28, 1
      %p46 = por %p44, %p45
      %p47 = scmp.ne.s32.totalorder %s36, %s37
      %p48 = scmp.eq.s32.totalorder %s28, 0
      %p49 = por %p47, %p48
      %p50 = scmp.ne.s32.totalorder %s36, %s37
      %p51 = scmp.eq.s32.totalorder %s29, 1
      %p52 = por %p50, %p51
      %p54 = scmp.ne.s32.totalorder %s37, %s53
      %p55 = scmp.eq.s32.totalorder %s29, 0
      %p56 = por %p54, %p55
      %s58 = sadd.s32 %s57, 1
      %p61 = scmp.eq.s32.totalorder %s23, 1
      %p62 = scmp.ne.s32.totalorder %s57, %s59
      %p63 = scmp.eq.s32.totalorder %s23, 0
      %p64 = por %p62, %p63
      %p65 = scmp.ne.s32.totalorder %s57, %s59
      %p66 = scmp.eq.s32.totalorder %s28, 1
      %p67 = por %p65, %p66
      %p68 = scmp.ne.s32.totalorder %s59, %s60
      %p69 = scmp.eq.s32.totalorder %s28, 0
      %p70 = por %p68, %p69
      %p71 = scmp.ne.s32.totalorder %s59, %s60
      %p72 = scmp.eq.s32.totalorder %s29, 1
      %p73 = por %p71, %p72
      %p75 = scmp.ne.s32.totalorder %s60, %s74
      %p76 = scmp.eq.s32.totalorder %s29, 0
      %p77 = por %p75, %p76
      %s79 = sadd.s32 %s78, 1
      %p82 = scmp.eq.s32.totalorder %s23, 1
      %p83 = scmp.ne.s32.totalorder %s78, %s80
      %p84 = scmp.eq.s32.totalorder %s23, 0
      %p85 = por %p83, %p84
      %p86 = scmp.ne.s32.totalorder %s78, %s80
      %p87 = scmp.eq.s32.totalorder %s28, 1
      %p88 = por %p86, %p87
      %p89 = scmp.ne.s32.totalorder %s80, %s81
      %p90 = scmp.eq.s32.totalorder %s28, 0
      %p91 = por %p89, %p90
      %p92 = scmp.ne.s32.totalorder %s80, %s81
      %p93 = scmp.eq.s32.totalorder %s29, 1
      %p94 = por %p92, %p93
      %p96 = scmp.ne.s32.totalorder %s81, %s95
      %p97 = scmp.eq.s32.totalorder %s29, 0
      %p98 = por %p96, %p97
      %s100 = sadd.s32 %s99, 1
      %p103 = scmp.eq.s32.totalorder %s23, 1
      %p104 = scmp.ne.s32.totalorder %s99, %s101
      %p105 = scmp.eq.s32.totalorder %s23, 0
      %p106 = por %p104, %p105
      %p107 = scmp.ne.s32.totalorder %s99, %s101
      %p108 = scmp.eq.s32.totalorder %s28, 1
      %p109 = por %p107, %p108
      %p110 = scmp.ne.s32.totalorder %s101, %s102
      %p111 = scmp.eq.s32.totalorder %s28, 0
      %p112 = por %p110, %p111
      %p113 = scmp.ne.s32.totalorder %s101, %s102
      %p114 = scmp.eq.s32.totalorder %s29, 1
      %p115 = por %p113, %p114
      %p117 = scmp.ne.s32.totalorder %s102, %s116
      %p118 = scmp.eq.s32.totalorder %s29, 0
      %p119 = por %p117, %p118
      %s121 = sadd.s32 %s120, 1
      %p124 = scmp.eq.s32.totalorder %s23, 1
      %p125 = scmp.ne.s32.totalorder %s120, %s122
      %p126 = scmp.eq.s32.totalorder %s23, 0
      %p127 = por %p125, %p126
      %p128 = scmp.ne.s32.totalorder %s120, %s122
      %p129 = scmp.eq.s32.totalorder %s28, 1
      %p130 = por %p128, %p129
      %p131 = scmp.ne.s32.totalorder %s122, %s123
      %p132 = scmp.eq.s32.totalorder %s28, 0
      %p133 = por %p131, %p132
      %p134 = scmp.ne.s32.totalorder %s122, %s123
      %p135 = scmp.eq.s32.totalorder %s29, 1
      %p136 = por %p134, %p135
      %p138 = scmp.ne.s32.totalorder %s123, %s137
      %p139 = scmp.eq.s32.totalorder %s29, 0
      %p140 = por %p138, %p139
      %s142 = sadd.s32 %s141, 1
      %p145 = scmp.eq.s32.totalorder %s23, 1
      %p146 = scmp.ne.s32.totalorder %s141, %s143
      %p147 = scmp.eq.s32.totalorder %s23, 0
      %p148 = por %p146, %p147
      %p149 = scmp.ne.s32.totalorder %s141, %s143
      %p150 = scmp.eq.s32.totalorder %s28, 1
      %p151 = por %p149, %p150
      %p152 = scmp.ne.s32.totalorder %s143, %s144
      %p153 = scmp.eq.s32.totalorder %s28, 0
      %p154 = por %p152, %p153
      %p155 = scmp.ne.s32.totalorder %s143, %s144
      %p156 = scmp.eq.s32.totalorder %s29, 1
      %p157 = por %p155, %p156
      %p159 = scmp.ne.s32.totalorder %s144, %s158
      %p160 = scmp.eq.s32.totalorder %s29, 0
      %p161 = por %p159, %p160
      %s163 = sadd.s32 %s162, 1
      %p166 = scmp.eq.s32.totalorder %s23, 1
      %p167 = scmp.ne.s32.totalorder %s162, %s164
      %p168 = scmp.eq.s32.totalorder %s23, 0
      %p169 = por %p167, %p168
      %p170 = scmp.ne.s32.totalorder %s162, %s164
      %p171 = scmp.eq.s32.totalorder %s28, 1
      %p172 = por %p170, %p171
      %p173 = scmp.ne.s32.totalorder %s164, %s165
      %p174 = scmp.eq.s32.totalorder %s28, 0
      %p175 = por %p173, %p174
      %p176 = scmp.ne.s32.totalorder %s164, %s165
      %p177 = scmp.eq.s32.totalorder %s29, 1
      %p178 = por %p176, %p177
      %p180 = scmp.ne.s32.totalorder %s165, %s179
      %p181 = scmp.eq.s32.totalorder %s29, 0
      %p182 = por %p180, %p181
      %s184 = sadd.s32 %s183, 1
      %p187 = scmp.eq.s32.totalorder %s23, 1
      %p188 = scmp.ne.s32.totalorder %s183, %s185
      %p189 = scmp.eq.s32.totalorder %s23, 0
      %p190 = por %p188, %p189
      %p191 = scmp.ne.s32.totalorder %s183, %s185
      %p192 = scmp.eq.s32.totalorder %s28, 1
      %p193 = por %p191, %p192
      %p194 = scmp.ne.s32.totalorder %s185, %s186
      %p195 = scmp.eq.s32.totalorder %s28, 0
      %p196 = por %p194, %p195
      %p197 = scmp.ne.s32.totalorder %s185, %s186
      %p198 = scmp.eq.s32.totalorder %s29, 1
      %p199 = por %p197, %p198
      %p201 = scmp.ne.s32.totalorder %s186, %s200
      %p202 = scmp.eq.s32.totalorder %s29, 0
      %p203 = por %p201, %p202
      %s205 = sadd.s32 %s204, 1
      %p208 = scmp.eq.s32.totalorder %s23, 1
      %p209 = scmp.ne.s32.totalorder %s204, %s206
      %p210 = scmp.eq.s32.totalorder %s23, 0
      %p211 = por %p209, %p210
      %p212 = scmp.ne.s32.totalorder %s204, %s206
      %p213 = scmp.eq.s32.totalorder %s28, 1
      %p214 = por %p212, %p213
      %p215 = scmp.ne.s32.totalorder %s206, %s207
      %p216 = scmp.eq.s32.totalorder %s28, 0
      %p217 = por %p215, %p216
      %p218 = scmp.ne.s32.totalorder %s206, %s207
      %p219 = scmp.eq.s32.totalorder %s29, 1
      %p220 = por %p218, %p219
      %p222 = scmp.ne.s32.totalorder %s207, %s221
      %p223 = scmp.eq.s32.totalorder %s29, 0
      %p224 = por %p222, %p223
      %s226 = sadd.s32 %s225, 1
      %p229 = scmp.eq.s32.totalorder %s23, 1
      %p230 = scmp.ne.s32.totalorder %s225, %s227
      %p231 = scmp.eq.s32.totalorder %s23, 0
      %p232 = por %p230, %p231
      %p233 = scmp.ne.s32.totalorder %s225, %s227
      %p234 = scmp.eq.s32.totalorder %s28, 1
      %p235 = por %p233, %p234
      %p236 = scmp.ne.s32.totalorder %s227, %s228
      %p237 = scmp.eq.s32.totalorder %s28, 0
      %p238 = por %p236, %p237
      %p239 = scmp.ne.s32.totalorder %s227, %s228
      %p240 = scmp.eq.s32.totalorder %s29, 1
      %p241 = por %p239, %p240
      %p243 = scmp.ne.s32.totalorder %s228, %s242
      %p244 = scmp.eq.s32.totalorder %s29, 0
      %p245 = por %p243, %p244
      %s247 = sadd.s32 %s246, 1
      %p250 = scmp.eq.s32.totalorder %s23, 1
      %p251 = scmp.ne.s32.totalorder %s246, %s248
      %p252 = scmp.eq.s32.totalorder %s23, 0
      %p253 = por %p251, %p252
      %p254 = scmp.ne.s32.totalorder %s246, %s248
      %p255 = scmp.eq.s32.totalorder %s28, 1
      %p256 = por %p254, %p255
      %p257 = scmp.ne.s32.totalorder %s248, %s249
      %p258 = scmp.eq.s32.totalorder %s28, 0
      %p259 = por %p257, %p258
      %p260 = scmp.ne.s32.totalorder %s248, %s249
      %p261 = scmp.eq.s32.totalorder %s29, 1
      %p262 = por %p260, %p261
      %p264 = scmp.ne.s32.totalorder %s249, %s263
      %p265 = scmp.eq.s32.totalorder %s29, 0
      %p266 = por %p264, %p265
      %s268 = sadd.s32 %s267, 1
      %p271 = scmp.eq.s32.totalorder %s23, 1
      %p272 = scmp.ne.s32.totalorder %s267, %s269
      %p273 = scmp.eq.s32.totalorder %s23, 0
      %p274 = por %p272, %p273
      %p275 = scmp.ne.s32.totalorder %s267, %s269
      %p276 = scmp.eq.s32.totalorder %s28, 1
      %p277 = por %p275, %p276
      %p278 = scmp.ne.s32.totalorder %s269, %s270
      %p279 = scmp.eq.s32.totalorder %s28, 0
      %p280 = por %p278, %p279
      %p281 = scmp.ne.s32.totalorder %s269, %s270
      %p282 = scmp.eq.s32.totalorder %s29, 1
      %p283 = por %p281, %p282
      %p285 = scmp.ne.s32.totalorder %s270, %s284
      %p286 = scmp.eq.s32.totalorder %s29, 0
      %p287 = por %p285, %p286
      %s289 = sadd.s32 %s288, 1
      %p292 = scmp.eq.s32.totalorder %s23, 1
      %p293 = scmp.ne.s32.totalorder %s288, %s290
      %p294 = scmp.eq.s32.totalorder %s23, 0
      %p295 = por %p293, %p294
      %p296 = scmp.ne.s32.totalorder %s288, %s290
      %p297 = scmp.eq.s32.totalorder %s28, 1
      %p298 = por %p296, %p297
      %p299 = scmp.ne.s32.totalorder %s290, %s291
      %p300 = scmp.eq.s32.totalorder %s28, 0
      %p301 = por %p299, %p300
      %p302 = scmp.ne.s32.totalorder %s290, %s291
      %p303 = scmp.eq.s32.totalorder %s29, 1
      %p304 = por %p302, %p303
      %p306 = scmp.ne.s32.totalorder %s291, %s305
      %p307 = scmp.eq.s32.totalorder %s29, 0
      %p308 = por %p306, %p307
      %s309 = ssub.s32 %s23, %s30
      %p310 = scmp.eq.s32.totalorder %s309, 0
      %s312 = sadd.s32 %s311, 1
      %s313 = scalar_select %p310, %s311, %s312
      %p316 = pneg %p310
      %p317 = scmp.eq.s32.totalorder %s23, 1
      %p318 = por %p316, %p317
      %p319 = scmp.ne.s32.totalorder %s311, %s314
      %p320 = scmp.eq.s32.totalorder %s23, 0
      %p321 = por %p319, %p320
      %p322 = scmp.ne.s32.totalorder %s311, %s314
      %p323 = scmp.eq.s32.totalorder %s28, 1
      %p324 = por %p322, %p323
      %p325 = scmp.ne.s32.totalorder %s314, %s315
      %p326 = scmp.eq.s32.totalorder %s28, 0
      %p327 = por %p325, %p326
      %p328 = scmp.ne.s32.totalorder %s314, %s315
      %p329 = scmp.eq.s32.totalorder %s29, 1
      %p330 = por %p328, %p329
      %p332 = scmp.ne.s32.totalorder %s315, %s331
      %p333 = scmp.eq.s32.totalorder %s29, 0
      %p334 = por %p332, %p333
      %p335 = scmp.le.s32.totalorder 1, %s23
      %p336 = scmp.lt.s32.totalorder %s23, 3
      %p337 = pnand %p335, %p336
      %p338 = pneg %p337
      // Predicated region
      $region9: #{tpu_custom_call.1} parent=5 // pred_check
        _
      $region10: #{tpu_custom_call.1} parent=5 // pred_check_branch
        %340 = sbr.rel (%p337) target = $region12
      $region11: #{tpu_custom_call.1} parent=5 // pred_region
        %s341 = ssub.s32 %s23, 1
        // Predicated region
        $region13: #{tpu_custom_call.1} parent=11 // pred_check
          %p342 = pneg %p70
        $region14: #{tpu_custom_call.1} parent=11 // pred_check_branch
          %344 = sbr.rel (%p342) target = $region16
        $region15: #{tpu_custom_call.1} parent=11 // pred_region
          %s346 = ssub.s32 128, 128
          %347 = vsyncadd [#allocation3], %s346
          %s349 = sshll.u32 [#allocation2], 4
          %s350 = int_to_ptr.vmem [resolvable:$true] %s349
          %352 = dma.hbm_to_vmem [thread:$0]  %s1, 128, %s350, [#allocation3]
        $region16: #{tpu_custom_call.1} parent=11 // pred_fallthru
          _
        // Predicated region
        $region17: #{tpu_custom_call.1} parent=11 // pred_check
          %p353 = pneg %p91
        $region18: #{tpu_custom_call.1} parent=11 // pred_check_branch
          %355 = sbr.rel (%p353) target = $region20
        $region19: #{tpu_custom_call.1} parent=11 // pred_region
          _
        $region20: #{tpu_custom_call.1} parent=11 // pred_fallthru
          _
        // Predicated region
        $region21: #{tpu_custom_call.1} parent=11 // pred_check
          %p356 = pneg %p112
        $region22: #{tpu_custom_call.1} parent=11 // pred_check_branch
          %358 = sbr.rel (%p356) target = $region24
        $region23: #{tpu_custom_call.1} parent=11 // pred_region
          _
        $region24: #{tpu_custom_call.1} parent=11 // pred_fallthru
          _
        // Predicated region
        $region25: #{tpu_custom_call.1} parent=11 // pred_check
          %p359 = pneg %p133
        $region26: #{tpu_custom_call.1} parent=11 // pred_check_branch
          %361 = sbr.rel (%p359) target = $region28
        $region27: #{tpu_custom_call.1} parent=11 // pred_region
          _
        $region28: #{tpu_custom_call.1} parent=11 // pred_fallthru
          _
        // Predicated region
        $region29: #{tpu_custom_call.1} parent=11 // pred_check
          %p362 = pneg %p154
        $region30: #{tpu_custom_call.1} parent=11 // pred_check_branch
          %364 = sbr.rel (%p362) target = $region32
        $region31: #{tpu_custom_call.1} parent=11 // pred_region
          _
        $region32: #{tpu_custom_call.1} parent=11 // pred_fallthru
          _
        // Predicated region
        $region33: #{tpu_custom_call.1} parent=11 // pred_check
          %p365 = pneg %p175
        $region34: #{tpu_custom_call.1} parent=11 // pred_check_branch
          %367 = sbr.rel (%p365) target = $region36
        $region35: #{tpu_custom_call.1} parent=11 // pred_region
          _
        $region36: #{tpu_custom_call.1} parent=11 // pred_fallthru
          _
        // Predicated region
        $region37: #{tpu_custom_call.1} parent=11 // pred_check
          %p368 = pneg %p196
        $region38: #{tpu_custom_call.1} parent=11 // pred_check_branch
          %370 = sbr.rel (%p368) target = $region40
        $region39: #{tpu_custom_call.1} parent=11 // pred_region
          _
        $region40: #{tpu_custom_call.1} parent=11 // pred_fallthru
          _
        // Predicated region
        $region41: #{tpu_custom_call.1} parent=11 // pred_check
          %p371 = pneg %p217
        $region42: #{tpu_custom_call.1} parent=11 // pred_check_branch
          %373 = sbr.rel (%p371) target = $region44
        $region43: #{tpu_custom_call.1} parent=11 // pred_region
          _
        $region44: #{tpu_custom_call.1} parent=11 // pred_fallthru
          _
        // Predicated region
        $region45: #{tpu_custom_call.1} parent=11 // pred_check
          %p374 = pneg %p238
        $region46: #{tpu_custom_call.1} parent=11 // pred_check_branch
          %376 = sbr.rel (%p374) target = $region48
        $region47: #{tpu_custom_call.1} parent=11 // pred_region
          _
        $region48: #{tpu_custom_call.1} parent=11 // pred_fallthru
          _
        // Predicated region
        $region49: #{tpu_custom_call.1} parent=11 // pred_check
          %p377 = pneg %p259
        $region50: #{tpu_custom_call.1} parent=11 // pred_check_branch
          %379 = sbr.rel (%p377) target = $region52
        $region51: #{tpu_custom_call.1} parent=11 // pred_region
          _
        $region52: #{tpu_custom_call.1} parent=11 // pred_fallthru
          _
        // Predicated region
        $region53: #{tpu_custom_call.1} parent=11 // pred_check
          %p380 = pneg %p280
        $region54: #{tpu_custom_call.1} parent=11 // pred_check_branch
          %382 = sbr.rel (%p380) target = $region56
        $region55: #{tpu_custom_call.1} parent=11 // pred_region
          _
        $region56: #{tpu_custom_call.1} parent=11 // pred_fallthru
          _
        // Predicated region
        $region57: #{tpu_custom_call.1} parent=11 // pred_check
          %p383 = pneg %p301
        $region58: #{tpu_custom_call.1} parent=11 // pred_check_branch
          %385 = sbr.rel (%p383) target = $region60
        $region59: #{tpu_custom_call.1} parent=11 // pred_region
          _
        $region60: #{tpu_custom_call.1} parent=11 // pred_fallthru
          _
      $region12: #{tpu_custom_call.1} parent=5 // pred_fallthru
        _
      %p386 = scmp.lt.s32.totalorder %s23, 2
      // Predicated region
      $region61: #{tpu_custom_call.1} parent=5 // pred_check
        %p387 = pneg %p386
      $region62: #{tpu_custom_call.1} parent=5 // pred_check_branch
        %389 = sbr.rel (%p387) target = $region64
      $region63: #{tpu_custom_call.1} parent=5 // pred_region
        // Predicated region
        $region65: #{tpu_custom_call.1} parent=63 // pred_check
          %p390 = pneg %p43
        $region66: #{tpu_custom_call.1} parent=63 // pred_check_branch
          %392 = sbr.rel (%p390) target = $region68
        $region67: #{tpu_custom_call.1} parent=63 // pred_region
          %s393 = smul.u32 2, %s23
          %p394 = scmp.lt.s32.totalorder %s393, 3
          %s395 = scalar_select %p394, %s393, 3
          %s396 = smul.addr %s395, 8
          %s397 = scalar_lea.vmem %s0, %s396
          %s398 = smul.u32 2, %s23
        $region68: #{tpu_custom_call.1} parent=63 // pred_fallthru
          _
      $region64: #{tpu_custom_call.1} parent=5 // pred_fallthru
        _
      %p399 = scmp.le.s32.totalorder 1, %s23
      %p400 = scmp.lt.s32.totalorder %s23, 3
      %p401 = pnand %p399, %p400
      %p402 = pneg %p401
      // Predicated region
      $region69: #{tpu_custom_call.1} parent=5 // pred_check
        _
      $region70: #{tpu_custom_call.1} parent=5 // pred_check_branch
        %404 = sbr.rel (%p401) target = $region72
      $region71: #{tpu_custom_call.1} parent=5 // pred_region
        %s405 = ssub.s32 %s23, 1
        // Predicated region
        $region73: #{tpu_custom_call.1} parent=71 // pred_check
          %p406 = pneg %p70
        $region74: #{tpu_custom_call.1} parent=71 // pred_check_branch
          %408 = sbr.rel (%p406) target = $region76
        $region75: #{tpu_custom_call.1} parent=71 // pred_region
          %409 = dma.done [#allocation3], 128
        $region76: #{tpu_custom_call.1} parent=71 // pred_fallthru
          _
        %s410 = smul.u32 2, %s28
        %p411 = scmp.lt.s32.totalorder %s410, 3
        %s412 = scalar_select %p411, %s410, 3
        %s413 = smul.addr %s412, 8
        %s414 = scalar_lea.vmem %s0, %s413
        %p415 = pneg %p49
        %p416 = pneg %p46
        %p417 = pneg %p70
        %p418 = pneg %p67
        %p419 = pneg %p91
        %p420 = pneg %p88
        %p421 = pneg %p112
        %p422 = pneg %p109
        %p423 = pneg %p133
        %p424 = pneg %p130
        %p425 = pneg %p154
        %p426 = pneg %p151
        %p427 = pneg %p175
        %p428 = pneg %p172
        %p429 = pneg %p196
        %p430 = pneg %p193
        %p431 = pneg %p217
        %p432 = pneg %p214
        %p433 = pneg %p238
        %p434 = pneg %p235
        %p435 = pneg %p259
        %p436 = pneg %p256
        %p437 = pneg %p280
        %p438 = pneg %p277
        %p439 = pneg %p301
        %p440 = pneg %p298
        %p441 = pneg %p327
        %p442 = pneg %p324
        %s443 = sand.u32 %s314, 1
        %s444 = scalar_lea.sflag [#allocation4], %s443
        %s445 = sand.u32 %s314, 1
        %s446 = smul.addr %s445, 16
        %s447 = scalar_lea.vmem [#allocation5], %s446
        %s448 = smul.u32 2, %s28
        %p449 = scmp.lt.s32.totalorder %s448, 3
        %s450 = scalar_select %p449, %s448, 3
        %s451 = smul.addr %s450, 8
        %s452 = scalar_lea.vmem %s0, %s451
        %s453 = smul.u32 2, %s28
        %s454 = smul.u32 2, %s28
        %v456 = vld [vmem:[%s452] sm:$0xff]
        %v457 = vld [vmem:[%s452 + $0x8] sm:$0xff]
        %vm458 = vcmask 261120
        %v459 = vsel %vm458, %v456, 0.0
        %460 = vadd.xlane.f32.xlu0 %v459
        %v461 = vpop.xlane.xlu0 %460
        %v462 = vsel %vm458, %v457, 0.0
        %463 = vadd.xlane.f32.xlu0 %v462
        %v464 = vpop.xlane.xlu0 %463
        %v465 = vrcp.pop 32.0
        %v466 = vmul.f32 %v461, %v465
        %v467 = vmul.f32 %v464, %v465
        %v468 = vsub.f32 %v456, %v466
        %v469 = vsub.f32 %v457, %v467
        %v470 = vmul.f32 %v468, %v468
        %v471 = vmul.f32 %v469, %v469
        %v472 = vsel %vm458, %v470, 0.0
        %473 = vadd.xlane.f32.xlu0 %v472
        %v474 = vpop.xlane.xlu0 %473
        %v475 = vsel %vm458, %v471, 0.0
        %476 = vadd.xlane.f32.xlu0 %v475
        %v477 = vpop.xlane.xlu0 %476
        %v478 = vmul.f32 %v474, %v465
        %v479 = vmul.f32 %v477, %v465
        %v480 = vadd.f32 %v478, 1e-05
        %v481 = vadd.f32 %v479, 1e-05
        %v482 = vrsqrt.pop %v480
        %v483 = vrsqrt.pop %v481
        %v484 = vmul.f32 %v468, %v482
        %v485 = vmul.f32 %v469, %v483
        %v486 = vld [vmem:[%s2] sm:$0x1]
        %v488 = vlaneseq
        %v489 = vshrl.u32 %v488, 7
        %v490 = vsub.s32 0, %v489
        %v491 = vrot.slane %v486, %v490
        %v493 = vmul.f32 %v484, %v491
        %v494 = vmul.f32 %v485, %v491
        %v495 = vld [vmem:[%s3] sm:$0x1]
        %v497 = vlaneseq
        %v498 = vshrl.u32 %v497, 7
        %v499 = vsub.s32 0, %v498
        %v500 = vrot.slane %v495, %v499
        %v502 = vadd.f32 %v493, %v500
        %v503 = vadd.f32 %v494, %v500
        %v504 = vpack.c.bf16 %v503, %v502
        %v505 = vld [vmem:[%s4] sm:$0xf]
        %v506 = vld [vmem:[%s4 + $0x4] sm:$0xf]
        %v507 = vld [vmem:[%s4 + $0x8] sm:$0xf]
        %v508 = vld [vmem:[%s4 + $0xc] sm:$0xf]
        %v513 = vunpack.c.l.b16 %v505
        %v514 = vunpack.c.l.b16 %v506
        %v515 = vunpack.c.l.b16 %v507
        %v516 = vunpack.c.l.b16 %v508
        %v517 = vpack.c.b16 %v514, %v513
        %v518 = vpack.c.b16 %v516, %v515
        %v522 = vsel %vm458, %v504, 0
        %524 = vmatprep.subr.bf16.mxu0 0
        %525 = vmatpush1.bf16.msra.mxu0 %v517
        %526 = vmatprep.subr.bf16.mxu0 0
        %527 = vmatpush1.bf16.msra.mxu0 %v518
        %528 = vmatprep.subr.bf16.mxu0 0
        %529 = vmatpush1.bf16.msra.mxu0 0
        %530 = vmatprep.subr.bf16.mxu0 0
        %531 = vmatpush1.bf16.msra.mxu0 0
        %532 = vmatprep.subr.bf16.mxu0 0
        %533 = vmatpush1.bf16.msra.mxu0 0
        %534 = vmatprep.subr.bf16.mxu0 0
        %535 = vmatpush1.bf16.msra.mxu0 0
        %536 = vmatprep.subr.bf16.mxu0 0
        %537 = vmatpush1.bf16.msra.mxu0 0
        %538 = vmatprep.subr.bf16.mxu0 0
        %539 = vmatpush1.bf16.msra.mxu0 0
        %540 = vmatprep.subr.bf16.mxu0 0
        %541 = vmatpush1.bf16.msra.mxu0 0
        %542 = vmatprep.subr.bf16.mxu0 0
        %543 = vmatpush1.bf16.msra.mxu0 0
        %544 = vmatprep.subr.bf16.mxu0 0
        %545 = vmatpush1.bf16.msra.mxu0 0
        %546 = vmatprep.subr.bf16.mxu0 0
        %547 = vmatpush1.bf16.msra.mxu0 0
        %548 = vmatprep.subr.bf16.mxu0 0
        %549 = vmatpush1.bf16.msra.mxu0 0
        %550 = vmatprep.subr.bf16.mxu0 0
        %551 = vmatpush1.bf16.msra.mxu0 0
        %552 = vmatprep.subr.bf16.mxu0 0
        %553 = vmatpush1.bf16.msra.mxu0 0
        %554 = vmatprep.subr.bf16.mxu0 0
        %555 = vmatpush1.bf16.msra.mxu0 0
        %556 = vmatprep.mubr.bf16.mxu0 0
        %557 = vmatmul.mubr.bf16.gmra.mrb[0].mxu0 %v522
        %v558 = vpop.f32.mrb[0].mxu0
        %v559 = vadd.f32 0.0, %v558
        %v560 = vpop.f32.mrb[0].mxu0
        %v561 = vpop.f32.mrb[0].mxu0
        %v562 = vadd.f32 0.0, %v561
        %v563 = vpop.f32.mrb[0].mxu0
        %564 = vdwg.mxu0
        %v565 = vld [vmem:[#allocation2] sm:$0xff]
        %v566 = vmul.f32 %v559, 0.0009765625
        %v567 = vpack.c.bf16 %v566, %v566
        %v568 = vpack.c.bf16 %v559, %v559
        %570 = vrot.lane.b32.xlu0 %v568, 96
        %v571 = vpop.permute.xlu0 %570
        %vm572 = vcmask 64512
        %v574 = vsel %vm572, %v567, 0
        %v577 = vsel %vm572, %v571, 0
        %579 = vmatprep.subr.bf16.mxu0 0
        %580 = vmatpush1.bf16.xpose.msra.mxu0 %v577
        %581 = vmatprep.subr.bf16.mxu0 0
        %582 = vmatpush1.bf16.xpose.msra.mxu0 0
        %583 = vmatprep.subr.bf16.mxu0 0
        %584 = vmatpush1.bf16.xpose.msra.mxu0 0
        %585 = vmatprep.subr.bf16.mxu0 0
        %586 = vmatpush1.bf16.xpose.msra.mxu0 0
        %587 = vmatprep.subr.bf16.mxu0 0
        %588 = vmatpush1.bf16.xpose.msra.mxu0 0
        %589 = vmatprep.subr.bf16.mxu0 0
        %590 = vmatpush1.bf16.xpose.msra.mxu0 0
        %591 = vmatprep.subr.bf16.mxu0 0
        %592 = vmatpush1.bf16.xpose.msra.mxu0 0
        %593 = vmatprep.subr.bf16.mxu0 0
        %594 = vmatpush1.bf16.xpose.msra.mxu0 0
        %595 = vmatprep.subr.bf16.mxu0 0
        %596 = vmatpush1.bf16.xpose.msra.mxu0 0
        %597 = vmatprep.subr.bf16.mxu0 0
        %598 = vmatpush1.bf16.xpose.msra.mxu0 0
        %599 = vmatprep.subr.bf16.mxu0 0
        %600 = vmatpush1.bf16.xpose.msra.mxu0 0
        %601 = vmatprep.subr.bf16.mxu0 0
        %602 = vmatpush1.bf16.xpose.msra.mxu0 0
        %603 = vmatprep.subr.bf16.mxu0 0
        %604 = vmatpush1.bf16.xpose.msra.mxu0 0
        %605 = vmatprep.subr.bf16.mxu0 0
        %606 = vmatpush1.bf16.xpose.msra.mxu0 0
        %607 = vmatprep.subr.bf16.mxu0 0
        %608 = vmatpush1.bf16.xpose.msra.mxu0 0
        %609 = vmatprep.subr.bf16.mxu0 0
        %610 = vmatpush1.bf16.xpose.msra.mxu0 0
        %611 = vmatprep.mubr.bf16.mxu0 0
        %612 = vmatmul.mubr.bf16.gmra.mrb[0].mxu0 %v574
        %v613 = vpop.f32.mrb[0].mxu0
        %v614 = vadd.f32 %v565, %v613
        %v615 = vpop.f32.mrb[0].mxu0
        %v616 = vpop.f32.mrb[0].mxu0
        %v617 = vpop.f32.mrb[0].mxu0
        %618 = vdwg.mxu0
        %v619 = vsel %vm572, %v614, -inf
        %620 = vmax.xlane.f32.xlu0 %v619
        %v621 = vpop.xlane.xlu0 %620
        %v622 = vsub.f32 %v614, %v621
        %v623 = vmul.f32 %v622, 1.442695
        %v624 = vpow.pop %v623
        %v625 = vsel %vm572, %v624, 0.0
        %626 = vadd.xlane.f32.xlu0 %v625
        %v627 = vpop.xlane.xlu0 %626
        %v628 = vrcp.pop %v627
        %v629 = vmul.f32 %v624, %v628
        %v630 = vpack.c.bf16 %v629, %v629
        %631 = vrot.lane.b32.xlu0 %v568, 64
        %v632 = vpop.permute.xlu0 %631
        %v634 = vsel %vm572, %v630, 0
        %vm636 = vcmask 1043456
        %v638 = vsel %vm636, %v632, 0
        %640 = vmatprep.subr.bf16.mxu0 0
        %641 = vmatpush1.bf16.msra.mxu0 %v638
        %642 = vmatprep.subr.bf16.mxu0 0
        %643 = vmatpush1.bf16.msra.mxu0 0
        %644 = vmatprep.subr.bf16.mxu0 0
        %645 = vmatpush1.bf16.msra.mxu0 0
        %646 = vmatprep.subr.bf16.mxu0 0
        %647 = vmatpush1.bf16.msra.mxu0 0
        %648 = vmatprep.subr.bf16.mxu0 0
        %649 = vmatpush1.bf16.msra.mxu0 0
        %650 = vmatprep.subr.bf16.mxu0 0
        %651 = vmatpush1.bf16.msra.mxu0 0
        %652 = vmatprep.subr.bf16.mxu0 0
        %653 = vmatpush1.bf16.msra.mxu0 0
        %654 = vmatprep.subr.bf16.mxu0 0
        %655 = vmatpush1.bf16.msra.mxu0 0
        %656 = vmatprep.subr.bf16.mxu0 0
        %657 = vmatpush1.bf16.msra.mxu0 0
        %658 = vmatprep.subr.bf16.mxu0 0
        %659 = vmatpush1.bf16.msra.mxu0 0
        %660 = vmatprep.subr.bf16.mxu0 0
        %661 = vmatpush1.bf16.msra.mxu0 0
        %662 = vmatprep.subr.bf16.mxu0 0
        %663 = vmatpush1.bf16.msra.mxu0 0
        %664 = vmatprep.subr.bf16.mxu0 0
        %665 = vmatpush1.bf16.msra.mxu0 0
        %666 = vmatprep.subr.bf16.mxu0 0
        %667 = vmatpush1.bf16.msra.mxu0 0
        %668 = vmatprep.subr.bf16.mxu0 0
        %669 = vmatpush1.bf16.msra.mxu0 0
        %670 = vmatprep.subr.bf16.mxu0 0
        %671 = vmatpush1.bf16.msra.mxu0 0
        %672 = vmatprep.mubr.bf16.mxu0 0
        %673 = vmatmul.mubr.bf16.gmra.mrb[0].mxu0 %v634
        %v674 = vpop.f32.mrb[0].mxu0
        %v675 = vadd.f32 0.0, %v674
        %v676 = vpop.f32.mrb[0].mxu0
        %v677 = vpop.f32.mrb[0].mxu0
        %v678 = vpop.f32.mrb[0].mxu0
        %679 = vdwg.mxu0
        %v680 = vpack.c.bf16 %v675, %v675
        %v681 = vld [vmem:[%s5] sm:$0xf]
        %683 = vrot.lane.b32.xlu0 %v567, 120
        %v684 = vpop.permute.xlu0 %683
        %685 = vrot.lane.b32.xlu0 %v568, 88
        %v686 = vpop.permute.xlu0 %685
        %v688 = vsel %vm572, %v684, 0
        %v691 = vsel %vm572, %v686, 0
        %693 = vmatprep.subr.bf16.mxu0 0
        %694 = vmatpush1.bf16.xpose.msra.mxu0 %v691
        %695 = vmatprep.subr.bf16.mxu0 0
        %696 = vmatpush1.bf16.xpose.msra.mxu0 0
        %697 = vmatprep.subr.bf16.mxu0 0
        %698 = vmatpush1.bf16.xpose.msra.mxu0 0
        %699 = vmatprep.subr.bf16.mxu0 0
        %700 = vmatpush1.bf16.xpose.msra.mxu0 0
        %701 = vmatprep.subr.bf16.mxu0 0
        %702 = vmatpush1.bf16.xpose.msra.mxu0 0
        %703 = vmatprep.subr.bf16.mxu0 0
        %704 = vmatpush1.bf16.xpose.msra.mxu0 0
        %705 = vmatprep.subr.bf16.mxu0 0
        %706 = vmatpush1.bf16.xpose.msra.mxu0 0
        %707 = vmatprep.subr.bf16.mxu0 0
        %708 = vmatpush1.bf16.xpose.msra.mxu0 0
        %709 = vmatprep.subr.bf16.mxu0 0
        %710 = vmatpush1.bf16.xpose.msra.mxu0 0
        %711 = vmatprep.subr.bf16.mxu0 0
        %712 = vmatpush1.bf16.xpose.msra.mxu0 0
        %713 = vmatprep.subr.bf16.mxu0 0
        %714 = vmatpush1.bf16.xpose.msra.mxu0 0
        %715 = vmatprep.subr.bf16.mxu0 0
        %716 = vmatpush1.bf16.xpose.msra.mxu0 0
        %717 = vmatprep.subr.bf16.mxu0 0
        %718 = vmatpush1.bf16.xpose.msra.mxu0 0
        %719 = vmatprep.subr.bf16.mxu0 0
        %720 = vmatpush1.bf16.xpose.msra.mxu0 0
        %721 = vmatprep.subr.bf16.mxu0 0
        %722 = vmatpush1.bf16.xpose.msra.mxu0 0
        %723 = vmatprep.subr.bf16.mxu0 0
        %724 = vmatpush1.bf16.xpose.msra.mxu0 0
        %725 = vmatprep.mubr.bf16.mxu0 0
        %726 = vmatmul.mubr.bf16.gmra.mrb[0].mxu0 %v688
        %v727 = vpop.f32.mrb[0].mxu0
        %v728 = vadd.f32 %v565, %v727
        %v729 = vpop.f32.mrb[0].mxu0
        %v730 = vpop.f32.mrb[0].mxu0
        %v731 = vpop.f32.mrb[0].mxu0
        %732 = vdwg.mxu0
        %v733 = vsel %vm572, %v728, -inf
        %734 = vmax.xlane.f32.xlu0 %v733
        %v735 = vpop.xlane.xlu0 %734
        %v736 = vsub.f32 %v728, %v735
        %v737 = vmul.f32 %v736, 1.442695
        %v738 = vpow.pop %v737
        %v739 = vsel %vm572, %v738, 0.0
        %740 = vadd.xlane.f32.xlu0 %v739
        %v741 = vpop.xlane.xlu0 %740
        %v742 = vrcp.pop %v741
        %v743 = vmul.f32 %v738, %v742
        %v744 = vpack.c.bf16 %v743, %v743
        %745 = vrot.lane.b32.xlu0 %v568, 56
        %v746 = vpop.permute.xlu0 %745
        %v748 = vsel %vm572, %v744, 0
        %v751 = vsel %vm636, %v746, 0
        %753 = vmatprep.subr.bf16.mxu0 0
        %754 = vmatpush1.bf16.msra.mxu0 %v751
        %755 = vmatprep.subr.bf16.mxu0 0
        %756 = vmatpush1.bf16.msra.mxu0 0
        %757 = vmatprep.subr.bf16.mxu0 0
        %758 = vmatpush1.bf16.msra.mxu0 0
        %759 = vmatprep.subr.bf16.mxu0 0
        %760 = vmatpush1.bf16.msra.mxu0 0
        %761 = vmatprep.subr.bf16.mxu0 0
        %762 = vmatpush1.bf16.msra.mxu0 0
        %763 = vmatprep.subr.bf16.mxu0 0
        %764 = vmatpush1.bf16.msra.mxu0 0
        %765 = vmatprep.subr.bf16.mxu0 0
        %766 = vmatpush1.bf16.msra.mxu0 0
        %767 = vmatprep.subr.bf16.mxu0 0
        %768 = vmatpush1.bf16.msra.mxu0 0
        %769 = vmatprep.subr.bf16.mxu0 0
        %770 = vmatpush1.bf16.msra.mxu0 0
        %771 = vmatprep.subr.bf16.mxu0 0
        %772 = vmatpush1.bf16.msra.mxu0 0
        %773 = vmatprep.subr.bf16.mxu0 0
        %774 = vmatpush1.bf16.msra.mxu0 0
        %775 = vmatprep.subr.bf16.mxu0 0
        %776 = vmatpush1.bf16.msra.mxu0 0
        %777 = vmatprep.subr.bf16.mxu0 0
        %778 = vmatpush1.bf16.msra.mxu0 0
        %779 = vmatprep.subr.bf16.mxu0 0
        %780 = vmatpush1.bf16.msra.mxu0 0
        %781 = vmatprep.subr.bf16.mxu0 0
        %782 = vmatpush1.bf16.msra.mxu0 0
        %783 = vmatprep.subr.bf16.mxu0 0
        %784 = vmatpush1.bf16.msra.mxu0 0
        %785 = vmatprep.mubr.bf16.mxu0 0
        %786 = vmatmul.mubr.bf16.gmra.mrb[0].mxu0 %v748
        %v787 = vpop.f32.mrb[0].mxu0
        %v788 = vadd.f32 0.0, %v787
        %v789 = vpop.f32.mrb[0].mxu0
        %v790 = vpop.f32.mrb[0].mxu0
        %v791 = vpop.f32.mrb[0].mxu0
        %792 = vdwg.mxu0
        %v793 = vpack.c.bf16 %v788, %v788
        %v794 = vld [vmem:[%s5 + $0x4] sm:$0xf]
        %v796 = vsel %vm572, %v793, 0
        %v799 = vsel %vm636, %v794, 0
        %801 = vmatprep.subr.bf16.mxu0 0
        %802 = vmatpush1.bf16.msra.mxu0 %v799
        %803 = vmatprep.subr.bf16.mxu0 0
        %804 = vmatpush1.bf16.msra.mxu0 0
        %805 = vmatprep.subr.bf16.mxu0 0
        %806 = vmatpush1.bf16.msra.mxu0 0
        %807 = vmatprep.subr.bf16.mxu0 0
        %808 = vmatpush1.bf16.msra.mxu0 0
        %809 = vmatprep.subr.bf16.mxu0 0
        %810 = vmatpush1.bf16.msra.mxu0 0
        %811 = vmatprep.subr.bf16.mxu0 0
        %812 = vmatpush1.bf16.msra.mxu0 0
        %813 = vmatprep.subr.bf16.mxu0 0
        %814 = vmatpush1.bf16.msra.mxu0 0
        %815 = vmatprep.subr.bf16.mxu0 0
        %816 = vmatpush1.bf16.msra.mxu0 0
        %817 = vmatprep.subr.bf16.mxu0 0
        %818 = vmatpush1.bf16.msra.mxu0 0
        %819 = vmatprep.subr.bf16.mxu0 0
        %820 = vmatpush1.bf16.msra.mxu0 0
        %821 = vmatprep.subr.bf16.mxu0 0
        %822 = vmatpush1.bf16.msra.mxu0 0
        %823 = vmatprep.subr.bf16.mxu0 0
        %824 = vmatpush1.bf16.msra.mxu0 0
        %825 = vmatprep.subr.bf16.mxu0 0
        %826 = vmatpush1.bf16.msra.mxu0 0
        %827 = vmatprep.subr.bf16.mxu0 0
        %828 = vmatpush1.bf16.msra.mxu0 0
        %829 = vmatprep.subr.bf16.mxu0 0
        %830 = vmatpush1.bf16.msra.mxu0 0
        %831 = vmatprep.subr.bf16.mxu0 0
        %832 = vmatpush1.bf16.msra.mxu0 0
        %833 = vmatprep.mubr.bf16.mxu0 0
        %834 = vmatmul.mubr.bf16.gmra.mrb[0].mxu0 %v796
        %v835 = vpop.f32.mrb[0].mxu0
        %v836 = vadd.f32 0.0, %v835
        %v837 = vpop.f32.mrb[0].mxu0
        %v838 = vpop.f32.mrb[0].mxu0
        %v839 = vpop.f32.mrb[0].mxu0
        %840 = vdwg.mxu0
        %v842 = vsel %vm572, %v680, 0
        %v845 = vsel %vm636, %v681, 0
        %847 = vmatprep.subr.bf16.mxu0 0
        %848 = vmatpush1.bf16.msra.mxu0 %v845
        %849 = vmatprep.subr.bf16.mxu0 0
        %850 = vmatpush1.bf16.msra.mxu0 0
        %851 = vmatprep.subr.bf16.mxu0 0
        %852 = vmatpush1.bf16.msra.mxu0 0
        %853 = vmatprep.subr.bf16.mxu0 0
        %854 = vmatpush1.bf16.msra.mxu0 0
        %855 = vmatprep.subr.bf16.mxu0 0
        %856 = vmatpush1.bf16.msra.mxu0 0
        %857 = vmatprep.subr.bf16.mxu0 0
        %858 = vmatpush1.bf16.msra.mxu0 0
        %859 = vmatprep.subr.bf16.mxu0 0
        %860 = vmatpush1.bf16.msra.mxu0 0
        %861 = vmatprep.subr.bf16.mxu0 0
        %862 = vmatpush1.bf16.msra.mxu0 0
        %863 = vmatprep.subr.bf16.mxu0 0
        %864 = vmatpush1.bf16.msra.mxu0 0
        %865 = vmatprep.subr.bf16.mxu0 0
        %866 = vmatpush1.bf16.msra.mxu0 0
        %867 = vmatprep.subr.bf16.mxu0 0
        %868 = vmatpush1.bf16.msra.mxu0 0
        %869 = vmatprep.subr.bf16.mxu0 0
        %870 = vmatpush1.bf16.msra.mxu0 0
        %871 = vmatprep.subr.bf16.mxu0 0
        %872 = vmatpush1.bf16.msra.mxu0 0
        %873 = vmatprep.subr.bf16.mxu0 0
        %874 = vmatpush1.bf16.msra.mxu0 0
        %875 = vmatprep.subr.bf16.mxu0 0
        %876 = vmatpush1.bf16.msra.mxu0 0
        %877 = vmatprep.subr.bf16.mxu0 0
        %878 = vmatpush1.bf16.msra.mxu0 0
        %879 = vmatprep.mubr.bf16.mxu0 0
        %880 = vmatmul.mubr.bf16.gmra.mrb[0].mxu0 %v842
        %v881 = vpop.f32.mrb[0].mxu0
        %v882 = vadd.f32 %v836, %v881
        %v883 = vpop.f32.mrb[0].mxu0
        %v884 = vpop.f32.mrb[0].mxu0
        %v885 = vpop.f32.mrb[0].mxu0
        %886 = vdwg.mxu0
        %887 = vrot.lane.b32.xlu0 %v567, 112
        %v888 = vpop.permute.xlu0 %887
        %889 = vrot.lane.b32.xlu0 %v568, 80
        %v890 = vpop.permute.xlu0 %889
        %v892 = vsel %vm572, %v888, 0
        %v895 = vsel %vm572, %v890, 0
        %897 = vmatprep.subr.bf16.mxu0 0
        %898 = vmatpush1.bf16.xpose.msra.mxu0 %v895
        %899 = vmatprep.subr.bf16.mxu0 0
        %900 = vmatpush1.bf16.xpose.msra.mxu0 0
        %901 = vmatprep.subr.bf16.mxu0 0
        %902 = vmatpush1.bf16.xpose.msra.mxu0 0
        %903 = vmatprep.subr.bf16.mxu0 0
        %904 = vmatpush1.bf16.xpose.msra.mxu0 0
        %905 = vmatprep.subr.bf16.mxu0 0
        %906 = vmatpush1.bf16.xpose.msra.mxu0 0
        %907 = vmatprep.subr.bf16.mxu0 0
        %908 = vmatpush1.bf16.xpose.msra.mxu0 0
        %909 = vmatprep.subr.bf16.mxu0 0
        %910 = vmatpush1.bf16.xpose.msra.mxu0 0
        %911 = vmatprep.subr.bf16.mxu0 0
        %912 = vmatpush1.bf16.xpose.msra.mxu0 0
        %913 = vmatprep.subr.bf16.mxu0 0
        %914 = vmatpush1.bf16.xpose.msra.mxu0 0
        %915 = vmatprep.subr.bf16.mxu0 0
        %916 = vmatpush1.bf16.xpose.msra.mxu0 0
        %917 = vmatprep.subr.bf16.mxu0 0
        %918 = vmatpush1.bf16.xpose.msra.mxu0 0
        %919 = vmatprep.subr.bf16.mxu0 0
        %920 = vmatpush1.bf16.xpose.msra.mxu0 0
        %921 = vmatprep.subr.bf16.mxu0 0
        %922 = vmatpush1.bf16.xpose.msra.mxu0 0
        %923 = vmatprep.subr.bf16.mxu0 0
        %924 = vmatpush1.bf16.xpose.msra.mxu0 0
        %925 = vmatprep.subr.bf16.mxu0 0
        %926 = vmatpush1.bf16.xpose.msra.mxu0 0
        %927 = vmatprep.subr.bf16.mxu0 0
        %928 = vmatpush1.bf16.xpose.msra.mxu0 0
        %929 = vmatprep.mubr.bf16.mxu0 0
        %930 = vmatmul.mubr.bf16.gmra.mrb[0].mxu0 %v892
        %v931 = vpop.f32.mrb[0].mxu0
        %v932 = vadd.f32 %v565, %v931
        %v933 = vpop.f32.mrb[0].mxu0
        %v934 = vpop.f32.mrb[0].mxu0
        %v935 = vpop.f32.mrb[0].mxu0
        %936 = vdwg.mxu0
        %v937 = vsel %vm572, %v932, -inf
        %938 = vmax.xlane.f32.xlu0 %v937
        %v939 = vpop.xlane.xlu0 %938
        %v940 = vsub.f32 %v932, %v939
        %v941 = vmul.f32 %v940, 1.442695
        %v942 = vpow.pop %v941
        %v943 = vsel %vm572, %v942, 0.0
        %944 = vadd.xlane.f32.xlu0 %v943
        %v945 = vpop.xlane.xlu0 %944
        %v946 = vrcp.pop %v945
        %v947 = vmul.f32 %v942, %v946
        %v948 = vpack.c.bf16 %v947, %v947
        %949 = vrot.lane.b32.xlu0 %v568, 48
        %v950 = vpop.permute.xlu0 %949
        %v952 = vsel %vm572, %v948, 0
        %v955 = vsel %vm636, %v950, 0
        %957 = vmatprep.subr.bf16.mxu0 0
        %958 = vmatpush1.bf16.msra.mxu0 %v955
        %959 = vmatprep.subr.bf16.mxu0 0
        %960 = vmatpush1.bf16.msra.mxu0 0
        %961 = vmatprep.subr.bf16.mxu0 0
        %962 = vmatpush1.bf16.msra.mxu0 0
        %963 = vmatprep.subr.bf16.mxu0 0
        %964 = vmatpush1.bf16.msra.mxu0 0
        %965 = vmatprep.subr.bf16.mxu0 0
        %966 = vmatpush1.bf16.msra.mxu0 0
        %967 = vmatprep.subr.bf16.mxu0 0
        %968 = vmatpush1.bf16.msra.mxu0 0
        %969 = vmatprep.subr.bf16.mxu0 0
        %970 = vmatpush1.bf16.msra.mxu0 0
        %971 = vmatprep.subr.bf16.mxu0 0
        %972 = vmatpush1.bf16.msra.mxu0 0
        %973 = vmatprep.subr.bf16.mxu0 0
        %974 = vmatpush1.bf16.msra.mxu0 0
        %975 = vmatprep.subr.bf16.mxu0 0
        %976 = vmatpush1.bf16.msra.mxu0 0
        %977 = vmatprep.subr.bf16.mxu0 0
        %978 = vmatpush1.bf16.msra.mxu0 0
        %979 = vmatprep.subr.bf16.mxu0 0
        %980 = vmatpush1.bf16.msra.mxu0 0
        %981 = vmatprep.subr.bf16.mxu0 0
        %982 = vmatpush1.bf16.msra.mxu0 0
        %983 = vmatprep.subr.bf16.mxu0 0
        %984 = vmatpush1.bf16.msra.mxu0 0
        %985 = vmatprep.subr.bf16.mxu0 0
        %986 = vmatpush1.bf16.msra.mxu0 0
        %987 = vmatprep.subr.bf16.mxu0 0
        %988 = vmatpush1.bf16.msra.mxu0 0
        %989 = vmatprep.mubr.bf16.mxu0 0
        %990 = vmatmul.mubr.bf16.gmra.mrb[0].mxu0 %v952
        %v991 = vpop.f32.mrb[0].mxu0
        %v992 = vadd.f32 0.0, %v991
        %v993 = vpop.f32.mrb[0].mxu0
        %v994 = vpop.f32.mrb[0].mxu0
        %v995 = vpop.f32.mrb[0].mxu0
        %996 = vdwg.mxu0
        %v997 = vpack.c.bf16 %v992, %v992
        %v998 = vld [vmem:[%s5 + $0x8] sm:$0xf]
        %v1000 = vsel %vm572, %v997, 0
        %v1003 = vsel %vm636, %v998, 0
        %1005 = vmatprep.subr.bf16.mxu0 0
        %1006 = vmatpush1.bf16.msra.mxu0 %v1003
        %1007 = vmatprep.subr.bf16.mxu0 0
        %1008 = vmatpush1.bf16.msra.mxu0 0
        %1009 = vmatprep.subr.bf16.mxu0 0
        %1010 = vmatpush1.bf16.msra.mxu0 0
        %1011 = vmatprep.subr.bf16.mxu0 0
        %1012 = vmatpush1.bf16.msra.mxu0 0
        %1013 = vmatprep.subr.bf16.mxu0 0
        %1014 = vmatpush1.bf16.msra.mxu0 0
        %1015 = vmatprep.subr.bf16.mxu0 0
        %1016 = vmatpush1.bf16.msra.mxu0 0
        %1017 = vmatprep.subr.bf16.mxu0 0
        %1018 = vmatpush1.bf16.msra.mxu0 0
        %1019 = vmatprep.subr.bf16.mxu0 0
        %1020 = vmatpush1.bf16.msra.mxu0 0
        %1021 = vmatprep.subr.bf16.mxu0 0
        %1022 = vmatpush1.bf16.msra.mxu0 0
        %1023 = vmatprep.subr.bf16.mxu0 0
        %1024 = vmatpush1.bf16.msra.mxu0 0
        %1025 = vmatprep.subr.bf16.mxu0 0
        %1026 = vmatpush1.bf16.msra.mxu0 0
        %1027 = vmatprep.subr.bf16.mxu0 0
        %1028 = vmatpush1.bf16.msra.mxu0 0
        %1029 = vmatprep.subr.bf16.mxu0 0
        %1030 = vmatpush1.bf16.msra.mxu0 0
        %1031 = vmatprep.subr.bf16.mxu0 0
        %1032 = vmatpush1.bf16.msra.mxu0 0
        %1033 = vmatprep.subr.bf16.mxu0 0
        %1034 = vmatpush1.bf16.msra.mxu0 0
        %1035 = vmatprep.subr.bf16.mxu0 0
        %1036 = vmatpush1.bf16.msra.mxu0 0
        %1037 = vmatprep.mubr.bf16.mxu0 0
        %1038 = vmatmul.mubr.bf16.gmra.mrb[0].mxu0 %v1000
        %v1039 = vpop.f32.mrb[0].mxu0
        %v1040 = vadd.f32 0.0, %v1039
        %v1041 = vpop.f32.mrb[0].mxu0
        %v1042 = vpop.f32.mrb[0].mxu0
        %v1043 = vpop.f32.mrb[0].mxu0
        %1044 = vdwg.mxu0
        %v1045 = vadd.f32 %v882, %v1040
        %1046 = vrot.lane.b32.xlu0 %v567, 104
        %v1047 = vpop.permute.xlu0 %1046
        %1048 = vrot.lane.b32.xlu0 %v568, 72
        %v1049 = vpop.permute.xlu0 %1048
        %v1051 = vsel %vm572, %v1047, 0
        %v1054 = vsel %vm572, %v1049, 0
        %1056 = vmatprep.subr.bf16.mxu0 0
        %1057 = vmatpush1.bf16.xpose.msra.mxu0 %v1054
        %1058 = vmatprep.subr.bf16.mxu0 0
        %1059 = vmatpush1.bf16.xpose.msra.mxu0 0
        %1060 = vmatprep.subr.bf16.mxu0 0
        %1061 = vmatpush1.bf16.xpose.msra.mxu0 0
        %1062 = vmatprep.subr.bf16.mxu0 0
        %1063 = vmatpush1.bf16.xpose.msra.mxu0 0
        %1064 = vmatprep.subr.bf16.mxu0 0
        %1065 = vmatpush1.bf16.xpose.msra.mxu0 0
        %1066 = vmatprep.subr.bf16.mxu0 0
        %1067 = vmatpush1.bf16.xpose.msra.mxu0 0
        %1068 = vmatprep.subr.bf16.mxu0 0
        %1069 = vmatpush1.bf16.xpose.msra.mxu0 0
        %1070 = vmatprep.subr.bf16.mxu0 0
        %1071 = vmatpush1.bf16.xpose.msra.mxu0 0
        %1072 = vmatprep.subr.bf16.mxu0 0
        %1073 = vmatpush1.bf16.xpose.msra.mxu0 0
        %1074 = vmatprep.subr.bf16.mxu0 0
        %1075 = vmatpush1.bf16.xpose.msra.mxu0 0
        %1076 = vmatprep.subr.bf16.mxu0 0
        %1077 = vmatpush1.bf16.xpose.msra.mxu0 0
        %1078 = vmatprep.subr.bf16.mxu0 0
        %1079 = vmatpush1.bf16.xpose.msra.mxu0 0
        %1080 = vmatprep.subr.bf16.mxu0 0
        %1081 = vmatpush1.bf16.xpose.msra.mxu0 0
        %1082 = vmatprep.subr.bf16.mxu0 0
        %1083 = vmatpush1.bf16.xpose.msra.mxu0 0
        %1084 = vmatprep.subr.bf16.mxu0 0
        %1085 = vmatpush1.bf16.xpose.msra.mxu0 0
        %1086 = vmatprep.subr.bf16.mxu0 0
        %1087 = vmatpush1.bf16.xpose.msra.mxu0 0
        %1088 = vmatprep.mubr.bf16.mxu0 0
        %1089 = vmatmul.mubr.bf16.gmra.mrb[0].mxu0 %v1051
        %v1090 = vpop.f32.mrb[0].mxu0
        %v1091 = vadd.f32 %v565, %v1090
        %v1092 = vpop.f32.mrb[0].mxu0
        %v1093 = vpop.f32.mrb[0].mxu0
        %v1094 = vpop.f32.mrb[0].mxu0
        %1095 = vdwg.mxu0
        %v1096 = vsel %vm572, %v1091, -inf
        %1097 = vmax.xlane.f32.xlu0 %v1096
        %v1098 = vpop.xlane.xlu0 %1097
        %v1099 = vsub.f32 %v1091, %v1098
        %v1100 = vmul.f32 %v1099, 1.442695
        %v1101 = vpow.pop %v1100
        %v1102 = vsel %vm572, %v1101, 0.0
        %1103 = vadd.xlane.f32.xlu0 %v1102
        %v1104 = vpop.xlane.xlu0 %1103
        %v1105 = vrcp.pop %v1104
        %v1106 = vmul.f32 %v1101, %v1105
        %v1107 = vpack.c.bf16 %v1106, %v1106
        %1108 = vrot.lane.b32.xlu0 %v568, 40
        %v1109 = vpop.permute.xlu0 %1108
        %v1111 = vsel %vm572, %v1107, 0
        %v1114 = vsel %vm636, %v1109, 0
        %1116 = vmatprep.subr.bf16.mxu0 0
        %1117 = vmatpush1.bf16.msra.mxu0 %v1114
        %1118 = vmatprep.subr.bf16.mxu0 0
        %1119 = vmatpush1.bf16.msra.mxu0 0
        %1120 = vmatprep.subr.bf16.mxu0 0
        %1121 = vmatpush1.bf16.msra.mxu0 0
        %1122 = vmatprep.subr.bf16.mxu0 0
        %1123 = vmatpush1.bf16.msra.mxu0 0
        %1124 = vmatprep.subr.bf16.mxu0 0
        %1125 = vmatpush1.bf16.msra.mxu0 0
        %1126 = vmatprep.subr.bf16.mxu0 0
        %1127 = vmatpush1.bf16.msra.mxu0 0
        %1128 = vmatprep.subr.bf16.mxu0 0
        %1129 = vmatpush1.bf16.msra.mxu0 0
        %1130 = vmatprep.subr.bf16.mxu0 0
        %1131 = vmatpush1.bf16.msra.mxu0 0
        %1132 = vmatprep.subr.bf16.mxu0 0
        %1133 = vmatpush1.bf16.msra.mxu0 0
        %1134 = vmatprep.subr.bf16.mxu0 0
        %1135 = vmatpush1.bf16.msra.mxu0 0
        %1136 = vmatprep.subr.bf16.mxu0 0
        %1137 = vmatpush1.bf16.msra.mxu0 0
        %1138 = vmatprep.subr.bf16.mxu0 0
        %1139 = vmatpush1.bf16.msra.mxu0 0
        %1140 = vmatprep.subr.bf16.mxu0 0
        %1141 = vmatpush1.bf16.msra.mxu0 0
        %1142 = vmatprep.subr.bf16.mxu0 0
        %1143 = vmatpush1.bf16.msra.mxu0 0
        %1144 = vmatprep.subr.bf16.mxu0 0
        %1145 = vmatpush1.bf16.msra.mxu0 0
        %1146 = vmatprep.subr.bf16.mxu0 0
        %1147 = vmatpush1.bf16.msra.mxu0 0
        %1148 = vmatprep.mubr.bf16.mxu0 0
        %1149 = vmatmul.mubr.bf16.gmra.mrb[0].mxu0 %v1111
        %v1150 = vpop.f32.mrb[0].mxu0
        %v1151 = vadd.f32 0.0, %v1150
        %v1152 = vpop.f32.mrb[0].mxu0
        %v1153 = vpop.f32.mrb[0].mxu0
        %v1154 = vpop.f32.mrb[0].mxu0
        %1155 = vdwg.mxu0
        %v1156 = vpack.c.bf16 %v1151, %v1151
        %v1157 = vld [vmem:[%s5 + $0xc] sm:$0xf]
        %v1159 = vsel %vm572, %v1156, 0
        %v1162 = vsel %vm636, %v1157, 0
        %1164 = vmatprep.subr.bf16.mxu0 0
        %1165 = vmatpush1.bf16.msra.mxu0 %v1162
        %1166 = vmatprep.subr.bf16.mxu0 0
        %1167 = vmatpush1.bf16.msra.mxu0 0
        %1168 = vmatprep.subr.bf16.mxu0 0
        %1169 = vmatpush1.bf16.msra.mxu0 0
        %1170 = vmatprep.subr.bf16.mxu0 0
        %1171 = vmatpush1.bf16.msra.mxu0 0
        %1172 = vmatprep.subr.bf16.mxu0 0
        %1173 = vmatpush1.bf16.msra.mxu0 0
        %1174 = vmatprep.subr.bf16.mxu0 0
        %1175 = vmatpush1.bf16.msra.mxu0 0
        %1176 = vmatprep.subr.bf16.mxu0 0
        %1177 = vmatpush1.bf16.msra.mxu0 0
        %1178 = vmatprep.subr.bf16.mxu0 0
        %1179 = vmatpush1.bf16.msra.mxu0 0
        %1180 = vmatprep.subr.bf16.mxu0 0
        %1181 = vmatpush1.bf16.msra.mxu0 0
        %1182 = vmatprep.subr.bf16.mxu0 0
        %1183 = vmatpush1.bf16.msra.mxu0 0
        %1184 = vmatprep.subr.bf16.mxu0 0
        %1185 = vmatpush1.bf16.msra.mxu0 0
        %1186 = vmatprep.subr.bf16.mxu0 0
        %1187 = vmatpush1.bf16.msra.mxu0 0
        %1188 = vmatprep.subr.bf16.mxu0 0
        %1189 = vmatpush1.bf16.msra.mxu0 0
        %1190 = vmatprep.subr.bf16.mxu0 0
        %1191 = vmatpush1.bf16.msra.mxu0 0
        %1192 = vmatprep.subr.bf16.mxu0 0
        %1193 = vmatpush1.bf16.msra.mxu0 0
        %1194 = vmatprep.subr.bf16.mxu0 0
        %1195 = vmatpush1.bf16.msra.mxu0 0
        %1196 = vmatprep.mubr.bf16.mxu0 0
        %1197 = vmatmul.mubr.bf16.gmra.mrb[0].mxu0 %v1159
        %v1198 = vpop.f32.mrb[0].mxu0
        %v1199 = vadd.f32 0.0, %v1198
        %v1200 = vpop.f32.mrb[0].mxu0
        %v1201 = vpop.f32.mrb[0].mxu0
        %v1202 = vpop.f32.mrb[0].mxu0
        %1203 = vdwg.mxu0
        %v1204 = vadd.f32 %v1045, %v1199
        %v1205 = vmul.f32 %v562, 0.0009765625
        %v1206 = vpack.c.bf16 %v1205, %v1205
        %v1207 = vpack.c.bf16 %v562, %v562
        %1209 = vrot.lane.b32.xlu0 %v1207, 96
        %v1210 = vpop.permute.xlu0 %1209
        %v1212 = vsel %vm572, %v1206, 0
        %v1215 = vsel %vm572, %v1210, 0
        %1217 = vmatprep.subr.bf16.mxu0 0
        %1218 = vmatpush1.bf16.xpose.msra.mxu0 %v1215
        %1219 = vmatprep.subr.bf16.mxu0 0
        %1220 = vmatpush1.bf16.xpose.msra.mxu0 0
        %1221 = vmatprep.subr.bf16.mxu0 0
        %1222 = vmatpush1.bf16.xpose.msra.mxu0 0
        %1223 = vmatprep.subr.bf16.mxu0 0
        %1224 = vmatpush1.bf16.xpose.msra.mxu0 0
        %1225 = vmatprep.subr.bf16.mxu0 0
        %1226 = vmatpush1.bf16.xpose.msra.mxu0 0
        %1227 = vmatprep.subr.bf16.mxu0 0
        %1228 = vmatpush1.bf16.xpose.msra.mxu0 0
        %1229 = vmatprep.subr.bf16.mxu0 0
        %1230 = vmatpush1.bf16.xpose.msra.mxu0 0
        %1231 = vmatprep.subr.bf16.mxu0 0
        %1232 = vmatpush1.bf16.xpose.msra.mxu0 0
        %1233 = vmatprep.subr.bf16.mxu0 0
        %1234 = vmatpush1.bf16.xpose.msra.mxu0 0
        %1235 = vmatprep.subr.bf16.mxu0 0
        %1236 = vmatpush1.bf16.xpose.msra.mxu0 0
        %1237 = vmatprep.subr.bf16.mxu0 0
        %1238 = vmatpush1.bf16.xpose.msra.mxu0 0
        %1239 = vmatprep.subr.bf16.mxu0 0
        %1240 = vmatpush1.bf16.xpose.msra.mxu0 0
        %1241 = vmatprep.subr.bf16.mxu0 0
        %1242 = vmatpush1.bf16.xpose.msra.mxu0 0
        %1243 = vmatprep.subr.bf16.mxu0 0
        %1244 = vmatpush1.bf16.xpose.msra.mxu0 0
        %1245 = vmatprep.subr.bf16.mxu0 0
        %1246 = vmatpush1.bf16.xpose.msra.mxu0 0
        %1247 = vmatprep.subr.bf16.mxu0 0
        %1248 = vmatpush1.bf16.xpose.msra.mxu0 0
        %1249 = vmatprep.mubr.bf16.mxu0 0
        %1250 = vmatmul.mubr.bf16.gmra.mrb[0].mxu0 %v1212
        %v1251 = vpop.f32.mrb[0].mxu0
        %v1252 = vadd.f32 %v565, %v1251
        %v1253 = vpop.f32.mrb[0].mxu0
        %v1254 = vpop.f32.mrb[0].mxu0
        %v1255 = vpop.f32.mrb[0].mxu0
        %1256 = vdwg.mxu0
        %v1257 = vsel %vm572, %v1252, -inf
        %1258 = vmax.xlane.f32.xlu0 %v1257
        %v1259 = vpop.xlane.xlu0 %1258
        %v1260 = vsub.f32 %v1252, %v1259
        %v1261 = vmul.f32 %v1260, 1.442695
        %v1262 = vpow.pop %v1261
        %v1263 = vsel %vm572, %v1262, 0.0
        %1264 = vadd.xlane.f32.xlu0 %v1263
        %v1265 = vpop.xlane.xlu0 %1264
        %v1266 = vrcp.pop %v1265
        %v1267 = vmul.f32 %v1262, %v1266
        %v1268 = vpack.c.bf16 %v1267, %v1267
        %1269 = vrot.lane.b32.xlu0 %v1207, 64
        %v1270 = vpop.permute.xlu0 %1269
        %v1272 = vsel %vm572, %v1268, 0
        %v1275 = vsel %vm636, %v1270, 0
        %1277 = vmatprep.subr.bf16.mxu0 0
        %1278 = vmatpush1.bf16.msra.mxu0 %v1275
        %1279 = vmatprep.subr.bf16.mxu0 0
        %1280 = vmatpush1.bf16.msra.mxu0 0
        %1281 = vmatprep.subr.bf16.mxu0 0
        %1282 = vmatpush1.bf16.msra.mxu0 0
        %1283 = vmatprep.subr.bf16.mxu0 0
        %1284 = vmatpush1.bf16.msra.mxu0 0
        %1285 = vmatprep.subr.bf16.mxu0 0
        %1286 = vmatpush1.bf16.msra.mxu0 0
        %1287 = vmatprep.subr.bf16.mxu0 0
        %1288 = vmatpush1.bf16.msra.mxu0 0
        %1289 = vmatprep.subr.bf16.mxu0 0
        %1290 = vmatpush1.bf16.msra.mxu0 0
        %1291 = vmatprep.subr.bf16.mxu0 0
        %1292 = vmatpush1.bf16.msra.mxu0 0
        %1293 = vmatprep.subr.bf16.mxu0 0
        %1294 = vmatpush1.bf16.msra.mxu0 0
        %1295 = vmatprep.subr.bf16.mxu0 0
        %1296 = vmatpush1.bf16.msra.mxu0 0
        %1297 = vmatprep.subr.bf16.mxu0 0
        %1298 = vmatpush1.bf16.msra.mxu0 0
        %1299 = vmatprep.subr.bf16.mxu0 0
        %1300 = vmatpush1.bf16.msra.mxu0 0
        %1301 = vmatprep.subr.bf16.mxu0 0
        %1302 = vmatpush1.bf16.msra.mxu0 0
        %1303 = vmatprep.subr.bf16.mxu0 0
        %1304 = vmatpush1.bf16.msra.mxu0 0
        %1305 = vmatprep.subr.bf16.mxu0 0
        %1306 = vmatpush1.bf16.msra.mxu0 0
        %1307 = vmatprep.subr.bf16.mxu0 0
        %1308 = vmatpush1.bf16.msra.mxu0 0
        %1309 = vmatprep.mubr.bf16.mxu0 0
        %1310 = vmatmul.mubr.bf16.gmra.mrb[0].mxu0 %v1272
        %v1311 = vpop.f32.mrb[0].mxu0
        %v1312 = vadd.f32 0.0, %v1311
        %v1313 = vpop.f32.mrb[0].mxu0
        %v1314 = vpop.f32.mrb[0].mxu0
        %v1315 = vpop.f32.mrb[0].mxu0
        %1316 = vdwg.mxu0
        %v1317 = vpack.c.bf16 %v1312, %v1312
        %1319 = vrot.lane.b32.xlu0 %v1206, 120
        %v1320 = vpop.permute.xlu0 %1319
        %1321 = vrot.lane.b32.xlu0 %v1207, 88
        %v1322 = vpop.permute.xlu0 %1321
        %v1324 = vsel %vm572, %v1320, 0
        %v1327 = vsel %vm572, %v1322, 0
        %1329 = vmatprep.subr.bf16.mxu0 0
        %1330 = vmatpush1.bf16.xpose.msra.mxu0 %v1327
        %1331 = vmatprep.subr.bf16.mxu0 0
        %1332 = vmatpush1.bf16.xpose.msra.mxu0 0
        %1333 = vmatprep.subr.bf16.mxu0 0
        %1334 = vmatpush1.bf16.xpose.msra.mxu0 0
        %1335 = vmatprep.subr.bf16.mxu0 0
        %1336 = vmatpush1.bf16.xpose.msra.mxu0 0
        %1337 = vmatprep.subr.bf16.mxu0 0
        %1338 = vmatpush1.bf16.xpose.msra.mxu0 0
        %1339 = vmatprep.subr.bf16.mxu0 0
        %1340 = vmatpush1.bf16.xpose.msra.mxu0 0
        %1341 = vmatprep.subr.bf16.mxu0 0
        %1342 = vmatpush1.bf16.xpose.msra.mxu0 0
        %1343 = vmatprep.subr.bf16.mxu0 0
        %1344 = vmatpush1.bf16.xpose.msra.mxu0 0
        %1345 = vmatprep.subr.bf16.mxu0 0
        %1346 = vmatpush1.bf16.xpose.msra.mxu0 0
        %1347 = vmatprep.subr.bf16.mxu0 0
        %1348 = vmatpush1.bf16.xpose.msra.mxu0 0
        %1349 = vmatprep.subr.bf16.mxu0 0
        %1350 = vmatpush1.bf16.xpose.msra.mxu0 0
        %1351 = vmatprep.subr.bf16.mxu0 0
        %1352 = vmatpush1.bf16.xpose.msra.mxu0 0
        %1353 = vmatprep.subr.bf16.mxu0 0
        %1354 = vmatpush1.bf16.xpose.msra.mxu0 0
        %1355 = vmatprep.subr.bf16.mxu0 0
        %1356 = vmatpush1.bf16.xpose.msra.mxu0 0
        %1357 = vmatprep.subr.bf16.mxu0 0
        %1358 = vmatpush1.bf16.xpose.msra.mxu0 0
        %1359 = vmatprep.subr.bf16.mxu0 0
        %1360 = vmatpush1.bf16.xpose.msra.mxu0 0
        %1361 = vmatprep.mubr.bf16.mxu0 0
        %1362 = vmatmul.mubr.bf16.gmra.mrb[0].mxu0 %v1324
        %v1363 = vpop.f32.mrb[0].mxu0
        %v1364 = vadd.f32 %v565, %v1363
        %v1365 = vpop.f32.mrb[0].mxu0
        %v1366 = vpop.f32.mrb[0].mxu0
        %v1367 = vpop.f32.mrb[0].mxu0
        %1368 = vdwg.mxu0
        %v1369 = vsel %vm572, %v1364, -inf
        %1370 = vmax.xlane.f32.xlu0 %v1369
        %v1371 = vpop.xlane.xlu0 %1370
        %v1372 = vsub.f32 %v1364, %v1371
        %v1373 = vmul.f32 %v1372, 1.442695
        %v1374 = vpow.pop %v1373
        %v1375 = vsel %vm572, %v1374, 0.0
        %1376 = vadd.xlane.f32.xlu0 %v1375
        %v1377 = vpop.xlane.xlu0 %1376
        %v1378 = vrcp.pop %v1377
        %v1379 = vmul.f32 %v1374, %v1378
        %v1380 = vpack.c.bf16 %v1379, %v1379
        %1381 = vrot.lane.b32.xlu0 %v1207, 56
        %v1382 = vpop.permute.xlu0 %1381
        %v1384 = vsel %vm572, %v1380, 0
        %v1387 = vsel %vm636, %v1382, 0
        %1389 = vmatprep.subr.bf16.mxu0 0
        %1390 = vmatpush1.bf16.msra.mxu0 %v1387
        %1391 = vmatprep.subr.bf16.mxu0 0
        %1392 = vmatpush1.bf16.msra.mxu0 0
        %1393 = vmatprep.subr.bf16.mxu0 0
        %1394 = vmatpush1.bf16.msra.mxu0 0
        %1395 = vmatprep.subr.bf16.mxu0 0
        %1396 = vmatpush1.bf16.msra.mxu0 0
        %1397 = vmatprep.subr.bf16.mxu0 0
        %1398 = vmatpush1.bf16.msra.mxu0 0
        %1399 = vmatprep.subr.bf16.mxu0 0
        %1400 = vmatpush1.bf16.msra.mxu0 0
        %1401 = vmatprep.subr.bf16.mxu0 0
        %1402 = vmatpush1.bf16.msra.mxu0 0
        %1403 = vmatprep.subr.bf16.mxu0 0
        %1404 = vmatpush1.bf16.msra.mxu0 0
        %1405 = vmatprep.subr.bf16.mxu0 0
        %1406 = vmatpush1.bf16.msra.mxu0 0
        %1407 = vmatprep.subr.bf16.mxu0 0
        %1408 = vmatpush1.bf16.msra.mxu0 0
        %1409 = vmatprep.subr.bf16.mxu0 0
        %1410 = vmatpush1.bf16.msra.mxu0 0
        %1411 = vmatprep.subr.bf16.mxu0 0
        %1412 = vmatpush1.bf16.msra.mxu0 0
        %1413 = vmatprep.subr.bf16.mxu0 0
        %1414 = vmatpush1.bf16.msra.mxu0 0
        %1415 = vmatprep.subr.bf16.mxu0 0
        %1416 = vmatpush1.bf16.msra.mxu0 0
        %1417 = vmatprep.subr.bf16.mxu0 0
        %1418 = vmatpush1.bf16.msra.mxu0 0
        %1419 = vmatprep.subr.bf16.mxu0 0
        %1420 = vmatpush1.bf16.msra.mxu0 0
        %1421 = vmatprep.mubr.bf16.mxu0 0
        %1422 = vmatmul.mubr.bf16.gmra.mrb[0].mxu0 %v1384
        %v1423 = vpop.f32.mrb[0].mxu0
        %v1424 = vadd.f32 0.0, %v1423
        %v1425 = vpop.f32.mrb[0].mxu0
        %v1426 = vpop.f32.mrb[0].mxu0
        %v1427 = vpop.f32.mrb[0].mxu0
        %1428 = vdwg.mxu0
        %v1429 = vpack.c.bf16 %v1424, %v1424
        %v1431 = vsel %vm572, %v1429, 0
        %1433 = vmatprep.subr.bf16.mxu0 0
        %1434 = vmatpush1.bf16.msra.mxu0 %v799
        %1435 = vmatprep.subr.bf16.mxu0 0
        %1436 = vmatpush1.bf16.msra.mxu0 0
        %1437 = vmatprep.subr.bf16.mxu0 0
        %1438 = vmatpush1.bf16.msra.mxu0 0
        %1439 = vmatprep.subr.bf16.mxu0 0
        %1440 = vmatpush1.bf16.msra.mxu0 0
        %1441 = vmatprep.subr.bf16.mxu0 0
        %1442 = vmatpush1.bf16.msra.mxu0 0
        %1443 = vmatprep.subr.bf16.mxu0 0
        %1444 = vmatpush1.bf16.msra.mxu0 0
        %1445 = vmatprep.subr.bf16.mxu0 0
        %1446 = vmatpush1.bf16.msra.mxu0 0
        %1447 = vmatprep.subr.bf16.mxu0 0
        %1448 = vmatpush1.bf16.msra.mxu0 0
        %1449 = vmatprep.subr.bf16.mxu0 0
        %1450 = vmatpush1.bf16.msra.mxu0 0
        %1451 = vmatprep.subr.bf16.mxu0 0
        %1452 = vmatpush1.bf16.msra.mxu0 0
        %1453 = vmatprep.subr.bf16.mxu0 0
        %1454 = vmatpush1.bf16.msra.mxu0 0
        %1455 = vmatprep.subr.bf16.mxu0 0
        %1456 = vmatpush1.bf16.msra.mxu0 0
        %1457 = vmatprep.subr.bf16.mxu0 0
        %1458 = vmatpush1.bf16.msra.mxu0 0
        %1459 = vmatprep.subr.bf16.mxu0 0
        %1460 = vmatpush1.bf16.msra.mxu0 0
        %1461 = vmatprep.subr.bf16.mxu0 0
        %1462 = vmatpush1.bf16.msra.mxu0 0
        %1463 = vmatprep.subr.bf16.mxu0 0
        %1464 = vmatpush1.bf16.msra.mxu0 0
        %1465 = vmatprep.mubr.bf16.mxu0 0
        %1466 = vmatmul.mubr.bf16.gmra.mrb[0].mxu0 %v1431
        %v1467 = vpop.f32.mrb[0].mxu0
        %v1468 = vadd.f32 0.0, %v1467
        %v1469 = vpop.f32.mrb[0].mxu0
        %v1470 = vpop.f32.mrb[0].mxu0
        %v1471 = vpop.f32.mrb[0].mxu0
        %1472 = vdwg.mxu0
        %v1474 = vsel %vm572, %v1317, 0
        %1476 = vmatprep.subr.bf16.mxu0 0
        %1477 = vmatpush1.bf16.msra.mxu0 %v845
        %1478 = vmatprep.subr.bf16.mxu0 0
        %1479 = vmatpush1.bf16.msra.mxu0 0
        %1480 = vmatprep.subr.bf16.mxu0 0
        %1481 = vmatpush1.bf16.msra.mxu0 0
        %1482 = vmatprep.subr.bf16.mxu0 0
        %1483 = vmatpush1.bf16.msra.mxu0 0
        %1484 = vmatprep.subr.bf16.mxu0 0
        %1485 = vmatpush1.bf16.msra.mxu0 0
        %1486 = vmatprep.subr.bf16.mxu0 0
        %1487 = vmatpush1.bf16.msra.mxu0 0
        %1488 = vmatprep.subr.bf16.mxu0 0
        %1489 = vmatpush1.bf16.msra.mxu0 0
        %1490 = vmatprep.subr.bf16.mxu0 0
        %1491 = vmatpush1.bf16.msra.mxu0 0
        %1492 = vmatprep.subr.bf16.mxu0 0
        %1493 = vmatpush1.bf16.msra.mxu0 0
        %1494 = vmatprep.subr.bf16.mxu0 0
        %1495 = vmatpush1.bf16.msra.mxu0 0
        %1496 = vmatprep.subr.bf16.mxu0 0
        %1497 = vmatpush1.bf16.msra.mxu0 0
        %1498 = vmatprep.subr.bf16.mxu0 0
        %1499 = vmatpush1.bf16.msra.mxu0 0
        %1500 = vmatprep.subr.bf16.mxu0 0
        %1501 = vmatpush1.bf16.msra.mxu0 0
        %1502 = vmatprep.subr.bf16.mxu0 0
        %1503 = vmatpush1.bf16.msra.mxu0 0
        %1504 = vmatprep.subr.bf16.mxu0 0
        %1505 = vmatpush1.bf16.msra.mxu0 0
        %1506 = vmatprep.subr.bf16.mxu0 0
        %1507 = vmatpush1.bf16.msra.mxu0 0
        %1508 = vmatprep.mubr.bf16.mxu0 0
        %1509 = vmatmul.mubr.bf16.gmra.mrb[0].mxu0 %v1474
        %v1510 = vpop.f32.mrb[0].mxu0
        %v1511 = vadd.f32 %v1468, %v1510
        %v1512 = vpop.f32.mrb[0].mxu0
        %v1513 = vpop.f32.mrb[0].mxu0
        %v1514 = vpop.f32.mrb[0].mxu0
        %1515 = vdwg.mxu0
        %1516 = vrot.lane.b32.xlu0 %v1206, 112
        %v1517 = vpop.permute.xlu0 %1516
        %1518 = vrot.lane.b32.xlu0 %v1207, 80
        %v1519 = vpop.permute.xlu0 %1518
        %v1521 = vsel %vm572, %v1517, 0
        %v1524 = vsel %vm572, %v1519, 0
        %1526 = vmatprep.subr.bf16.mxu0 0
        %1527 = vmatpush1.bf16.xpose.msra.mxu0 %v1524
        %1528 = vmatprep.subr.bf16.mxu0 0
        %1529 = vmatpush1.bf16.xpose.msra.mxu0 0
        %1530 = vmatprep.subr.bf16.mxu0 0
        %1531 = vmatpush1.bf16.xpose.msra.mxu0 0
        %1532 = vmatprep.subr.bf16.mxu0 0
        %1533 = vmatpush1.bf16.xpose.msra.mxu0 0
        %1534 = vmatprep.subr.bf16.mxu0 0
        %1535 = vmatpush1.bf16.xpose.msra.mxu0 0
        %1536 = vmatprep.subr.bf16.mxu0 0
        %1537 = vmatpush1.bf16.xpose.msra.mxu0 0
        %1538 = vmatprep.subr.bf16.mxu0 0
        %1539 = vmatpush1.bf16.xpose.msra.mxu0 0
        %1540 = vmatprep.subr.bf16.mxu0 0
        %1541 = vmatpush1.bf16.xpose.msra.mxu0 0
        %1542 = vmatprep.subr.bf16.mxu0 0
        %1543 = vmatpush1.bf16.xpose.msra.mxu0 0
        %1544 = vmatprep.subr.bf16.mxu0 0
        %1545 = vmatpush1.bf16.xpose.msra.mxu0 0
        %1546 = vmatprep.subr.bf16.mxu0 0
        %1547 = vmatpush1.bf16.xpose.msra.mxu0 0
        %1548 = vmatprep.subr.bf16.mxu0 0
        %1549 = vmatpush1.bf16.xpose.msra.mxu0 0
        %1550 = vmatprep.subr.bf16.mxu0 0
        %1551 = vmatpush1.bf16.xpose.msra.mxu0 0
        %1552 = vmatprep.subr.bf16.mxu0 0
        %1553 = vmatpush1.bf16.xpose.msra.mxu0 0
        %1554 = vmatprep.subr.bf16.mxu0 0
        %1555 = vmatpush1.bf16.xpose.msra.mxu0 0
        %1556 = vmatprep.subr.bf16.mxu0 0
        %1557 = vmatpush1.bf16.xpose.msra.mxu0 0
        %1558 = vmatprep.mubr.bf16.mxu0 0
        %1559 = vmatmul.mubr.bf16.gmra.mrb[0].mxu0 %v1521
        %v1560 = vpop.f32.mrb[0].mxu0
        %v1561 = vadd.f32 %v565, %v1560
        %v1562 = vpop.f32.mrb[0].mxu0
        %v1563 = vpop.f32.mrb[0].mxu0
        %v1564 = vpop.f32.mrb[0].mxu0
        %1565 = vdwg.mxu0
        %v1566 = vsel %vm572, %v1561, -inf
        %1567 = vmax.xlane.f32.xlu0 %v1566
        %v1568 = vpop.xlane.xlu0 %1567
        %v1569 = vsub.f32 %v1561, %v1568
        %v1570 = vmul.f32 %v1569, 1.442695
        %v1571 = vpow.pop %v1570
        %v1572 = vsel %vm572, %v1571, 0.0
        %1573 = vadd.xlane.f32.xlu0 %v1572
        %v1574 = vpop.xlane.xlu0 %1573
        %v1575 = vrcp.pop %v1574
        %v1576 = vmul.f32 %v1571, %v1575
        %v1577 = vpack.c.bf16 %v1576, %v1576
        %1578 = vrot.lane.b32.xlu0 %v1207, 48
        %v1579 = vpop.permute.xlu0 %1578
        %v1581 = vsel %vm572, %v1577, 0
        %v1584 = vsel %vm636, %v1579, 0
        %1586 = vmatprep.subr.bf16.mxu0 0
        %1587 = vmatpush1.bf16.msra.mxu0 %v1584
        %1588 = vmatprep.subr.bf16.mxu0 0
        %1589 = vmatpush1.bf16.msra.mxu0 0
        %1590 = vmatprep.subr.bf16.mxu0 0
        %1591 = vmatpush1.bf16.msra.mxu0 0
        %1592 = vmatprep.subr.bf16.mxu0 0
        %1593 = vmatpush1.bf16.msra.mxu0 0
        %1594 = vmatprep.subr.bf16.mxu0 0
        %1595 = vmatpush1.bf16.msra.mxu0 0
        %1596 = vmatprep.subr.bf16.mxu0 0
        %1597 = vmatpush1.bf16.msra.mxu0 0
        %1598 = vmatprep.subr.bf16.mxu0 0
        %1599 = vmatpush1.bf16.msra.mxu0 0
        %1600 = vmatprep.subr.bf16.mxu0 0
        %1601 = vmatpush1.bf16.msra.mxu0 0
        %1602 = vmatprep.subr.bf16.mxu0 0
        %1603 = vmatpush1.bf16.msra.mxu0 0
        %1604 = vmatprep.subr.bf16.mxu0 0
        %1605 = vmatpush1.bf16.msra.mxu0 0
        %1606 = vmatprep.subr.bf16.mxu0 0
        %1607 = vmatpush1.bf16.msra.mxu0 0
        %1608 = vmatprep.subr.bf16.mxu0 0
        %1609 = vmatpush1.bf16.msra.mxu0 0
        %1610 = vmatprep.subr.bf16.mxu0 0
        %1611 = vmatpush1.bf16.msra.mxu0 0
        %1612 = vmatprep.subr.bf16.mxu0 0
        %1613 = vmatpush1.bf16.msra.mxu0 0
        %1614 = vmatprep.subr.bf16.mxu0 0
        %1615 = vmatpush1.bf16.msra.mxu0 0
        %1616 = vmatprep.subr.bf16.mxu0 0
        %1617 = vmatpush1.bf16.msra.mxu0 0
        %1618 = vmatprep.mubr.bf16.mxu0 0
        %1619 = vmatmul.mubr.bf16.gmra.mrb[0].mxu0 %v1581
        %v1620 = vpop.f32.mrb[0].mxu0
        %v1621 = vadd.f32 0.0, %v1620
        %v1622 = vpop.f32.mrb[0].mxu0
        %v1623 = vpop.f32.mrb[0].mxu0
        %v1624 = vpop.f32.mrb[0].mxu0
        %1625 = vdwg.mxu0
        %v1626 = vpack.c.bf16 %v1621, %v1621
        %v1628 = vsel %vm572, %v1626, 0
        %1630 = vmatprep.subr.bf16.mxu0 0
        %1631 = vmatpush1.bf16.msra.mxu0 %v1003
        %1632 = vmatprep.subr.bf16.mxu0 0
        %1633 = vmatpush1.bf16.msra.mxu0 0
        %1634 = vmatprep.subr.bf16.mxu0 0
        %1635 = vmatpush1.bf16.msra.mxu0 0
        %1636 = vmatprep.subr.bf16.mxu0 0
        %1637 = vmatpush1.bf16.msra.mxu0 0
        %1638 = vmatprep.subr.bf16.mxu0 0
        %1639 = vmatpush1.bf16.msra.mxu0 0
        %1640 = vmatprep.subr.bf16.mxu0 0
        %1641 = vmatpush1.bf16.msra.mxu0 0
        %1642 = vmatprep.subr.bf16.mxu0 0
        %1643 = vmatpush1.bf16.msra.mxu0 0
        %1644 = vmatprep.subr.bf16.mxu0 0
        %1645 = vmatpush1.bf16.msra.mxu0 0
        %1646 = vmatprep.subr.bf16.mxu0 0
        %1647 = vmatpush1.bf16.msra.mxu0 0
        %1648 = vmatprep.subr.bf16.mxu0 0
        %1649 = vmatpush1.bf16.msra.mxu0 0
        %1650 = vmatprep.subr.bf16.mxu0 0
        %1651 = vmatpush1.bf16.msra.mxu0 0
        %1652 = vmatprep.subr.bf16.mxu0 0
        %1653 = vmatpush1.bf16.msra.mxu0 0
        %1654 = vmatprep.subr.bf16.mxu0 0
        %1655 = vmatpush1.bf16.msra.mxu0 0
        %1656 = vmatprep.subr.bf16.mxu0 0
        %1657 = vmatpush1.bf16.msra.mxu0 0
        %1658 = vmatprep.subr.bf16.mxu0 0
        %1659 = vmatpush1.bf16.msra.mxu0 0
        %1660 = vmatprep.subr.bf16.mxu0 0
        %1661 = vmatpush1.bf16.msra.mxu0 0
        %1662 = vmatprep.mubr.bf16.mxu0 0
        %1663 = vmatmul.mubr.bf16.gmra.mrb[0].mxu0 %v1628
        %v1664 = vpop.f32.mrb[0].mxu0
        %v1665 = vadd.f32 0.0, %v1664
        %v1666 = vpop.f32.mrb[0].mxu0
        %v1667 = vpop.f32.mrb[0].mxu0
        %v1668 = vpop.f32.mrb[0].mxu0
        %1669 = vdwg.mxu0
        %v1670 = vadd.f32 %v1511, %v1665
        %1671 = vrot.lane.b32.xlu0 %v1206, 104
        %v1672 = vpop.permute.xlu0 %1671
        %1673 = vrot.lane.b32.xlu0 %v1207, 72
        %v1674 = vpop.permute.xlu0 %1673
        %v1676 = vsel %vm572, %v1672, 0
        %v1679 = vsel %vm572, %v1674, 0
        %1681 = vmatprep.subr.bf16.mxu0 0
        %1682 = vmatpush1.bf16.xpose.msra.mxu0 %v1679
        %1683 = vmatprep.subr.bf16.mxu0 0
        %1684 = vmatpush1.bf16.xpose.msra.mxu0 0
        %1685 = vmatprep.subr.bf16.mxu0 0
        %1686 = vmatpush1.bf16.xpose.msra.mxu0 0
        %1687 = vmatprep.subr.bf16.mxu0 0
        %1688 = vmatpush1.bf16.xpose.msra.mxu0 0
        %1689 = vmatprep.subr.bf16.mxu0 0
        %1690 = vmatpush1.bf16.xpose.msra.mxu0 0
        %1691 = vmatprep.subr.bf16.mxu0 0
        %1692 = vmatpush1.bf16.xpose.msra.mxu0 0
        %1693 = vmatprep.subr.bf16.mxu0 0
        %1694 = vmatpush1.bf16.xpose.msra.mxu0 0
        %1695 = vmatprep.subr.bf16.mxu0 0
        %1696 = vmatpush1.bf16.xpose.msra.mxu0 0
        %1697 = vmatprep.subr.bf16.mxu0 0
        %1698 = vmatpush1.bf16.xpose.msra.mxu0 0
        %1699 = vmatprep.subr.bf16.mxu0 0
        %1700 = vmatpush1.bf16.xpose.msra.mxu0 0
        %1701 = vmatprep.subr.bf16.mxu0 0
        %1702 = vmatpush1.bf16.xpose.msra.mxu0 0
        %1703 = vmatprep.subr.bf16.mxu0 0
        %1704 = vmatpush1.bf16.xpose.msra.mxu0 0
        %1705 = vmatprep.subr.bf16.mxu0 0
        %1706 = vmatpush1.bf16.xpose.msra.mxu0 0
        %1707 = vmatprep.subr.bf16.mxu0 0
        %1708 = vmatpush1.bf16.xpose.msra.mxu0 0
        %1709 = vmatprep.subr.bf16.mxu0 0
        %1710 = vmatpush1.bf16.xpose.msra.mxu0 0
        %1711 = vmatprep.subr.bf16.mxu0 0
        %1712 = vmatpush1.bf16.xpose.msra.mxu0 0
        %1713 = vmatprep.mubr.bf16.mxu0 0
        %1714 = vmatmul.mubr.bf16.gmra.mrb[0].mxu0 %v1676
        %v1715 = vpop.f32.mrb[0].mxu0
        %v1716 = vadd.f32 %v565, %v1715
        %v1717 = vpop.f32.mrb[0].mxu0
        %v1718 = vpop.f32.mrb[0].mxu0
        %v1719 = vpop.f32.mrb[0].mxu0
        %1720 = vdwg.mxu0
        %v1721 = vsel %vm572, %v1716, -inf
        %1722 = vmax.xlane.f32.xlu0 %v1721
        %v1723 = vpop.xlane.xlu0 %1722
        %v1724 = vsub.f32 %v1716, %v1723
        %v1725 = vmul.f32 %v1724, 1.442695
        %v1726 = vpow.pop %v1725
        %v1727 = vsel %vm572, %v1726, 0.0
        %1728 = vadd.xlane.f32.xlu0 %v1727
        %v1729 = vpop.xlane.xlu0 %1728
        %v1730 = vrcp.pop %v1729
        %v1731 = vmul.f32 %v1726, %v1730
        %v1732 = vpack.c.bf16 %v1731, %v1731
        %1733 = vrot.lane.b32.xlu0 %v1207, 40
        %v1734 = vpop.permute.xlu0 %1733
        %v1736 = vsel %vm572, %v1732, 0
        %v1739 = vsel %vm636, %v1734, 0
        %1741 = vmatprep.subr.bf16.mxu0 0
        %1742 = vmatpush1.bf16.msra.mxu0 %v1739
        %1743 = vmatprep.subr.bf16.mxu0 0
        %1744 = vmatpush1.bf16.msra.mxu0 0
        %1745 = vmatprep.subr.bf16.mxu0 0
        %1746 = vmatpush1.bf16.msra.mxu0 0
        %1747 = vmatprep.subr.bf16.mxu0 0
        %1748 = vmatpush1.bf16.msra.mxu0 0
        %1749 = vmatprep.subr.bf16.mxu0 0
        %1750 = vmatpush1.bf16.msra.mxu0 0
        %1751 = vmatprep.subr.bf16.mxu0 0
        %1752 = vmatpush1.bf16.msra.mxu0 0
        %1753 = vmatprep.subr.bf16.mxu0 0
        %1754 = vmatpush1.bf16.msra.mxu0 0
        %1755 = vmatprep.subr.bf16.mxu0 0
        %1756 = vmatpush1.bf16.msra.mxu0 0
        %1757 = vmatprep.subr.bf16.mxu0 0
        %1758 = vmatpush1.bf16.msra.mxu0 0
        %1759 = vmatprep.subr.bf16.mxu0 0
        %1760 = vmatpush1.bf16.msra.mxu0 0
        %1761 = vmatprep.subr.bf16.mxu0 0
        %1762 = vmatpush1.bf16.msra.mxu0 0
        %1763 = vmatprep.subr.bf16.mxu0 0
        %1764 = vmatpush1.bf16.msra.mxu0 0
        %1765 = vmatprep.subr.bf16.mxu0 0
        %1766 = vmatpush1.bf16.msra.mxu0 0
        %1767 = vmatprep.subr.bf16.mxu0 0
        %1768 = vmatpush1.bf16.msra.mxu0 0
        %1769 = vmatprep.subr.bf16.mxu0 0
        %1770 = vmatpush1.bf16.msra.mxu0 0
        %1771 = vmatprep.subr.bf16.mxu0 0
        %1772 = vmatpush1.bf16.msra.mxu0 0
        %1773 = vmatprep.mubr.bf16.mxu0 0
        %1774 = vmatmul.mubr.bf16.gmra.mrb[0].mxu0 %v1736
        %v1775 = vpop.f32.mrb[0].mxu0
        %v1776 = vadd.f32 0.0, %v1775
        %v1777 = vpop.f32.mrb[0].mxu0
        %v1778 = vpop.f32.mrb[0].mxu0
        %v1779 = vpop.f32.mrb[0].mxu0
        %1780 = vdwg.mxu0
        %v1781 = vpack.c.bf16 %v1776, %v1776
        %v1783 = vsel %vm572, %v1781, 0
        %1785 = vmatprep.subr.bf16.mxu0 0
        %1786 = vmatpush1.bf16.msra.mxu0 %v1162
        %1787 = vmatprep.subr.bf16.mxu0 0
        %1788 = vmatpush1.bf16.msra.mxu0 0
        %1789 = vmatprep.subr.bf16.mxu0 0
        %1790 = vmatpush1.bf16.msra.mxu0 0
        %1791 = vmatprep.subr.bf16.mxu0 0
        %1792 = vmatpush1.bf16.msra.mxu0 0
        %1793 = vmatprep.subr.bf16.mxu0 0
        %1794 = vmatpush1.bf16.msra.mxu0 0
        %1795 = vmatprep.subr.bf16.mxu0 0
        %1796 = vmatpush1.bf16.msra.mxu0 0
        %1797 = vmatprep.subr.bf16.mxu0 0
        %1798 = vmatpush1.bf16.msra.mxu0 0
        %1799 = vmatprep.subr.bf16.mxu0 0
        %1800 = vmatpush1.bf16.msra.mxu0 0
        %1801 = vmatprep.subr.bf16.mxu0 0
        %1802 = vmatpush1.bf16.msra.mxu0 0
        %1803 = vmatprep.subr.bf16.mxu0 0
        %1804 = vmatpush1.bf16.msra.mxu0 0
        %1805 = vmatprep.subr.bf16.mxu0 0
        %1806 = vmatpush1.bf16.msra.mxu0 0
        %1807 = vmatprep.subr.bf16.mxu0 0
        %1808 = vmatpush1.bf16.msra.mxu0 0
        %1809 = vmatprep.subr.bf16.mxu0 0
        %1810 = vmatpush1.bf16.msra.mxu0 0
        %1811 = vmatprep.subr.bf16.mxu0 0
        %1812 = vmatpush1.bf16.msra.mxu0 0
        %1813 = vmatprep.subr.bf16.mxu0 0
        %1814 = vmatpush1.bf16.msra.mxu0 0
        %1815 = vmatprep.subr.bf16.mxu0 0
        %1816 = vmatpush1.bf16.msra.mxu0 0
        %1817 = vmatprep.mubr.bf16.mxu0 0
        %1818 = vmatmul.mubr.bf16.gmra.mrb[0].mxu0 %v1783
        %v1819 = vpop.f32.mrb[0].mxu0
        %v1820 = vadd.f32 0.0, %v1819
        %v1821 = vpop.f32.mrb[0].mxu0
        %v1822 = vpop.f32.mrb[0].mxu0
        %v1823 = vpop.f32.mrb[0].mxu0
        %1824 = vdwg.mxu0
        %v1825 = vadd.f32 %v1670, %v1820
        %v1826 = vadd.f32 %v456, %v1204
        %v1827 = vadd.f32 %v457, %v1825
        %v1828 = vld [vmem:[%s6] sm:$0x1]
        %v1830 = vlaneseq
        %v1831 = vshrl.u32 %v1830, 7
        %v1832 = vsub.s32 0, %v1831
        %v1833 = vrot.slane %v1828, %v1832
        %v1835 = vadd.f32 %v1826, %v1833
        %v1836 = vadd.f32 %v1827, %v1833
        %v1837 = vsel %vm458, %v1835, 0.0
        %1838 = vadd.xlane.f32.xlu0 %v1837
        %v1839 = vpop.xlane.xlu0 %1838
        %v1840 = vsel %vm458, %v1836, 0.0
        %1841 = vadd.xlane.f32.xlu0 %v1840
        %v1842 = vpop.xlane.xlu0 %1841
        %v1843 = vmul.f32 %v1839, %v465
        %v1844 = vmul.f32 %v1842, %v465
        %v1845 = vsub.f32 %v1835, %v1843
        %v1846 = vsub.f32 %v1836, %v1844
        %v1847 = vmul.f32 %v1845, %v1845
        %v1848 = vmul.f32 %v1846, %v1846
        %v1849 = vsel %vm458, %v1847, 0.0
        %1850 = vadd.xlane.f32.xlu0 %v1849
        %v1851 = vpop.xlane.xlu0 %1850
        %v1852 = vsel %vm458, %v1848, 0.0
        %1853 = vadd.xlane.f32.xlu0 %v1852
        %v1854 = vpop.xlane.xlu0 %1853
        %v1855 = vmul.f32 %v1851, %v465
        %v1856 = vmul.f32 %v1854, %v465
        %v1857 = vadd.f32 %v1855, 1e-05
        %v1858 = vadd.f32 %v1856, 1e-05
        %v1859 = vrsqrt.pop %v1857
        %v1860 = vrsqrt.pop %v1858
        %v1861 = vmul.f32 %v1845, %v1859
        %v1862 = vmul.f32 %v1846, %v1860
        %v1863 = vld [vmem:[%s7] sm:$0x1]
        %v1865 = vlaneseq
        %v1866 = vshrl.u32 %v1865, 7
        %v1867 = vsub.s32 0, %v1866
        %v1868 = vrot.slane %v1863, %v1867
        %v1870 = vmul.f32 %v1861, %v1868
        %v1871 = vmul.f32 %v1862, %v1868
        %v1872 = vld [vmem:[%s8] sm:$0x1]
        %v1874 = vlaneseq
        %v1875 = vshrl.u32 %v1874, 7
        %v1876 = vsub.s32 0, %v1875
        %v1877 = vrot.slane %v1872, %v1876
        %v1879 = vadd.f32 %v1870, %v1877
        %v1880 = vadd.f32 %v1871, %v1877
        %v1881 = vpack.c.bf16 %v1880, %v1879
        %v1882 = vld [vmem:[%s9] sm:$0xf]
        %v1883 = vld [vmem:[%s9 + $0x4] sm:$0xf]
        %v1884 = vld [vmem:[%s9 + $0x8] sm:$0xf]
        %v1885 = vld [vmem:[%s9 + $0xc] sm:$0xf]
        %v1886 = vld [vmem:[%s10] sm:$0x1]
        %v1888 = vlaneseq
        %v1889 = vshrl.u32 %v1888, 7
        %v1890 = vsub.s32 0, %v1889
        %v1891 = vrot.slane %v1886, %v1890
        %v1897 = vunpack.c.l.b16 %v1882
        %v1898 = vunpack.c.l.b16 %v1883
        %v1899 = vunpack.c.l.b16 %v1884
        %v1900 = vunpack.c.l.b16 %v1885
        %v1901 = vpack.c.b16 %v1898, %v1897
        %v1902 = vpack.c.b16 %v1900, %v1899
        %v1906 = vsel %vm458, %v1881, 0
        %1908 = vmatprep.subr.bf16.mxu0 0
        %1909 = vmatpush1.bf16.msra.mxu0 %v1901
        %1910 = vmatprep.subr.bf16.mxu0 0
        %1911 = vmatpush1.bf16.msra.mxu0 %v1902
        %1912 = vmatprep.subr.bf16.mxu0 0
        %1913 = vmatpush1.bf16.msra.mxu0 0
        %1914 = vmatprep.subr.bf16.mxu0 0
        %1915 = vmatpush1.bf16.msra.mxu0 0
        %1916 = vmatprep.subr.bf16.mxu0 0
        %1917 = vmatpush1.bf16.msra.mxu0 0
        %1918 = vmatprep.subr.bf16.mxu0 0
        %1919 = vmatpush1.bf16.msra.mxu0 0
        %1920 = vmatprep.subr.bf16.mxu0 0
        %1921 = vmatpush1.bf16.msra.mxu0 0
        %1922 = vmatprep.subr.bf16.mxu0 0
        %1923 = vmatpush1.bf16.msra.mxu0 0
        %1924 = vmatprep.subr.bf16.mxu0 0
        %1925 = vmatpush1.bf16.msra.mxu0 0
        %1926 = vmatprep.subr.bf16.mxu0 0
        %1927 = vmatpush1.bf16.msra.mxu0 0
        %1928 = vmatprep.subr.bf16.mxu0 0
        %1929 = vmatpush1.bf16.msra.mxu0 0
        %1930 = vmatprep.subr.bf16.mxu0 0
        %1931 = vmatpush1.bf16.msra.mxu0 0
        %1932 = vmatprep.subr.bf16.mxu0 0
        %1933 = vmatpush1.bf16.msra.mxu0 0
        %1934 = vmatprep.subr.bf16.mxu0 0
        %1935 = vmatpush1.bf16.msra.mxu0 0
        %1936 = vmatprep.subr.bf16.mxu0 0
        %1937 = vmatpush1.bf16.msra.mxu0 0
        %1938 = vmatprep.subr.bf16.mxu0 0
        %1939 = vmatpush1.bf16.msra.mxu0 0
        %1940 = vmatprep.mubr.bf16.mxu0 0
        %1941 = vmatmul.mubr.bf16.gmra.mrb[0].mxu0 %v1906
        %v1942 = vpop.f32.mrb[0].mxu0
        %v1943 = vadd.f32 %v1891, %v1942
        %v1944 = vpop.f32.mrb[0].mxu0
        %v1945 = vpop.f32.mrb[0].mxu0
        %v1946 = vadd.f32 %v1891, %v1945
        %v1947 = vpop.f32.mrb[0].mxu0
        %1948 = vdwg.mxu0
        %v1949 = vmax.f32 %v1943, 0.0
        %v1950 = vmax.f32 %v1946, 0.0
        %v1951 = vpack.c.bf16 %v1950, %v1949
        %v1952 = vld [vmem:[%s11] sm:$0xf]
        %v1953 = vld [vmem:[%s11 + $0x4] sm:$0xf]
        %v1954 = vld [vmem:[%s11 + $0x8] sm:$0xf]
        %v1955 = vld [vmem:[%s11 + $0xc] sm:$0xf]
        %v1956 = vld [vmem:[%s11 + $0x10] sm:$0xf]
        %v1957 = vld [vmem:[%s11 + $0x14] sm:$0xf]
        %v1958 = vld [vmem:[%s11 + $0x18] sm:$0xf]
        %v1959 = vld [vmem:[%s11 + $0x1c] sm:$0xf]
        %v1960 = vld [vmem:[%s11 + $0x20] sm:$0xf]
        %v1961 = vld [vmem:[%s11 + $0x24] sm:$0xf]
        %v1962 = vld [vmem:[%s11 + $0x28] sm:$0xf]
        %v1963 = vld [vmem:[%s11 + $0x2c] sm:$0xf]
        %v1964 = vld [vmem:[%s11 + $0x30] sm:$0xf]
        %v1965 = vld [vmem:[%s11 + $0x34] sm:$0xf]
        %v1966 = vld [vmem:[%s11 + $0x38] sm:$0xf]
        %v1967 = vld [vmem:[%s11 + $0x3c] sm:$0xf]
        %v1968 = vld [vmem:[%s12] sm:$0x1]
        %v1970 = vlaneseq
        %v1971 = vshrl.u32 %v1970, 7
        %v1972 = vsub.s32 0, %v1971
        %v1973 = vrot.slane %v1968, %v1972
        %v1991 = vunpack.c.l.b16 %v1952
        %v1992 = vunpack.c.l.b16 %v1953
        %v1993 = vunpack.c.l.b16 %v1954
        %v1994 = vunpack.c.l.b16 %v1955
        %v1995 = vunpack.c.l.b16 %v1956
        %v1996 = vunpack.c.l.b16 %v1957
        %v1997 = vunpack.c.l.b16 %v1958
        %v1998 = vunpack.c.l.b16 %v1959
        %v1999 = vunpack.c.l.b16 %v1960
        %v2000 = vunpack.c.l.b16 %v1961
        %v2001 = vunpack.c.l.b16 %v1962
        %v2002 = vunpack.c.l.b16 %v1963
        %v2003 = vunpack.c.l.b16 %v1964
        %v2004 = vunpack.c.l.b16 %v1965
        %v2005 = vunpack.c.l.b16 %v1966
        %v2006 = vunpack.c.l.b16 %v1967
        %v2007 = vpack.c.b16 %v1992, %v1991
        %v2008 = vpack.c.b16 %v1994, %v1993
        %v2009 = vpack.c.b16 %v1996, %v1995
        %v2010 = vpack.c.b16 %v1998, %v1997
        %v2011 = vpack.c.b16 %v2000, %v1999
        %v2012 = vpack.c.b16 %v2002, %v2001
        %v2013 = vpack.c.b16 %v2004, %v2003
        %v2014 = vpack.c.b16 %v2006, %v2005
        %2023 = vmatprep.subr.bf16.mxu0 0
        %2024 = vmatpush1.bf16.msra.mxu0 %v2007
        %2025 = vmatprep.subr.bf16.mxu0 0
        %2026 = vmatpush1.bf16.msra.mxu0 %v2008
        %2027 = vmatprep.subr.bf16.mxu0 0
        %2028 = vmatpush1.bf16.msra.mxu0 %v2009
        %2029 = vmatprep.subr.bf16.mxu0 0
        %2030 = vmatpush1.bf16.msra.mxu0 %v2010
        %2031 = vmatprep.subr.bf16.mxu0 0
        %2032 = vmatpush1.bf16.msra.mxu0 %v2011
        %2033 = vmatprep.subr.bf16.mxu0 0
        %2034 = vmatpush1.bf16.msra.mxu0 %v2012
        %2035 = vmatprep.subr.bf16.mxu0 0
        %2036 = vmatpush1.bf16.msra.mxu0 %v2013
        %2037 = vmatprep.subr.bf16.mxu0 0
        %2038 = vmatpush1.bf16.msra.mxu0 %v2014
        %2039 = vmatprep.subr.bf16.mxu0 0
        %2040 = vmatpush1.bf16.msra.mxu0 0
        %2041 = vmatprep.subr.bf16.mxu0 0
        %2042 = vmatpush1.bf16.msra.mxu0 0
        %2043 = vmatprep.subr.bf16.mxu0 0
        %2044 = vmatpush1.bf16.msra.mxu0 0
        %2045 = vmatprep.subr.bf16.mxu0 0
        %2046 = vmatpush1.bf16.msra.mxu0 0
        %2047 = vmatprep.subr.bf16.mxu0 0
        %2048 = vmatpush1.bf16.msra.mxu0 0
        %2049 = vmatprep.subr.bf16.mxu0 0
        %2050 = vmatpush1.bf16.msra.mxu0 0
        %2051 = vmatprep.subr.bf16.mxu0 0
        %2052 = vmatpush1.bf16.msra.mxu0 0
        %2053 = vmatprep.subr.bf16.mxu0 0
        %2054 = vmatpush1.bf16.msra.mxu0 0
        %2055 = vmatprep.mubr.bf16.mxu0 0
        %2056 = vmatmul.mubr.bf16.gmra.mrb[0].mxu0 %v1951
        %v2057 = vpop.f32.mrb[0].mxu0
        %v2058 = vadd.f32 %v1973, %v2057
        %v2059 = vpop.f32.mrb[0].mxu0
        %v2060 = vpop.f32.mrb[0].mxu0
        %v2061 = vadd.f32 %v1973, %v2060
        %v2062 = vpop.f32.mrb[0].mxu0
        %2063 = vdwg.mxu0
        %v2064 = vadd.f32 %v1835, %v2058
        %v2065 = vadd.f32 %v1836, %v2061
        %2066 = vst.msk [vmem:[%s447] sm:$0xff] %vm458, %v2064
        %2067 = vst.msk [vmem:[%s447 + $0x8] sm:$0xff] %vm458, %v2065
        %s2068 = sand.u32 %s314, 1
        %s2069 = scalar_lea.sflag [#allocation4], %s2068
        %s2070 = sand.u32 %s314, 1
        %s2071 = smul.addr %s2070, 16
        %s2072 = scalar_lea.vmem [#allocation5], %s2071
        // Predicated region
        $region77: #{tpu_custom_call.1} parent=71 // pred_check
          %p2073 = pneg %p324
        $region78: #{tpu_custom_call.1} parent=71 // pred_check_branch
          %2075 = sbr.rel (%p2073) target = $region80
        $region79: #{tpu_custom_call.1} parent=71 // pred_region
          %s2076 = smul.u32 2, %s28
          %s2078 = ssub.s32 256, 256
          %2079 = vsyncadd %s2069, %s2078
          %s2080 = smul.addr %s2076, 128
          %s2081 = scalar_lea.hbm %s13, %s2080
          %s2082 = sshll.u32 %s2072, 4
          %s2083 = int_to_ptr.vmem [resolvable:$true] %s2082
          %2088 = dma.vmem_to_hbm [thread:$0]  %s2083, 256, %s2081, %s2069, 128, 128, 8
        $region80: #{tpu_custom_call.1} parent=71 // pred_fallthru
          _
      $region72: #{tpu_custom_call.1} parent=5 // pred_fallthru
        _
      %p2089 = scmp.le.s32.totalorder 2, %s23
      // Predicated region
      $region81: #{tpu_custom_call.1} parent=5 // pred_check
        %p2090 = pneg %p2089
      $region82: #{tpu_custom_call.1} parent=5 // pred_check_branch
        %2092 = sbr.rel (%p2090) target = $region84
      $region83: #{tpu_custom_call.1} parent=5 // pred_region
        %s2093 = ssub.s32 %s23, 2
        // Predicated region
        $region85: #{tpu_custom_call.1} parent=83 // pred_check
          %p2094 = pneg %p330
        $region86: #{tpu_custom_call.1} parent=83 // pred_check_branch
          %2096 = sbr.rel (%p2094) target = $region88
        $region87: #{tpu_custom_call.1} parent=83 // pred_region
          %s2097 = sand.u32 %s315, 1
          %s2098 = scalar_lea.sflag [#allocation4], %s2097
          %s2099 = sand.u32 %s315, 1
          %s2100 = smul.addr %s2099, 16
          %s2101 = scalar_lea.vmem [#allocation5], %s2100
          %2102 = dma.done %s2098, 256
        $region88: #{tpu_custom_call.1} parent=83 // pred_fallthru
          _
      $region84: #{tpu_custom_call.1} parent=5 // pred_fallthru
        _
    $region6: #{tpu_custom_call.1} parent=1 // loop_footer
      %s27 = sadd.s32 1, %s23
    $region7: #{tpu_custom_call.1} parent=1 // loop_footer_branch
      %22 = sbr.rel target = $region3
    $region8: #{tpu_custom_call.1} parent=1 // loop_exit
      _
    %2103 = vsyncpa [#allocation3], 1
    %s2104 = scalar_lea.sflag [#allocation3], 1
    %2105 = vsyncpa %s2104, 1
    %2106 = vsyncpa [#allocation4], 1
    %s2107 = scalar_lea.sflag [#allocation4], 1
    %2108 = vsyncpa %s2107, 1

// kernel: tpu_custom_call.1
$region0: #{tpu_custom_call.1}
  #allocation0 [shape = 'u32[]', space=smem, size = 0x4, offset = 0x4, fixed_abs, tag = 'smem constant byte address 0x4 - core index']
  #allocation1 [shape = 'u32[144,128]{1,0:T(1,128)}', space=vmem, size = 0x12000, scoped, tag = 'internal scratch']
  %s0 = inlined_call_operand.vmem [shape: f32[4,8,32], index: 0, kind: input, shape index: {}]
  %s1 = inlined_call_operand.hbm [shape: f32[8,8], index: 1, kind: input, shape index: {}]
  %s2 = inlined_call_operand.vmem [shape: f32[1,32], index: 2, kind: input, shape index: {}]
  %s3 = inlined_call_operand.vmem [shape: f32[1,32], index: 3, kind: input, shape index: {}]
  %s4 = inlined_call_operand.vmem [shape: bf16[32,96], index: 4, kind: input, shape index: {}]
  %s5 = inlined_call_operand.vmem [shape: bf16[32,32], index: 5, kind: input, shape index: {}]
  %s6 = inlined_call_operand.vmem [shape: f32[1,32], index: 6, kind: input, shape index: {}]
  %s7 = inlined_call_operand.vmem [shape: f32[1,32], index: 7, kind: input, shape index: {}]
  %s8 = inlined_call_operand.vmem [shape: f32[1,32], index: 8, kind: input, shape index: {}]
  %s9 = inlined_call_operand.vmem [shape: bf16[32,128], index: 9, kind: input, shape index: {}]
  %s10 = inlined_call_operand.vmem [shape: f32[1,128], index: 10, kind: input, shape index: {}]
  %s11 = inlined_call_operand.vmem [shape: bf16[128,32], index: 11, kind: input, shape index: {}]
  %s12 = inlined_call_operand.vmem [shape: f32[1,32], index: 12, kind: input, shape index: {}]
  %s13 = inlined_call_operand.hbm [shape: f32[4,8,32], index: 13, kind: output, shape index: {}]
  %s14 = sld [smem:[#allocation0]]
  $region89: #{tpu_custom_call.1} parent=0
    _
  %s16 = ssub.s32 1, %s14
  %s17 = scalar_select 0, %s16, %s14
  $region1: #{tpu_custom_call.1} parent=0
    #allocation2 [shape = 'u8[4096]{0}', space=vmem, size = 0x1000, scoped, tag = 'input window, operand 1, single buffered']
    #allocation3 [shape = 's32[2]{0}', space=sflag, size = 0x8, scoped, tag = 'scoped memory for tpu_custom_call.1']
    #allocation4 [shape = 's32[2]{0}', space=sflag, size = 0x8, scoped, tag = 'scoped memory for tpu_custom_call.1']
    #allocation5 [shape = 'u8[16384]{0}', space=vmem, size = 0x4000, scoped, tag = 'output window, operand 0']
    %18 = vsyncpa [#allocation3], 0
    %19 = vsyncpa [#allocation4], 0
    %s20 = scalar_lea.sflag [#allocation4], 1
    %21 = vsyncpa %s20, 0
    loop: start=0, step=1, limit=4
    $region2: #{tpu_custom_call.1} parent=1 // loop_pre_header
      _
    $region3: #{tpu_custom_call.1} parent=1 // loop_header
      %s23 = sphi 0, %s27
      %p24 = scmp.ge.s32.totalorder %s23, 4
      %s33 = sphi 0, %s35
      %s36 = sphi 0, %s33
      %s37 = sphi 0, %s36
      %s53 = sphi 0, %s37
      %s57 = sphi 0, %s57
      %s59 = sphi 0, %s57
      %s60 = sphi 0, %s59
      %s74 = sphi 0, %s60
      %s78 = sphi 0, %s78
      %s80 = sphi 0, %s78
      %s81 = sphi 0, %s80
      %s95 = sphi 0, %s81
      %s99 = sphi 0, %s99
      %s101 = sphi 0, %s99
      %s102 = sphi 0, %s101
      %s116 = sphi 0, %s102
      %s120 = sphi 0, %s120
      %s122 = sphi 0, %s120
      %s123 = sphi 0, %s122
      %s137 = sphi 0, %s123
      %s141 = sphi 0, %s141
      %s143 = sphi 0, %s141
      %s144 = sphi 0, %s143
      %s158 = sphi 0, %s144
      %s162 = sphi 0, %s162
      %s164 = sphi 0, %s162
      %s165 = sphi 0, %s164
      %s179 = sphi 0, %s165
      %s183 = sphi 0, %s183
      %s185 = sphi 0, %s183
      %s186 = sphi 0, %s185
      %s200 = sphi 0, %s186
      %s204 = sphi 0, %s204
      %s206 = sphi 0, %s204
      %s207 = sphi 0, %s206
      %s221 = sphi 0, %s207
      %s225 = sphi 0, %s225
      %s227 = sphi 0, %s225
      %s228 = sphi 0, %s227
      %s242 = sphi 0, %s228
      %s246 = sphi 0, %s246
      %s248 = sphi 0, %s246
      %s249 = sphi 0, %s248
      %s263 = sphi 0, %s249
      %s267 = sphi 0, %s267
      %s269 = sphi 0, %s267
      %s270 = sphi 0, %s269
      %s284 = sphi 0, %s270
      %s288 = sphi 0, %s288
      %s290 = sphi 0, %s288
      %s291 = sphi 0, %s290
      %s305 = sphi 0, %s291
      %s311 = sphi 0, %s313
      %s314 = sphi 0, %s311
      %s315 = sphi 0, %s314
      %s331 = sphi 0, %s315
    $region4: #{tpu_custom_call.1} parent=1 // loop_header_branch
      %26 = sbr.rel (%p24) target = $region8
    $region5: #{tpu_custom_call.1} parent=1 // loop_body
      %s28 = ssub.s32 %s23, 1
      %s29 = ssub.s32 %s23, 2
      %s30 = sadd.s32 %s23, 1
      %s31 = ssub.s32 %s23, %s30
      %p32 = scmp.eq.s32.totalorder %s31, 0
      %s34 = sadd.s32 %s33, 1
      %s35 = scalar_select %p32, %s33, %s34
      %p38 = pneg %p32
      %p39 = scmp.eq.s32.totalorder %s23, 1
      %p40 = por %p38, %p39
      %p41 = scmp.ne.s32.totalorder %s33, %s36
      %p42 = scmp.eq.s32.totalorder %s23, 0
      %p43 = por %p41, %p42
      %p44 = scmp.ne.s32.totalorder %s33, %s36
      %p45 = scmp.eq.s32.totalorder %s28, 1
      %p46 = por %p44, %p45
      %p47 = scmp.ne.s32.totalorder %s36, %s37
      %p48 = scmp.eq.s32.totalorder %s28, 0
      %p49 = por %p47, %p48
      %p50 = scmp.ne.s32.totalorder %s36, %s37
      %p51 = scmp.eq.s32.totalorder %s29, 1
      %p52 = por %p50, %p51
      %p54 = scmp.ne.s32.totalorder %s37, %s53
      %p55 = scmp.eq.s32.totalorder %s29, 0
      %p56 = por %p54, %p55
      %s58 = sadd.s32 %s57, 1
      %p61 = scmp.eq.s32.totalorder %s23, 1
      %p62 = scmp.ne.s32.totalorder %s57, %s59
      %p63 = scmp.eq.s32.totalorder %s23, 0
      %p64 = por %p62, %p63
      %p65 = scmp.ne.s32.totalorder %s57, %s59
      %p66 = scmp.eq.s32.totalorder %s28, 1
      %p67 = por %p65, %p66
      %p68 = scmp.ne.s32.totalorder %s59, %s60
      %p69 = scmp.eq.s32.totalorder %s28, 0
      %p70 = por %p68, %p69
      %p71 = scmp.ne.s32.totalorder %s59, %s60
      %p72 = scmp.eq.s32.totalorder %s29, 1
      %p73 = por %p71, %p72
      %p75 = scmp.ne.s32.totalorder %s60, %s74
      %p76 = scmp.eq.s32.totalorder %s29, 0
      %p77 = por %p75, %p76
      %s79 = sadd.s32 %s78, 1
      %p82 = scmp.eq.s32.totalorder %s23, 1
      %p83 = scmp.ne.s32.totalorder %s78, %s80
      %p84 = scmp.eq.s32.totalorder %s23, 0
      %p85 = por %p83, %p84
      %p86 = scmp.ne.s32.totalorder %s78, %s80
      %p87 = scmp.eq.s32.totalorder %s28, 1
      %p88 = por %p86, %p87
      %p89 = scmp.ne.s32.totalorder %s80, %s81
      %p90 = scmp.eq.s32.totalorder %s28, 0
      %p91 = por %p89, %p90
      %p92 = scmp.ne.s32.totalorder %s80, %s81
      %p93 = scmp.eq.s32.totalorder %s29, 1
      %p94 = por %p92, %p93
      %p96 = scmp.ne.s32.totalorder %s81, %s95
      %p97 = scmp.eq.s32.totalorder %s29, 0
      %p98 = por %p96, %p97
      %s100 = sadd.s32 %s99, 1
      %p103 = scmp.eq.s32.totalorder %s23, 1
      %p104 = scmp.ne.s32.totalorder %s99, %s101
      %p105 = scmp.eq.s32.totalorder %s23, 0
      %p106 = por %p104, %p105
      %p107 = scmp.ne.s32.totalorder %s99, %s101
      %p108 = scmp.eq.s32.totalorder %s28, 1
      %p109 = por %p107, %p108
      %p110 = scmp.ne.s32.totalorder %s101, %s102
      %p111 = scmp.eq.s32.totalorder %s28, 0
      %p112 = por %p110, %p111
      %p113 = scmp.ne.s32.totalorder %s101, %s102
      %p114 = scmp.eq.s32.totalorder %s29, 1
      %p115 = por %p113, %p114
      %p117 = scmp.ne.s32.totalorder %s102, %s116
      %p118 = scmp.eq.s32.totalorder %s29, 0
      %p119 = por %p117, %p118
      %s121 = sadd.s32 %s120, 1
      %p124 = scmp.eq.s32.totalorder %s23, 1
      %p125 = scmp.ne.s32.totalorder %s120, %s122
      %p126 = scmp.eq.s32.totalorder %s23, 0
      %p127 = por %p125, %p126
      %p128 = scmp.ne.s32.totalorder %s120, %s122
      %p129 = scmp.eq.s32.totalorder %s28, 1
      %p130 = por %p128, %p129
      %p131 = scmp.ne.s32.totalorder %s122, %s123
      %p132 = scmp.eq.s32.totalorder %s28, 0
      %p133 = por %p131, %p132
      %p134 = scmp.ne.s32.totalorder %s122, %s123
      %p135 = scmp.eq.s32.totalorder %s29, 1
      %p136 = por %p134, %p135
      %p138 = scmp.ne.s32.totalorder %s123, %s137
      %p139 = scmp.eq.s32.totalorder %s29, 0
      %p140 = por %p138, %p139
      %s142 = sadd.s32 %s141, 1
      %p145 = scmp.eq.s32.totalorder %s23, 1
      %p146 = scmp.ne.s32.totalorder %s141, %s143
      %p147 = scmp.eq.s32.totalorder %s23, 0
      %p148 = por %p146, %p147
      %p149 = scmp.ne.s32.totalorder %s141, %s143
      %p150 = scmp.eq.s32.totalorder %s28, 1
      %p151 = por %p149, %p150
      %p152 = scmp.ne.s32.totalorder %s143, %s144
      %p153 = scmp.eq.s32.totalorder %s28, 0
      %p154 = por %p152, %p153
      %p155 = scmp.ne.s32.totalorder %s143, %s144
      %p156 = scmp.eq.s32.totalorder %s29, 1
      %p157 = por %p155, %p156
      %p159 = scmp.ne.s32.totalorder %s144, %s158
      %p160 = scmp.eq.s32.totalorder %s29, 0
      %p161 = por %p159, %p160
      %s163 = sadd.s32 %s162, 1
      %p166 = scmp.eq.s32.totalorder %s23, 1
      %p167 = scmp.ne.s32.totalorder %s162, %s164
      %p168 = scmp.eq.s32.totalorder %s23, 0
      %p169 = por %p167, %p168
      %p170 = scmp.ne.s32.totalorder %s162, %s164
      %p171 = scmp.eq.s32.totalorder %s28, 1
      %p172 = por %p170, %p171
      %p173 = scmp.ne.s32.totalorder %s164, %s165
      %p174 = scmp.eq.s32.totalorder %s28, 0
      %p175 = por %p173, %p174
      %p176 = scmp.ne.s32.totalorder %s164, %s165
      %p177 = scmp.eq.s32.totalorder %s29, 1
      %p178 = por %p176, %p177
      %p180 = scmp.ne.s32.totalorder %s165, %s179
      %p181 = scmp.eq.s32.totalorder %s29, 0
      %p182 = por %p180, %p181
      %s184 = sadd.s32 %s183, 1
      %p187 = scmp.eq.s32.totalorder %s23, 1
      %p188 = scmp.ne.s32.totalorder %s183, %s185
      %p189 = scmp.eq.s32.totalorder %s23, 0
      %p190 = por %p188, %p189
      %p191 = scmp.ne.s32.totalorder %s183, %s185
      %p192 = scmp.eq.s32.totalorder %s28, 1
      %p193 = por %p191, %p192
      %p194 = scmp.ne.s32.totalorder %s185, %s186
      %p195 = scmp.eq.s32.totalorder %s28, 0
      %p196 = por %p194, %p195
      %p197 = scmp.ne.s32.totalorder %s185, %s186
      %p198 = scmp.eq.s32.totalorder %s29, 1
      %p199 = por %p197, %p198
      %p201 = scmp.ne.s32.totalorder %s186, %s200
      %p202 = scmp.eq.s32.totalorder %s29, 0
      %p203 = por %p201, %p202
      %s205 = sadd.s32 %s204, 1
      %p208 = scmp.eq.s32.totalorder %s23, 1
      %p209 = scmp.ne.s32.totalorder %s204, %s206
      %p210 = scmp.eq.s32.totalorder %s23, 0
      %p211 = por %p209, %p210
      %p212 = scmp.ne.s32.totalorder %s204, %s206
      %p213 = scmp.eq.s32.totalorder %s28, 1
      %p214 = por %p212, %p213
      %p215 = scmp.ne.s32.totalorder %s206, %s207
      %p216 = scmp.eq.s32.totalorder %s28, 0
      %p217 = por %p215, %p216
      %p218 = scmp.ne.s32.totalorder %s206, %s207
      %p219 = scmp.eq.s32.totalorder %s29, 1
      %p220 = por %p218, %p219
      %p222 = scmp.ne.s32.totalorder %s207, %s221
      %p223 = scmp.eq.s32.totalorder %s29, 0
      %p224 = por %p222, %p223
      %s226 = sadd.s32 %s225, 1
      %p229 = scmp.eq.s32.totalorder %s23, 1
      %p230 = scmp.ne.s32.totalorder %s225, %s227
      %p231 = scmp.eq.s32.totalorder %s23, 0
      %p232 = por %p230, %p231
      %p233 = scmp.ne.s32.totalorder %s225, %s227
      %p234 = scmp.eq.s32.totalorder %s28, 1
      %p235 = por %p233, %p234
      %p236 = scmp.ne.s32.totalorder %s227, %s228
      %p237 = scmp.eq.s32.totalorder %s28, 0
      %p238 = por %p236, %p237
      %p239 = scmp.ne.s32.totalorder %s227, %s228
      %p240 = scmp.eq.s32.totalorder %s29, 1
      %p241 = por %p239, %p240
      %p243 = scmp.ne.s32.totalorder %s228, %s242
      %p244 = scmp.eq.s32.totalorder %s29, 0
      %p245 = por %p243, %p244
      %s247 = sadd.s32 %s246, 1
      %p250 = scmp.eq.s32.totalorder %s23, 1
      %p251 = scmp.ne.s32.totalorder %s246, %s248
      %p252 = scmp.eq.s32.totalorder %s23, 0
      %p253 = por %p251, %p252
      %p254 = scmp.ne.s32.totalorder %s246, %s248
      %p255 = scmp.eq.s32.totalorder %s28, 1
      %p256 = por %p254, %p255
      %p257 = scmp.ne.s32.totalorder %s248, %s249
      %p258 = scmp.eq.s32.totalorder %s28, 0
      %p259 = por %p257, %p258
      %p260 = scmp.ne.s32.totalorder %s248, %s249
      %p261 = scmp.eq.s32.totalorder %s29, 1
      %p262 = por %p260, %p261
      %p264 = scmp.ne.s32.totalorder %s249, %s263
      %p265 = scmp.eq.s32.totalorder %s29, 0
      %p266 = por %p264, %p265
      %s268 = sadd.s32 %s267, 1
      %p271 = scmp.eq.s32.totalorder %s23, 1
      %p272 = scmp.ne.s32.totalorder %s267, %s269
      %p273 = scmp.eq.s32.totalorder %s23, 0
      %p274 = por %p272, %p273
      %p275 = scmp.ne.s32.totalorder %s267, %s269
      %p276 = scmp.eq.s32.totalorder %s28, 1
      %p277 = por %p275, %p276
      %p278 = scmp.ne.s32.totalorder %s269, %s270
      %p279 = scmp.eq.s32.totalorder %s28, 0
      %p280 = por %p278, %p279
      %p281 = scmp.ne.s32.totalorder %s269, %s270
      %p282 = scmp.eq.s32.totalorder %s29, 1
      %p283 = por %p281, %p282
      %p285 = scmp.ne.s32.totalorder %s270, %s284
      %p286 = scmp.eq.s32.totalorder %s29, 0
      %p287 = por %p285, %p286
      %s289 = sadd.s32 %s288, 1
      %p292 = scmp.eq.s32.totalorder %s23, 1
      %p293 = scmp.ne.s32.totalorder %s288, %s290
      %p294 = scmp.eq.s32.totalorder %s23, 0
      %p295 = por %p293, %p294
      %p296 = scmp.ne.s32.totalorder %s288, %s290
      %p297 = scmp.eq.s32.totalorder %s28, 1
      %p298 = por %p296, %p297
      %p299 = scmp.ne.s32.totalorder %s290, %s291
      %p300 = scmp.eq.s32.totalorder %s28, 0
      %p301 = por %p299, %p300
      %p302 = scmp.ne.s32.totalorder %s290, %s291
      %p303 = scmp.eq.s32.totalorder %s29, 1
      %p304 = por %p302, %p303
      %p306 = scmp.ne.s32.totalorder %s291, %s305
      %p307 = scmp.eq.s32.totalorder %s29, 0
      %p308 = por %p306, %p307
      %s309 = ssub.s32 %s23, %s30
      %p310 = scmp.eq.s32.totalorder %s309, 0
      %s312 = sadd.s32 %s311, 1
      %s313 = scalar_select %p310, %s311, %s312
      %p316 = pneg %p310
      %p317 = scmp.eq.s32.totalorder %s23, 1
      %p318 = por %p316, %p317
      %p319 = scmp.ne.s32.totalorder %s311, %s314
      %p320 = scmp.eq.s32.totalorder %s23, 0
      %p321 = por %p319, %p320
      %p322 = scmp.ne.s32.totalorder %s311, %s314
      %p323 = scmp.eq.s32.totalorder %s28, 1
      %p324 = por %p322, %p323
      %p325 = scmp.ne.s32.totalorder %s314, %s315
      %p326 = scmp.eq.s32.totalorder %s28, 0
      %p327 = por %p325, %p326
      %p328 = scmp.ne.s32.totalorder %s314, %s315
      %p329 = scmp.eq.s32.totalorder %s29, 1
      %p330 = por %p328, %p329
      %p332 = scmp.ne.s32.totalorder %s315, %s331
      %p333 = scmp.eq.s32.totalorder %s29, 0
      %p334 = por %p332, %p333
      %p335 = scmp.le.s32.totalorder 1, %s23
      %p336 = scmp.lt.s32.totalorder %s23, 3
      %p337 = pnand %p335, %p336
      %p338 = pneg %p337
      // Predicated region
      $region9: #{tpu_custom_call.1} parent=5 // pred_check
        _
      $region10: #{tpu_custom_call.1} parent=5 // pred_check_branch
        %340 = sbr.rel (%p337) target = $region12
      $region11: #{tpu_custom_call.1} parent=5 // pred_region
        %s341 = ssub.s32 %s23, 1
        // Predicated region
        $region13: #{tpu_custom_call.1} parent=11 // pred_check
          %p342 = pneg %p70
        $region14: #{tpu_custom_call.1} parent=11 // pred_check_branch
          %344 = sbr.rel (%p342) target = $region16
        $region15: #{tpu_custom_call.1} parent=11 // pred_region
          %s346 = ssub.s32 128, 128
          %347 = vsyncadd [#allocation3], %s346
          %s349 = sshll.u32 [#allocation2], 4
          %s350 = int_to_ptr.vmem [resolvable:$true] %s349
          %352 = dma.hbm_to_vmem [thread:$0]  %s1, 128, %s350, [#allocation3]
        $region16: #{tpu_custom_call.1} parent=11 // pred_fallthru
          _
        // Predicated region
        $region17: #{tpu_custom_call.1} parent=11 // pred_check
          %p353 = pneg %p91
        $region18: #{tpu_custom_call.1} parent=11 // pred_check_branch
          %355 = sbr.rel (%p353) target = $region20
        $region19: #{tpu_custom_call.1} parent=11 // pred_region
          _
        $region20: #{tpu_custom_call.1} parent=11 // pred_fallthru
          _
        // Predicated region
        $region21: #{tpu_custom_call.1} parent=11 // pred_check
          %p356 = pneg %p112
        $region22: #{tpu_custom_call.1} parent=11 // pred_check_branch
          %358 = sbr.rel (%p356) target = $region24
        $region23: #{tpu_custom_call.1} parent=11 // pred_region
          _
        $region24: #{tpu_custom_call.1} parent=11 // pred_fallthru
          _
        // Predicated region
        $region25: #{tpu_custom_call.1} parent=11 // pred_check
          %p359 = pneg %p133
        $region26: #{tpu_custom_call.1} parent=11 // pred_check_branch
          %361 = sbr.rel (%p359) target = $region28
        $region27: #{tpu_custom_call.1} parent=11 // pred_region
          _
        $region28: #{tpu_custom_call.1} parent=11 // pred_fallthru
          _
        // Predicated region
        $region29: #{tpu_custom_call.1} parent=11 // pred_check
          %p362 = pneg %p154
        $region30: #{tpu_custom_call.1} parent=11 // pred_check_branch
          %364 = sbr.rel (%p362) target = $region32
        $region31: #{tpu_custom_call.1} parent=11 // pred_region
          _
        $region32: #{tpu_custom_call.1} parent=11 // pred_fallthru
          _
        // Predicated region
        $region33: #{tpu_custom_call.1} parent=11 // pred_check
          %p365 = pneg %p175
        $region34: #{tpu_custom_call.1} parent=11 // pred_check_branch
          %367 = sbr.rel (%p365) target = $region36
        $region35: #{tpu_custom_call.1} parent=11 // pred_region
          _
        $region36: #{tpu_custom_call.1} parent=11 // pred_fallthru
          _
        // Predicated region
        $region37: #{tpu_custom_call.1} parent=11 // pred_check
          %p368 = pneg %p196
        $region38: #{tpu_custom_call.1} parent=11 // pred_check_branch
          %370 = sbr.rel (%p368) target = $region40
        $region39: #{tpu_custom_call.1} parent=11 // pred_region
          _
        $region40: #{tpu_custom_call.1} parent=11 // pred_fallthru
          _
        // Predicated region
        $region41: #{tpu_custom_call.1} parent=11 // pred_check
          %p371 = pneg %p217
        $region42: #{tpu_custom_call.1} parent=11 // pred_check_branch
          %373 = sbr.rel (%p371) target = $region44
        $region43: #{tpu_custom_call.1} parent=11 // pred_region
          _
        $region44: #{tpu_custom_call.1} parent=11 // pred_fallthru
          _
        // Predicated region
        $region45: #{tpu_custom_call.1} parent=11 // pred_check
          %p374 = pneg %p238
        $region46: #{tpu_custom_call.1} parent=11 // pred_check_branch
          %376 = sbr.rel (%p374) target = $region48
        $region47: #{tpu_custom_call.1} parent=11 // pred_region
          _
        $region48: #{tpu_custom_call.1} parent=11 // pred_fallthru
          _
        // Predicated region
        $region49: #{tpu_custom_call.1} parent=11 // pred_check
          %p377 = pneg %p259
        $region50: #{tpu_custom_call.1} parent=11 // pred_check_branch
          %379 = sbr.rel (%p377) target = $region52
        $region51: #{tpu_custom_call.1} parent=11 // pred_region
          _
        $region52: #{tpu_custom_call.1} parent=11 // pred_fallthru
          _
        // Predicated region
        $region53: #{tpu_custom_call.1} parent=11 // pred_check
          %p380 = pneg %p280
        $region54: #{tpu_custom_call.1} parent=11 // pred_check_branch
          %382 = sbr.rel (%p380) target = $region56
        $region55: #{tpu_custom_call.1} parent=11 // pred_region
          _
        $region56: #{tpu_custom_call.1} parent=11 // pred_fallthru
          _
        // Predicated region
        $region57: #{tpu_custom_call.1} parent=11 // pred_check
          %p383 = pneg %p301
        $region58: #{tpu_custom_call.1} parent=11 // pred_check_branch
          %385 = sbr.rel (%p383) target = $region60
        $region59: #{tpu_custom_call.1} parent=11 // pred_region
          _
        $region60: #{tpu_custom_call.1} parent=11 // pred_fallthru
          _
      $region12: #{tpu_custom_call.1} parent=5 // pred_fallthru
        _
      %p386 = scmp.lt.s32.totalorder %s23, 2
      // Predicated region
      $region61: #{tpu_custom_call.1} parent=5 // pred_check
        %p387 = pneg %p386
      $region62: #{tpu_custom_call.1} parent=5 // pred_check_branch
        %389 = sbr.rel (%p387) target = $region64
      $region63: #{tpu_custom_call.1} parent=5 // pred_region
        // Predicated region
        $region65: #{tpu_custom_call.1} parent=63 // pred_check
          %p390 = pneg %p43
        $region66: #{tpu_custom_call.1} parent=63 // pred_check_branch
          %392 = sbr.rel (%p390) target = $region68
        $region67: #{tpu_custom_call.1} parent=63 // pred_region
          %s393 = smul.u32 2, %s23
          %p394 = scmp.lt.s32.totalorder %s393, 3
          %s395 = scalar_select %p394, %s393, 3
          %s396 = smul.addr %s395, 8
          %s397 = scalar_lea.vmem %s0, %s396
          %s398 = smul.u32 2, %s23
        $region68: #{tpu_custom_call.1} parent=63 // pred_fallthru
          _
      $region64: #{tpu_custom_call.1} parent=5 // pred_fallthru
        _
      %p399 = scmp.le.s32.totalorder 1, %s23
      %p400 = scmp.lt.s32.totalorder %s23, 3
      %p401 = pnand %p399, %p400
      %p402 = pneg %p401
      // Predicated region
      $region69: #{tpu_custom_call.1} parent=5 // pred_check
        _
      $region70: #{tpu_custom_call.1} parent=5 // pred_check_branch
        %404 = sbr.rel (%p401) target = $region72
      $region71: #{tpu_custom_call.1} parent=5 // pred_region
        %s405 = ssub.s32 %s23, 1
        // Predicated region
        $region73: #{tpu_custom_call.1} parent=71 // pred_check
          %p406 = pneg %p70
        $region74: #{tpu_custom_call.1} parent=71 // pred_check_branch
          %408 = sbr.rel (%p406) target = $region76
        $region75: #{tpu_custom_call.1} parent=71 // pred_region
          %409 = dma.done [#allocation3], 128
        $region76: #{tpu_custom_call.1} parent=71 // pred_fallthru
          _
        %s410 = smul.u32 2, %s28
        %p411 = scmp.lt.s32.totalorder %s410, 3
        %s412 = scalar_select %p411, %s410, 3
        %s413 = smul.addr %s412, 8
        %s414 = scalar_lea.vmem %s0, %s413
        %p415 = pneg %p49
        %p416 = pneg %p46
        %p417 = pneg %p70
        %p418 = pneg %p67
        %p419 = pneg %p91
        %p420 = pneg %p88
        %p421 = pneg %p112
        %p422 = pneg %p109
        %p423 = pneg %p133
        %p424 = pneg %p130
        %p425 = pneg %p154
        %p426 = pneg %p151
        %p427 = pneg %p175
        %p428 = pneg %p172
        %p429 = pneg %p196
        %p430 = pneg %p193
        %p431 = pneg %p217
        %p432 = pneg %p214
        %p433 = pneg %p238
        %p434 = pneg %p235
        %p435 = pneg %p259
        %p436 = pneg %p256
        %p437 = pneg %p280
        %p438 = pneg %p277
        %p439 = pneg %p301
        %p440 = pneg %p298
        %p441 = pneg %p327
        %p442 = pneg %p324
        %s443 = sand.u32 %s314, 1
        %s444 = scalar_lea.sflag [#allocation4], %s443
        %s445 = sand.u32 %s314, 1
        %s446 = smul.addr %s445, 16
        %s447 = scalar_lea.vmem [#allocation5], %s446
        %s448 = smul.u32 2, %s28
        %p449 = scmp.lt.s32.totalorder %s448, 3
        %s450 = scalar_select %p449, %s448, 3
        %s451 = smul.addr %s450, 8
        %s452 = scalar_lea.vmem %s0, %s451
        %s453 = smul.u32 2, %s28
        %s454 = smul.u32 2, %s28
        %v456 = vld [vmem:[%s452] sm:$0xff]
        %v457 = vld [vmem:[%s452 + $0x8] sm:$0xff]
        %vm458 = vcmask 261120
        %v459 = vsel %vm458, %v456, 0.0
        %460 = vadd.xlane.f32.xlu0 %v459
        %v461 = vpop.xlane.xlu0 %460
        %v462 = vsel %vm458, %v457, 0.0
        %463 = vadd.xlane.f32.xlu0 %v462
        %v464 = vpop.xlane.xlu0 %463
        %v465 = vrcp.pop 32.0
        %v466 = vmul.f32 %v461, %v465
        %v467 = vmul.f32 %v464, %v465
        %v468 = vsub.f32 %v456, %v466
        %v469 = vsub.f32 %v457, %v467
        %v470 = vmul.f32 %v468, %v468
        %v471 = vmul.f32 %v469, %v469
        %v472 = vsel %vm458, %v470, 0.0
        %473 = vadd.xlane.f32.xlu0 %v472
        %v474 = vpop.xlane.xlu0 %473
        %v475 = vsel %vm458, %v471, 0.0
        %476 = vadd.xlane.f32.xlu0 %v475
        %v477 = vpop.xlane.xlu0 %476
        %v478 = vmul.f32 %v474, %v465
        %v479 = vmul.f32 %v477, %v465
        %v480 = vadd.f32 %v478, 1e-05
        %v481 = vadd.f32 %v479, 1e-05
        %v482 = vrsqrt.pop %v480
        %v483 = vrsqrt.pop %v481
        %v484 = vmul.f32 %v468, %v482
        %v485 = vmul.f32 %v469, %v483
        %v486 = vld [vmem:[%s2] sm:$0x1]
        %v488 = vlaneseq
        %v489 = vshrl.u32 %v488, 7
        %v490 = vsub.s32 0, %v489
        %v491 = vrot.slane %v486, %v490
        %v493 = vmul.f32 %v484, %v491
        %v494 = vmul.f32 %v485, %v491
        %v495 = vld [vmem:[%s3] sm:$0x1]
        %v497 = vlaneseq
        %v498 = vshrl.u32 %v497, 7
        %v499 = vsub.s32 0, %v498
        %v500 = vrot.slane %v495, %v499
        %v502 = vadd.f32 %v493, %v500
        %v503 = vadd.f32 %v494, %v500
        %v504 = vpack.c.bf16 %v503, %v502
        %v505 = vld [vmem:[%s4] sm:$0xf]
        %v506 = vld [vmem:[%s4 + $0x4] sm:$0xf]
        %v507 = vld [vmem:[%s4 + $0x8] sm:$0xf]
        %v508 = vld [vmem:[%s4 + $0xc] sm:$0xf]
        %v513 = vunpack.c.l.b16 %v505
        %v514 = vunpack.c.l.b16 %v506
        %v515 = vunpack.c.l.b16 %v507
        %v516 = vunpack.c.l.b16 %v508
        %v517 = vpack.c.b16 %v514, %v513
        %v518 = vpack.c.b16 %v516, %v515
        %v522 = vsel %vm458, %v504, 0
        %524 = vmatprep.subr.bf16.mxu0 0
        %525 = vmatpush1.bf16.msra.mxu0 %v517
        %526 = vmatprep.subr.bf16.mxu0 0
        %527 = vmatpush1.bf16.msra.mxu0 %v518
        %528 = vmatprep.subr.bf16.mxu0 0
        %529 = vmatpush1.bf16.msra.mxu0 0
        %530 = vmatprep.subr.bf16.mxu0 0
        %531 = vmatpush1.bf16.msra.mxu0 0
        %532 = vmatprep.subr.bf16.mxu0 0
        %533 = vmatpush1.bf16.msra.mxu0 0
        %534 = vmatprep.subr.bf16.mxu0 0
        %535 = vmatpush1.bf16.msra.mxu0 0
        %536 = vmatprep.subr.bf16.mxu0 0
        %537 = vmatpush1.bf16.msra.mxu0 0
        %538 = vmatprep.subr.bf16.mxu0 0
        %539 = vmatpush1.bf16.msra.mxu0 0
        %540 = vmatprep.subr.bf16.mxu0 0
        %541 = vmatpush1.bf16.msra.mxu0 0
        %542 = vmatprep.subr.bf16.mxu0 0
        %543 = vmatpush1.bf16.msra.mxu0 0
        %544 = vmatprep.subr.bf16.mxu0 0
        %545 = vmatpush1.bf16.msra.mxu0 0
        %546 = vmatprep.subr.bf16.mxu0 0
        %547 = vmatpush1.bf16.msra.mxu0 0
        %548 = vmatprep.subr.bf16.mxu0 0
        %549 = vmatpush1.bf16.msra.mxu0 0
        %550 = vmatprep.subr.bf16.mxu0 0
        %551 = vmatpush1.bf16.msra.mxu0 0
        %552 = vmatprep.subr.bf16.mxu0 0
        %553 = vmatpush1.bf16.msra.mxu0 0
        %554 = vmatprep.subr.bf16.mxu0 0
        %555 = vmatpush1.bf16.msra.mxu0 0
        %556 = vmatprep.mubr.bf16.mxu0 0
        %557 = vmatmul.mubr.bf16.gmra.mrb[0].mxu0 %v522
        %v558 = vpop.f32.mrb[0].mxu0
        %v559 = vadd.f32 0.0, %v558
        %v560 = vpop.f32.mrb[0].mxu0
        %v561 = vpop.f32.mrb[0].mxu0
        %v562 = vadd.f32 0.0, %v561
        %v563 = vpop.f32.mrb[0].mxu0
        %564 = vdwg.mxu0
        %v565 = vld [vmem:[#allocation2] sm:$0xff]
        %v566 = vmul.f32 %v559, 0.0009765625
        %v567 = vpack.c.bf16 %v566, %v566
        %v568 = vpack.c.bf16 %v559, %v559
        %570 = vrot.lane.b32.xlu0 %v568, 96
        %v571 = vpop.permute.xlu0 %570
        %vm572 = vcmask 64512
        %v574 = vsel %vm572, %v567, 0
        %v577 = vsel %vm572, %v571, 0
        %579 = vmatprep.subr.bf16.mxu0 0
        %580 = vmatpush1.bf16.xpose.msra.mxu0 %v577
        %581 = vmatprep.subr.bf16.mxu0 0
        %582 = vmatpush1.bf16.xpose.msra.mxu0 0
        %583 = vmatprep.subr.bf16.mxu0 0
        %584 = vmatpush1.bf16.xpose.msra.mxu0 0
        %585 = vmatprep.subr.bf16.mxu0 0
        %586 = vmatpush1.bf16.xpose.msra.mxu0 0
        %587 = vmatprep.subr.bf16.mxu0 0
        %588 = vmatpush1.bf16.xpose.msra.mxu0 0
        %589 = vmatprep.subr.bf16.mxu0 0
        %590 = vmatpush1.bf16.xpose.msra.mxu0 0
        %591 = vmatprep.subr.bf16.mxu0 0
        %592 = vmatpush1.bf16.xpose.msra.mxu0 0
        %593 = vmatprep.subr.bf16.mxu0 0
        %594 = vmatpush1.bf16.xpose.msra.mxu0 0
        %595 = vmatprep.subr.bf16.mxu0 0
        %596 = vmatpush1.bf16.xpose.msra.mxu0 0
        %597 = vmatprep.subr.bf16.mxu0 0
        %598 = vmatpush1.bf16.xpose.msra.mxu0 0
        %599 = vmatprep.subr.bf16.mxu0 0
        %600 = vmatpush1.bf16.xpose.msra.mxu0 0
        %601 = vmatprep.subr.bf16.mxu0 0
        %602 = vmatpush1.bf16.xpose.msra.mxu0 0
        %603 = vmatprep.subr.bf16.mxu0 0
        %604 = vmatpush1.bf16.xpose.msra.mxu0 0
        %605 = vmatprep.subr.bf16.mxu0 0
        %606 = vmatpush1.bf16.xpose.msra.mxu0 0
        %607 = vmatprep.subr.bf16.mxu0 0
        %608 = vmatpush1.bf16.xpose.msra.mxu0 0
        %609 = vmatprep.subr.bf16.mxu0 0
        %610 = vmatpush1.bf16.xpose.msra.mxu0 0
        %611 = vmatprep.mubr.bf16.mxu0 0
        %612 = vmatmul.mubr.bf16.gmra.mrb[0].mxu0 %v574
        %v613 = vpop.f32.mrb[0].mxu0
        %v614 = vadd.f32 %v565, %v613
        %v615 = vpop.f32.mrb[0].mxu0
        %v616 = vpop.f32.mrb[0].mxu0
        %v617 = vpop.f32.mrb[0].mxu0
        %618 = vdwg.mxu0
        %v619 = vsel %vm572, %v614, -inf
        %620 = vmax.xlane.f32.xlu0 %v619
        %v621 = vpop.xlane.xlu0 %620
        %v622 = vsub.f32 %v614, %v621
        %v623 = vmul.f32 %v622, 1.442695
        %v624 = vpow.pop %v623
        %v625 = vsel %vm572, %v624, 0.0
        %626 = vadd.xlane.f32.xlu0 %v625
        %v627 = vpop.xlane.xlu0 %626
        %v628 = vrcp.pop %v627
        %v629 = vmul.f32 %v624, %v628
        %v630 = vpack.c.bf16 %v629, %v629
        %631 = vrot.lane.b32.xlu0 %v568, 64
        %v632 = vpop.permute.xlu0 %631
        %v634 = vsel %vm572, %v630, 0
        %vm636 = vcmask 1043456
        %v638 = vsel %vm636, %v632, 0
        %640 = vmatprep.subr.bf16.mxu0 0
        %641 = vmatpush1.bf16.msra.mxu0 %v638
        %642 = vmatprep.subr.bf16.mxu0 0
        %643 = vmatpush1.bf16.msra.mxu0 0
        %644 = vmatprep.subr.bf16.mxu0 0
        %645 = vmatpush1.bf16.msra.mxu0 0
        %646 = vmatprep.subr.bf16.mxu0 0
        %647 = vmatpush1.bf16.msra.mxu0 0
        %648 = vmatprep.subr.bf16.mxu0 0
        %649 = vmatpush1.bf16.msra.mxu0 0
        %650 = vmatprep.subr.bf16.mxu0 0
        %651 = vmatpush1.bf16.msra.mxu0 0
        %652 = vmatprep.subr.bf16.mxu0 0
        %653 = vmatpush1.bf16.msra.mxu0 0
        %654 = vmatprep.subr.bf16.mxu0 0
        %655 = vmatpush1.bf16.msra.mxu0 0
        %656 = vmatprep.subr.bf16.mxu0 0
        %657 = vmatpush1.bf16.msra.mxu0 0
        %658 = vmatprep.subr.bf16.mxu0 0
        %659 = vmatpush1.bf16.msra.mxu0 0
        %660 = vmatprep.subr.bf16.mxu0 0
        %661 = vmatpush1.bf16.msra.mxu0 0
        %662 = vmatprep.subr.bf16.mxu0 0
        %663 = vmatpush1.bf16.msra.mxu0 0
        %664 = vmatprep.subr.bf16.mxu0 0
        %665 = vmatpush1.bf16.msra.mxu0 0
        %666 = vmatprep.subr.bf16.mxu0 0
        %667 = vmatpush1.bf16.msra.mxu0 0
        %668 = vmatprep.subr.bf16.mxu0 0
        %669 = vmatpush1.bf16.msra.mxu0 0
        %670 = vmatprep.subr.bf16.mxu0 0
        %671 = vmatpush1.bf16.msra.mxu0 0
        %672 = vmatprep.mubr.bf16.mxu0 0
        %673 = vmatmul.mubr.bf16.gmra.mrb[0].mxu0 %v634
        %v674 = vpop.f32.mrb[0].mxu0
        %v675 = vadd.f32 0.0, %v674
        %v676 = vpop.f32.mrb[0].mxu0
        %v677 = vpop.f32.mrb[0].mxu0
        %v678 = vpop.f32.mrb[0].mxu0
        %679 = vdwg.mxu0
        %v680 = vpack.c.bf16 %v675, %v675
        %v681 = vld [vmem:[%s5] sm:$0xf]
        %683 = vrot.lane.b32.xlu0 %v567, 120
        %v684 = vpop.permute.xlu0 %683
        %685 = vrot.lane.b32.xlu0 %v568, 88
        %v686 = vpop.permute.xlu0 %685
        %v688 = vsel %vm572, %v684, 0
        %v691 = vsel %vm572, %v686, 0
        %693 = vmatprep.subr.bf16.mxu0 0
        %694 = vmatpush1.bf16.xpose.msra.mxu0 %v691
        %695 = vmatprep.subr.bf16.mxu0 0
        %696 = vmatpush1.bf16.xpose.msra.mxu0 0
        %697 = vmatprep.subr.bf16.mxu0 0
        %698 = vmatpush1.bf16.xpose.msra.mxu0 0
        %699 = vmatprep.subr.bf16.mxu0 0
        %700 = vmatpush1.bf16.xpose.msra.mxu0 0
        %701 = vmatprep.subr.bf16.mxu0 0
        %702 = vmatpush1.bf16.xpose.msra.mxu0 0
        %703 = vmatprep.subr.bf16.mxu0 0
        %704 = vmatpush1.bf16.xpose.msra.mxu0 0
        %705 = vmatprep.subr.bf16.mxu0 0
        %706 = vmatpush1.bf16.xpose.msra.mxu0 0
        %707 = vmatprep.subr.bf16.mxu0 0
        %708 = vmatpush1.bf16.xpose.msra.mxu0 0
        %709 = vmatprep.subr.bf16.mxu0 0
        %710 = vmatpush1.bf16.xpose.msra.mxu0 0
        %711 = vmatprep.subr.bf16.mxu0 0
        %712 = vmatpush1.bf16.xpose.msra.mxu0 0
        %713 = vmatprep.subr.bf16.mxu0 0
        %714 = vmatpush1.bf16.xpose.msra.mxu0 0
        %715 = vmatprep.subr.bf16.mxu0 0
        %716 = vmatpush1.bf16.xpose.msra.mxu0 0
        %717 = vmatprep.subr.bf16.mxu0 0
        %718 = vmatpush1.bf16.xpose.msra.mxu0 0
        %719 = vmatprep.subr.bf16.mxu0 0
        %720 = vmatpush1.bf16.xpose.msra.mxu0 0
        %721 = vmatprep.subr.bf16.mxu0 0
        %722 = vmatpush1.bf16.xpose.msra.mxu0 0
        %723 = vmatprep.subr.bf16.mxu0 0
        %724 = vmatpush1.bf16.xpose.msra.mxu0 0
        %725 = vmatprep.mubr.bf16.mxu0 0
        %726 = vmatmul.mubr.bf16.gmra.mrb[0].mxu0 %v688
        %v727 = vpop.f32.mrb[0].mxu0
        %v728 = vadd.f32 %v565, %v727
        %v729 = vpop.f32.mrb[0].mxu0
        %v730 = vpop.f32.mrb[0].mxu0
        %v731 = vpop.f32.mrb[0].mxu0
        %732 = vdwg.mxu0
        %v733 = vsel %vm572, %v728, -inf
        %734 = vmax.xlane.f32.xlu0 %v733
        %v735 = vpop.xlane.xlu0 %734
        %v736 = vsub.f32 %v728, %v735
        %v737 = vmul.f32 %v736, 1.442695
        %v738 = vpow.pop %v737
        %v739 = vsel %vm572, %v738, 0.0
        %740 = vadd.xlane.f32.xlu0 %v739
        %v741 = vpop.xlane.xlu0 %740
        %v742 = vrcp.pop %v741
        %v743 = vmul.f32 %v738, %v742
        %v744 = vpack.c.bf16 %v743, %v743
        %745 = vrot.lane.b32.xlu0 %v568, 56
        %v746 = vpop.permute.xlu0 %745
        %v748 = vsel %vm572, %v744, 0
        %v751 = vsel %vm636, %v746, 0
        %753 = vmatprep.subr.bf16.mxu0 0
        %754 = vmatpush1.bf16.msra.mxu0 %v751
        %755 = vmatprep.subr.bf16.mxu0 0
        %756 = vmatpush1.bf16.msra.mxu0 0
        %757 = vmatprep.subr.bf16.mxu0 0
        %758 = vmatpush1.bf16.msra.mxu0 0
        %759 = vmatprep.subr.bf16.mxu0 0
        %760 = vmatpush1.bf16.msra.mxu0 0
        %761 = vmatprep.subr.bf16.mxu0 0
        %762 = vmatpush1.bf16.msra.mxu0 0
        %763 = vmatprep.subr.bf16.mxu0 0
        %764 = vmatpush1.bf16.msra.mxu0 0
        %765 = vmatprep.subr.bf16.mxu0 0
        %766 = vmatpush1.bf16.msra.mxu0 0
        %767 = vmatprep.subr.bf16.mxu0 0
        %768 = vmatpush1.bf16.msra.mxu0 0
        %769 = vmatprep.subr.bf16.mxu0 0
        %770 = vmatpush1.bf16.msra.mxu0 0
        %771 = vmatprep.subr.bf16.mxu0 0
        %772 = vmatpush1.bf16.msra.mxu0 0
        %773 = vmatprep.subr.bf16.mxu0 0
        %774 = vmatpush1.bf16.msra.mxu0 0
        %775 = vmatprep.subr.bf16.mxu0 0
        %776 = vmatpush1.bf16.msra.mxu0 0
        %777 = vmatprep.subr.bf16.mxu0 0
        %778 = vmatpush1.bf16.msra.mxu0 0
        %779 = vmatprep.subr.bf16.mxu0 0
        %780 = vmatpush1.bf16.msra.mxu0 0
        %781 = vmatprep.subr.bf16.mxu0 0
        %782 = vmatpush1.bf16.msra.mxu0 0
        %783 = vmatprep.subr.bf16.mxu0 0
        %784 = vmatpush1.bf16.msra.mxu0 0
        %785 = vmatprep.mubr.bf16.mxu0 0
        %786 = vmatmul.mubr.bf16.gmra.mrb[0].mxu0 %v748
        %v787 = vpop.f32.mrb[0].mxu0
        %v788 = vadd.f32 0.0, %v787
        %v789 = vpop.f32.mrb[0].mxu0
        %v790 = vpop.f32.mrb[0].mxu0
        %v791 = vpop.f32.mrb[0].mxu0
        %792 = vdwg.mxu0
        %v793 = vpack.c.bf16 %v788, %v788
        %v794 = vld [vmem:[%s5 + $0x4] sm:$0xf]
        %v796 = vsel %vm572, %v793, 0
        %v799 = vsel %vm636, %v794, 0
        %801 = vmatprep.subr.bf16.mxu0 0
        %802 = vmatpush1.bf16.msra.mxu0 %v799
        %803 = vmatprep.subr.bf16.mxu0 0
        %804 = vmatpush1.bf16.msra.mxu0 0
        %805 = vmatprep.subr.bf16.mxu0 0
        %806 = vmatpush1.bf16.msra.mxu0 0
        %807 = vmatprep.subr.bf16.mxu0 0
        %808 = vmatpush1.bf16.msra.mxu0 0
        %809 = vmatprep.subr.bf16.mxu0 0
        %810 = vmatpush1.bf16.msra.mxu0 0
        %811 = vmatprep.subr.bf16.mxu0 0
        %812 = vmatpush1.bf16.msra.mxu0 0
        %813 = vmatprep.subr.bf16.mxu0 0
        %814 = vmatpush1.bf16.msra.mxu0 0
        %815 = vmatprep.subr.bf16.mxu0 0
        %816 = vmatpush1.bf16.msra.mxu0 0
        %817 = vmatprep.subr.bf16.mxu0 0
        %818 = vmatpush1.bf16.msra.mxu0 0
        %819 = vmatprep.subr.bf16.mxu0 0
        %820 = vmatpush1.bf16.msra.mxu0 0
        %821 = vmatprep.subr.bf16.mxu0 0
        %822 = vmatpush1.bf16.msra.mxu0 0
        %823 = vmatprep.subr.bf16.mxu0 0
        %824 = vmatpush1.bf16.msra.mxu0 0
        %825 = vmatprep.subr.bf16.mxu0 0
        %826 = vmatpush1.bf16.msra.mxu0 0
        %827 = vmatprep.subr.bf16.mxu0 0
        %828 = vmatpush1.bf16.msra.mxu0 0
        %829 = vmatprep.subr.bf16.mxu0 0
        %830 = vmatpush1.bf16.msra.mxu0 0
        %831 = vmatprep.subr.bf16.mxu0 0
        %832 = vmatpush1.bf16.msra.mxu0 0
        %833 = vmatprep.mubr.bf16.mxu0 0
        %834 = vmatmul.mubr.bf16.gmra.mrb[0].mxu0 %v796
        %v835 = vpop.f32.mrb[0].mxu0
        %v836 = vadd.f32 0.0, %v835
        %v837 = vpop.f32.mrb[0].mxu0
        %v838 = vpop.f32.mrb[0].mxu0
        %v839 = vpop.f32.mrb[0].mxu0
        %840 = vdwg.mxu0
        %v842 = vsel %vm572, %v680, 0
        %v845 = vsel %vm636, %v681, 0
        %847 = vmatprep.subr.bf16.mxu0 0
        %848 = vmatpush1.bf16.msra.mxu0 %v845
        %849 = vmatprep.subr.bf16.mxu0 0
        %850 = vmatpush1.bf16.msra.mxu0 0
        %851 = vmatprep.subr.bf16.mxu0 0
        %852 = vmatpush1.bf16.msra.mxu0 0
        %853 = vmatprep.subr.bf16.mxu0 0
        %854 = vmatpush1.bf16.msra.mxu0 0
        %855 = vmatprep.subr.bf16.mxu0 0
        %856 = vmatpush1.bf16.msra.mxu0 0
        %857 = vmatprep.subr.bf16.mxu0 0
        %858 = vmatpush1.bf16.msra.mxu0 0
        %859 = vmatprep.subr.bf16.mxu0 0
        %860 = vmatpush1.bf16.msra.mxu0 0
        %861 = vmatprep.subr.bf16.mxu0 0
        %862 = vmatpush1.bf16.msra.mxu0 0
        %863 = vmatprep.subr.bf16.mxu0 0
        %864 = vmatpush1.bf16.msra.mxu0 0
        %865 = vmatprep.subr.bf16.mxu0 0
        %866 = vmatpush1.bf16.msra.mxu0 0
        %867 = vmatprep.subr.bf16.mxu0 0
        %868 = vmatpush1.bf16.msra.mxu0 0
        %869 = vmatprep.subr.bf16.mxu0 0
        %870 = vmatpush1.bf16.msra.mxu0 0
        %871 = vmatprep.subr.bf16.mxu0 0
        %872 = vmatpush1.bf16.msra.mxu0 0
        %873 = vmatprep.subr.bf16.mxu0 0
        %874 = vmatpush1.bf16.msra.mxu0 0
        %875 = vmatprep.subr.bf16.mxu0 0
        %876 = vmatpush1.bf16.msra.mxu0 0
        %877 = vmatprep.subr.bf16.mxu0 0
        %878 = vmatpush1.bf16.msra.mxu0 0
        %879 = vmatprep.mubr.bf16.mxu0 0
        %880 = vmatmul.mubr.bf16.gmra.mrb[0].mxu0 %v842
        %v881 = vpop.f32.mrb[0].mxu0
        %v882 = vadd.f32 %v836, %v881
        %v883 = vpop.f32.mrb[0].mxu0
        %v884 = vpop.f32.mrb[0].mxu0
        %v885 = vpop.f32.mrb[0].mxu0
        %886 = vdwg.mxu0
        %887 = vrot.lane.b32.xlu0 %v567, 112
        %v888 = vpop.permute.xlu0 %887
        %889 = vrot.lane.b32.xlu0 %v568, 80
        %v890 = vpop.permute.xlu0 %889
        %v892 = vsel %vm572, %v888, 0
        %v895 = vsel %vm572, %v890, 0
        %897 = vmatprep.subr.bf16.mxu0 0
        %898 = vmatpush1.bf16.xpose.msra.mxu0 %v895
        %899 = vmatprep.subr.bf16.mxu0 0
        %900 = vmatpush1.bf16.xpose.msra.mxu0 0
        %901 = vmatprep.subr.bf16.mxu0 0
        %902 = vmatpush1.bf16.xpose.msra.mxu0 0
        %903 = vmatprep.subr.bf16.mxu0 0
        %904 = vmatpush1.bf16.xpose.msra.mxu0 0
        %905 = vmatprep.subr.bf16.mxu0 0
        %906 = vmatpush1.bf16.xpose.msra.mxu0 0
        %907 = vmatprep.subr.bf16.mxu0 0
        %908 = vmatpush1.bf16.xpose.msra.mxu0 0
        %909 = vmatprep.subr.bf16.mxu0 0
        %910 = vmatpush1.bf16.xpose.msra.mxu0 0
        %911 = vmatprep.subr.bf16.mxu0 0
        %912 = vmatpush1.bf16.xpose.msra.mxu0 0
        %913 = vmatprep.subr.bf16.mxu0 0
        %914 = vmatpush1.bf16.xpose.msra.mxu0 0
        %915 = vmatprep.subr.bf16.mxu0 0
        %916 = vmatpush1.bf16.xpose.msra.mxu0 0
        %917 = vmatprep.subr.bf16.mxu0 0
        %918 = vmatpush1.bf16.xpose.msra.mxu0 0
        %919 = vmatprep.subr.bf16.mxu0 0
        %920 = vmatpush1.bf16.xpose.msra.mxu0 0
        %921 = vmatprep.subr.bf16.mxu0 0
        %922 = vmatpush1.bf16.xpose.msra.mxu0 0
        %923 = vmatprep.subr.bf16.mxu0 0
        %924 = vmatpush1.bf16.xpose.msra.mxu0 0
        %925 = vmatprep.subr.bf16.mxu0 0
        %926 = vmatpush1.bf16.xpose.msra.mxu0 0
        %927 = vmatprep.subr.bf16.mxu0 0
        %928 = vmatpush1.bf16.xpose.msra.mxu0 0
        %929 = vmatprep.mubr.bf16.mxu0 0
        %930 = vmatmul.mubr.bf16.gmra.mrb[0].mxu0 %v892
        %v931 = vpop.f32.mrb[0].mxu0
        %v932 = vadd.f32 %v565, %v931
        %v933 = vpop.f32.mrb[0].mxu0
        %v934 = vpop.f32.mrb[0].mxu0
        %v935 = vpop.f32.mrb[0].mxu0
        %936 = vdwg.mxu0
        %v937 = vsel %vm572, %v932, -inf
        %938 = vmax.xlane.f32.xlu0 %v937
        %v939 = vpop.xlane.xlu0 %938
        %v940 = vsub.f32 %v932, %v939
        %v941 = vmul.f32 %v940, 1.442695
        %v942 = vpow.pop %v941
        %v943 = vsel %vm572, %v942, 0.0
        %944 = vadd.xlane.f32.xlu0 %v943
        %v945 = vpop.xlane.xlu0 %944
        %v946 = vrcp.pop %v945
        %v947 = vmul.f32 %v942, %v946
        %v948 = vpack.c.bf16 %v947, %v947
        %949 = vrot.lane.b32.xlu0 %v568, 48
        %v950 = vpop.permute.xlu0 %949
        %v952 = vsel %vm572, %v948, 0
        %v955 = vsel %vm636, %v950, 0
        %957 = vmatprep.subr.bf16.mxu0 0
        %958 = vmatpush1.bf16.msra.mxu0 %v955
        %959 = vmatprep.subr.bf16.mxu0 0
        %960 = vmatpush1.bf16.msra.mxu0 0
        %961 = vmatprep.subr.bf16.mxu0 0
        %962 = vmatpush1.bf16.msra.mxu0 0
        %963 = vmatprep.subr.bf16.mxu0 0
        %964 = vmatpush1.bf16.msra.mxu0 0
        %965 = vmatprep.subr.bf16.mxu0 0
        %966 = vmatpush1.bf16.msra.mxu0 0
        %967 = vmatprep.subr.bf16.mxu0 0
        %968 = vmatpush1.bf16.msra.mxu0 0
        %969 = vmatprep.subr.bf16.mxu0 0
        %970 = vmatpush1.bf16.msra.mxu0 0
        %971 = vmatprep.subr.bf16.mxu0 0
        %972 = vmatpush1.bf16.msra.mxu0 0
        %973 = vmatprep.subr.bf16.mxu0 0
        %974 = vmatpush1.bf16.msra.mxu0 0
        %975 = vmatprep.subr.bf16.mxu0 0
        %976 = vmatpush1.bf16.msra.mxu0 0
        %977 = vmatprep.subr.bf16.mxu0 0
        %978 = vmatpush1.bf16.msra.mxu0 0
        %979 = vmatprep.subr.bf16.mxu0 0
        %980 = vmatpush1.bf16.msra.mxu0 0
        %981 = vmatprep.subr.bf16.mxu0 0
        %982 = vmatpush1.bf16.msra.mxu0 0
        %983 = vmatprep.subr.bf16.mxu0 0
        %984 = vmatpush1.bf16.msra.mxu0 0
        %985 = vmatprep.subr.bf16.mxu0 0
        %986 = vmatpush1.bf16.msra.mxu0 0
        %987 = vmatprep.subr.bf16.mxu0 0
        %988 = vmatpush1.bf16.msra.mxu0 0
        %989 = vmatprep.mubr.bf16.mxu0 0
        %990 = vmatmul.mubr.bf16.gmra.mrb[0].mxu0 %v952
        %v991 = vpop.f32.mrb[0].mxu0
        %v992 = vadd.f32 0.0, %v991
        %v993 = vpop.f32.mrb[0].mxu0
        %v994 = vpop.f32.mrb[0].mxu0
        %v995 = vpop.f32.mrb[0].mxu0
        %996 = vdwg.mxu0
        %v997 = vpack.c.bf16 %v992, %v992
        %v998 = vld [vmem:[%s5 + $0x8] sm:$0xf]
        %v1000 = vsel %vm572, %v997, 0
        %v1003 = vsel %vm636, %v998, 0
        %1005 = vmatprep.subr.bf16.mxu0 0
        %1006 = vmatpush1.bf16.msra.mxu0 %v1003
        %1007 = vmatprep.subr.bf16.mxu0 0
        %1008 = vmatpush1.bf16.msra.mxu0 0
        %1009 = vmatprep.subr.bf16.mxu0 0
        %1010 = vmatpush1.bf16.msra.mxu0 0
        %1011 = vmatprep.subr.bf16.mxu0 0
        %1012 = vmatpush1.bf16.msra.mxu0 0
        %1013 = vmatprep.subr.bf16.mxu0 0
        %1014 = vmatpush1.bf16.msra.mxu0 0
        %1015 = vmatprep.subr.bf16.mxu0 0
        %1016 = vmatpush1.bf16.msra.mxu0 0
        %1017 = vmatprep.subr.bf16.mxu0 0
        %1018 = vmatpush1.bf16.msra.mxu0 0
        %1019 = vmatprep.subr.bf16.mxu0 0
        %1020 = vmatpush1.bf16.msra.mxu0 0
        %1021 = vmatprep.subr.bf16.mxu0 0
        %1022 = vmatpush1.bf16.msra.mxu0 0
        %1023 = vmatprep.subr.bf16.mxu0 0
        %1024 = vmatpush1.bf16.msra.mxu0 0
        %1025 = vmatprep.subr.bf16.mxu0 0
        %1026 = vmatpush1.bf16.msra.mxu0 0
        %1027 = vmatprep.subr.bf16.mxu0 0
        %1028 = vmatpush1.bf16.msra.mxu0 0
        %1029 = vmatprep.subr.bf16.mxu0 0
        %1030 = vmatpush1.bf16.msra.mxu0 0
        %1031 = vmatprep.subr.bf16.mxu0 0
        %1032 = vmatpush1.bf16.msra.mxu0 0
        %1033 = vmatprep.subr.bf16.mxu0 0
        %1034 = vmatpush1.bf16.msra.mxu0 0
        %1035 = vmatprep.subr.bf16.mxu0 0
        %1036 = vmatpush1.bf16.msra.mxu0 0
        %1037 = vmatprep.mubr.bf16.mxu0 0
        %1038 = vmatmul.mubr.bf16.gmra.mrb[0].mxu0 %v1000
        %v1039 = vpop.f32.mrb[0].mxu0
        %v1040 = vadd.f32 0.0, %v1039
        %v1041 = vpop.f32.mrb[0].mxu0
        %v1042 = vpop.f32.mrb[0].mxu0
        %v1043 = vpop.f32.mrb[0].mxu0
        %1044 = vdwg.mxu0
        %v1045 = vadd.f32 %v882, %v1040
        %1046 = vrot.lane.b32.xlu0 %v567, 104
        %v1047 = vpop.permute.xlu0 %1046
        %1048 = vrot.lane.b32.xlu0 %v568, 72
        %v1049 = vpop.permute.xlu0 %1048
        %v1051 = vsel %vm572, %v1047, 0
        %v1054 = vsel %vm572, %v1049, 0
        %1056 = vmatprep.subr.bf16.mxu0 0
        %1057 = vmatpush1.bf16.xpose.msra.mxu0 %v1054
        %1058 = vmatprep.subr.bf16.mxu0 0
        %1059 = vmatpush1.bf16.xpose.msra.mxu0 0
        %1060 = vmatprep.subr.bf16.mxu0 0
        %1061 = vmatpush1.bf16.xpose.msra.mxu0 0
        %1062 = vmatprep.subr.bf16.mxu0 0
        %1063 = vmatpush1.bf16.xpose.msra.mxu0 0
        %1064 = vmatprep.subr.bf16.mxu0 0
        %1065 = vmatpush1.bf16.xpose.msra.mxu0 0
        %1066 = vmatprep.subr.bf16.mxu0 0
        %1067 = vmatpush1.bf16.xpose.msra.mxu0 0
        %1068 = vmatprep.subr.bf16.mxu0 0
        %1069 = vmatpush1.bf16.xpose.msra.mxu0 0
        %1070 = vmatprep.subr.bf16.mxu0 0
        %1071 = vmatpush1.bf16.xpose.msra.mxu0 0
        %1072 = vmatprep.subr.bf16.mxu0 0
        %1073 = vmatpush1.bf16.xpose.msra.mxu0 0
        %1074 = vmatprep.subr.bf16.mxu0 0
        %1075 = vmatpush1.bf16.xpose.msra.mxu0 0
        %1076 = vmatprep.subr.bf16.mxu0 0
        %1077 = vmatpush1.bf16.xpose.msra.mxu0 0
        %1078 = vmatprep.subr.bf16.mxu0 0
        %1079 = vmatpush1.bf16.xpose.msra.mxu0 0
        %1080 = vmatprep.subr.bf16.mxu0 0
        %1081 = vmatpush1.bf16.xpose.msra.mxu0 0
        %1082 = vmatprep.subr.bf16.mxu0 0
        %1083 = vmatpush1.bf16.xpose.msra.mxu0 0
        %1084 = vmatprep.subr.bf16.mxu0 0
        %1085 = vmatpush1.bf16.xpose.msra.mxu0 0
        %1086 = vmatprep.subr.bf16.mxu0 0
        %1087 = vmatpush1.bf16.xpose.msra.mxu0 0
        %1088 = vmatprep.mubr.bf16.mxu0 0
        %1089 = vmatmul.mubr.bf16.gmra.mrb[0].mxu0 %v1051
        %v1090 = vpop.f32.mrb[0].mxu0
        %v1091 = vadd.f32 %v565, %v1090
        %v1092 = vpop.f32.mrb[0].mxu0
        %v1093 = vpop.f32.mrb[0].mxu0
        %v1094 = vpop.f32.mrb[0].mxu0
        %1095 = vdwg.mxu0
        %v1096 = vsel %vm572, %v1091, -inf
        %1097 = vmax.xlane.f32.xlu0 %v1096
        %v1098 = vpop.xlane.xlu0 %1097
        %v1099 = vsub.f32 %v1091, %v1098
        %v1100 = vmul.f32 %v1099, 1.442695
        %v1101 = vpow.pop %v1100
        %v1102 = vsel %vm572, %v1101, 0.0
        %1103 = vadd.xlane.f32.xlu0 %v1102
        %v1104 = vpop.xlane.xlu0 %1103
        %v1105 = vrcp.pop %v1104
        %v1106 = vmul.f32 %v1101, %v1105
        %v1107 = vpack.c.bf16 %v1106, %v1106
        %1108 = vrot.lane.b32.xlu0 %v568, 40
        %v1109 = vpop.permute.xlu0 %1108
        %v1111 = vsel %vm572, %v1107, 0
        %v1114 = vsel %vm636, %v1109, 0
        %1116 = vmatprep.subr.bf16.mxu0 0
        %1117 = vmatpush1.bf16.msra.mxu0 %v1114
        %1118 = vmatprep.subr.bf16.mxu0 0
        %1119 = vmatpush1.bf16.msra.mxu0 0
        %1120 = vmatprep.subr.bf16.mxu0 0
        %1121 = vmatpush1.bf16.msra.mxu0 0
        %1122 = vmatprep.subr.bf16.mxu0 0
        %1123 = vmatpush1.bf16.msra.mxu0 0
        %1124 = vmatprep.subr.bf16.mxu0 0
        %1125 = vmatpush1.bf16.msra.mxu0 0
        %1126 = vmatprep.subr.bf16.mxu0 0
        %1127 = vmatpush1.bf16.msra.mxu0 0
        %1128 = vmatprep.subr.bf16.mxu0 0
        %1129 = vmatpush1.bf16.msra.mxu0 0
        %1130 = vmatprep.subr.bf16.mxu0 0
        %1131 = vmatpush1.bf16.msra.mxu0 0
        %1132 = vmatprep.subr.bf16.mxu0 0
        %1133 = vmatpush1.bf16.msra.mxu0 0
        %1134 = vmatprep.subr.bf16.mxu0 0
        %1135 = vmatpush1.bf16.msra.mxu0 0
        %1136 = vmatprep.subr.bf16.mxu0 0
        %1137 = vmatpush1.bf16.msra.mxu0 0
        %1138 = vmatprep.subr.bf16.mxu0 0
        %1139 = vmatpush1.bf16.msra.mxu0 0
        %1140 = vmatprep.subr.bf16.mxu0 0
        %1141 = vmatpush1.bf16.msra.mxu0 0
        %1142 = vmatprep.subr.bf16.mxu0 0
        %1143 = vmatpush1.bf16.msra.mxu0 0
        %1144 = vmatprep.subr.bf16.mxu0 0
        %1145 = vmatpush1.bf16.msra.mxu0 0
        %1146 = vmatprep.subr.bf16.mxu0 0
        %1147 = vmatpush1.bf16.msra.mxu0 0
        %1148 = vmatprep.mubr.bf16.mxu0 0
        %1149 = vmatmul.mubr.bf16.gmra.mrb[0].mxu0 %v1111
        %v1150 = vpop.f32.mrb[0].mxu0
        %v1151 = vadd.f32 0.0, %v1150
        %v1152 = vpop.f32.mrb[0].mxu0
        %v1153 = vpop.f32.mrb[0].mxu0
        %v1154 = vpop.f32.mrb[0].mxu0
        %1155 = vdwg.mxu0
        %v1156 = vpack.c.bf16 %v1151, %v1151
        %v1157 = vld [vmem:[%s5 + $0xc] sm:$0xf]
        %v1159 = vsel %vm572, %v1156, 0
        %v1162 = vsel %vm636, %v1157, 0
        %1164 = vmatprep.subr.bf16.mxu0 0
        %1165 = vmatpush1.bf16.msra.mxu0 %v1162
        %1166 = vmatprep.subr.bf16.mxu0 0
        %1167 = vmatpush1.bf16.msra.mxu0 0
        %1168 = vmatprep.subr.bf16.mxu0 0
        %1169 = vmatpush1.bf16.msra.mxu0 0
        %1170 = vmatprep.subr.bf16.mxu0 0
        %1171 = vmatpush1.bf16.msra.mxu0 0
        %1172 = vmatprep.subr.bf16.mxu0 0
        %1173 = vmatpush1.bf16.msra.mxu0 0
        %1174 = vmatprep.subr.bf16.mxu0 0
        %1175 = vmatpush1.bf16.msra.mxu0 0
        %1176 = vmatprep.subr.bf16.mxu0 0
        %1177 = vmatpush1.bf16.msra.mxu0 0
        %1178 = vmatprep.subr.bf16.mxu0 0
        %1179 = vmatpush1.bf16.msra.mxu0 0
        %1180 = vmatprep.subr.bf16.mxu0 0
        %1181 = vmatpush1.bf16.msra.mxu0 0
        %1182 = vmatprep.subr.bf16.mxu0 0
        %1183 = vmatpush1.bf16.msra.mxu0 0
        %1184 = vmatprep.subr.bf16.mxu0 0
        %1185 = vmatpush1.bf16.msra.mxu0 0
        %1186 = vmatprep.subr.bf16.mxu0 0
        %1187 = vmatpush1.bf16.msra.mxu0 0
        %1188 = vmatprep.subr.bf16.mxu0 0
        %1189 = vmatpush1.bf16.msra.mxu0 0
        %1190 = vmatprep.subr.bf16.mxu0 0
        %1191 = vmatpush1.bf16.msra.mxu0 0
        %1192 = vmatprep.subr.bf16.mxu0 0
        %1193 = vmatpush1.bf16.msra.mxu0 0
        %1194 = vmatprep.subr.bf16.mxu0 0
        %1195 = vmatpush1.bf16.msra.mxu0 0
        %1196 = vmatprep.mubr.bf16.mxu0 0
        %1197 = vmatmul.mubr.bf16.gmra.mrb[0].mxu0 %v1159
        %v1198 = vpop.f32.mrb[0].mxu0
        %v1199 = vadd.f32 0.0, %v1198
        %v1200 = vpop.f32.mrb[0].mxu0
        %v1201 = vpop.f32.mrb[0].mxu0
        %v1202 = vpop.f32.mrb[0].mxu0
        %1203 = vdwg.mxu0
        %v1204 = vadd.f32 %v1045, %v1199
        %v1205 = vmul.f32 %v562, 0.0009765625
        %v1206 = vpack.c.bf16 %v1205, %v1205
        %v1207 = vpack.c.bf16 %v562, %v562
        %1209 = vrot.lane.b32.xlu0 %v1207, 96
        %v1210 = vpop.permute.xlu0 %1209
        %v1212 = vsel %vm572, %v1206, 0
        %v1215 = vsel %vm572, %v1210, 0
        %1217 = vmatprep.subr.bf16.mxu0 0
        %1218 = vmatpush1.bf16.xpose.msra.mxu0 %v1215
        %1219 = vmatprep.subr.bf16.mxu0 0
        %1220 = vmatpush1.bf16.xpose.msra.mxu0 0
        %1221 = vmatprep.subr.bf16.mxu0 0
        %1222 = vmatpush1.bf16.xpose.msra.mxu0 0
        %1223 = vmatprep.subr.bf16.mxu0 0
        %1224 = vmatpush1.bf16.xpose.msra.mxu0 0
        %1225 = vmatprep.subr.bf16.mxu0 0
        %1226 = vmatpush1.bf16.xpose.msra.mxu0 0
        %1227 = vmatprep.subr.bf16.mxu0 0
        %1228 = vmatpush1.bf16.xpose.msra.mxu0 0
        %1229 = vmatprep.subr.bf16.mxu0 0
        %1230 = vmatpush1.bf16.xpose.msra.mxu0 0
        %1231 = vmatprep.subr.bf16.mxu0 0
        %1232 = vmatpush1.bf16.xpose.msra.mxu0 0
        %1233 = vmatprep.subr.bf16.mxu0 0
        %1234 = vmatpush1.bf16.xpose.msra.mxu0 0
        %1235 = vmatprep.subr.bf16.mxu0 0
        %1236 = vmatpush1.bf16.xpose.msra.mxu0 0
        %1237 = vmatprep.subr.bf16.mxu0 0
        %1238 = vmatpush1.bf16.xpose.msra.mxu0 0
        %1239 = vmatprep.subr.bf16.mxu0 0
        %1240 = vmatpush1.bf16.xpose.msra.mxu0 0
        %1241 = vmatprep.subr.bf16.mxu0 0
        %1242 = vmatpush1.bf16.xpose.msra.mxu0 0
        %1243 = vmatprep.subr.bf16.mxu0 0
        %1244 = vmatpush1.bf16.xpose.msra.mxu0 0
        %1245 = vmatprep.subr.bf16.mxu0 0
        %1246 = vmatpush1.bf16.xpose.msra.mxu0 0
        %1247 = vmatprep.subr.bf16.mxu0 0
        %1248 = vmatpush1.bf16.xpose.msra.mxu0 0
        %1249 = vmatprep.mubr.bf16.mxu0 0
        %1250 = vmatmul.mubr.bf16.gmra.mrb[0].mxu0 %v1212
        %v1251 = vpop.f32.mrb[0].mxu0
        %v1252 = vadd.f32 %v565, %v1251
        %v1253 = vpop.f32.mrb[0].mxu0
        %v1254 = vpop.f32.mrb[0].mxu0
        %v1255 = vpop.f32.mrb[0].mxu0
        %1256 = vdwg.mxu0
        %v1257 = vsel %vm572, %v1252, -inf
        %1258 = vmax.xlane.f32.xlu0 %v1257
        %v1259 = vpop.xlane.xlu0 %1258
        %v1260 = vsub.f32 %v1252, %v1259
        %v1261 = vmul.f32 %v1260, 1.442695
        %v1262 = vpow.pop %v1261
        %v1263 = vsel %vm572, %v1262, 0.0
        %1264 = vadd.xlane.f32.xlu0 %v1263
        %v1265 = vpop.xlane.xlu0 %1264
        %v1266 = vrcp.pop %v1265
        %v1267 = vmul.f32 %v1262, %v1266
        %v1268 = vpack.c.bf16 %v1267, %v1267
        %1269 = vrot.lane.b32.xlu0 %v1207, 64
        %v1270 = vpop.permute.xlu0 %1269
        %v1272 = vsel %vm572, %v1268, 0
        %v1275 = vsel %vm636, %v1270, 0
        %1277 = vmatprep.subr.bf16.mxu0 0
        %1278 = vmatpush1.bf16.msra.mxu0 %v1275
        %1279 = vmatprep.subr.bf16.mxu0 0
        %1280 = vmatpush1.bf16.msra.mxu0 0
        %1281 = vmatprep.subr.bf16.mxu0 0
        %1282 = vmatpush1.bf16.msra.mxu0 0
        %1283 = vmatprep.subr.bf16.mxu0 0
        %1284 = vmatpush1.bf16.msra.mxu0 0
        %1285 = vmatprep.subr.bf16.mxu0 0
        %1286 = vmatpush1.bf16.msra.mxu0 0
        %1287 = vmatprep.subr.bf16.mxu0 0
        %1288 = vmatpush1.bf16.msra.mxu0 0
        %1289 = vmatprep.subr.bf16.mxu0 0
        %1290 = vmatpush1.bf16.msra.mxu0 0
        %1291 = vmatprep.subr.bf16.mxu0 0
        %1292 = vmatpush1.bf16.msra.mxu0 0
        %1293 = vmatprep.subr.bf16.mxu0 0
        %1294 = vmatpush1.bf16.msra.mxu0 0
        %1295 = vmatprep.subr.bf16.mxu0 0
        %1296 = vmatpush1.bf16.msra.mxu0 0
        %1297 = vmatprep.subr.bf16.mxu0 0
        %1298 = vmatpush1.bf16.msra.mxu0 0
        %1299 = vmatprep.subr.bf16.mxu0 0
        %1300 = vmatpush1.bf16.msra.mxu0 0
        %1301 = vmatprep.subr.bf16.mxu0 0
        %1302 = vmatpush1.bf16.msra.mxu0 0
        %1303 = vmatprep.subr.bf16.mxu0 0
        %1304 = vmatpush1.bf16.msra.mxu0 0
        %1305 = vmatprep.subr.bf16.mxu0 0
        %1306 = vmatpush1.bf16.msra.mxu0 0
        %1307 = vmatprep.subr.bf16.mxu0 0
        %1308 = vmatpush1.bf16.msra.mxu0 0
        %1309 = vmatprep.mubr.bf16.mxu0 0
        %1310 = vmatmul.mubr.bf16.gmra.mrb[0].mxu0 %v1272
        %v1311 = vpop.f32.mrb[0].mxu0
        %v1312 = vadd.f32 0.0, %v1311
        %v1313 = vpop.f32.mrb[0].mxu0
        %v1314 = vpop.f32.mrb[0].mxu0
        %v1315 = vpop.f32.mrb[0].mxu0
        %1316 = vdwg.mxu0
        %v1317 = vpack.c.bf16 %v1312, %v1312
        %1319 = vrot.lane.b32.xlu0 %v1206, 120
        %v1320 = vpop.permute.xlu0 %1319
        %1321 = vrot.lane.b32.xlu0 %v1207, 88
        %v1322 = vpop.permute.xlu0 %1321
        %v1324 = vsel %vm572, %v1320, 0
        %v1327 = vsel %vm572, %v1322, 0
        %1329 = vmatprep.subr.bf16.mxu0 0
        %1330 = vmatpush1.bf16.xpose.msra.mxu0 %v1327
        %1331 = vmatprep.subr.bf16.mxu0 0
        %1332 = vmatpush1.bf16.xpose.msra.mxu0 0
        %1333 = vmatprep.subr.bf16.mxu0 0
        %1334 = vmatpush1.bf16.xpose.msra.mxu0 0
        %1335 = vmatprep.subr.bf16.mxu0 0
        %1336 = vmatpush1.bf16.xpose.msra.mxu0 0
        %1337 = vmatprep.subr.bf16.mxu0 0
        %1338 = vmatpush1.bf16.xpose.msra.mxu0 0
        %1339 = vmatprep.subr.bf16.mxu0 0
        %1340 = vmatpush1.bf16.xpose.msra.mxu0 0
        %1341 = vmatprep.subr.bf16.mxu0 0
        %1342 = vmatpush1.bf16.xpose.msra.mxu0 0
        %1343 = vmatprep.subr.bf16.mxu0 0
        %1344 = vmatpush1.bf16.xpose.msra.mxu0 0
        %1345 = vmatprep.subr.bf16.mxu0 0
        %1346 = vmatpush1.bf16.xpose.msra.mxu0 0
        %1347 = vmatprep.subr.bf16.mxu0 0
        %1348 = vmatpush1.bf16.xpose.msra.mxu0 0
        %1349 = vmatprep.subr.bf16.mxu0 0
        %1350 = vmatpush1.bf16.xpose.msra.mxu0 0
        %1351 = vmatprep.subr.bf16.mxu0 0
        %1352 = vmatpush1.bf16.xpose.msra.mxu0 0
        %1353 = vmatprep.subr.bf16.mxu0 0
        %1354 = vmatpush1.bf16.xpose.msra.mxu0 0
        %1355 = vmatprep.subr.bf16.mxu0 0
        %1356 = vmatpush1.bf16.xpose.msra.mxu0 0
        %1357 = vmatprep.subr.bf16.mxu0 0
        %1358 = vmatpush1.bf16.xpose.msra.mxu0 0
        %1359 = vmatprep.subr.bf16.mxu0 0
        %1360 = vmatpush1.bf16.xpose.msra.mxu0 0
        %1361 = vmatprep.mubr.bf16.mxu0 0
        %1362 = vmatmul.mubr.bf16.gmra.mrb[0].mxu0 %v1324
        %v1363 = vpop.f32.mrb[0].mxu0
        %v1364 = vadd.f32 %v565, %v1363
        %v1365 = vpop.f32.mrb[0].mxu0
        %v1366 = vpop.f32.mrb[0].mxu0
        %v1367 = vpop.f32.mrb[0].mxu0
        %1368 = vdwg.mxu0
        %v1369 = vsel %vm572, %v1364, -inf
        %1370 = vmax.xlane.f32.xlu0 %v1369
        %v1371 = vpop.xlane.xlu0 %1370
        %v1372 = vsub.f32 %v1364, %v1371
        %v1373 = vmul.f32 %v1372, 1.442695
        %v1374 = vpow.pop %v1373
        %v1375 = vsel %vm572, %v1374, 0.0
        %1376 = vadd.xlane.f32.xlu0 %v1375
        %v1377 = vpop.xlane.xlu0 %1376
        %v1378 = vrcp.pop %v1377
        %v1379 = vmul.f32 %v1374, %v1378
        %v1380 = vpack.c.bf16 %v1379, %v1379
        %1381 = vrot.lane.b32.xlu0 %v1207, 56
        %v1382 = vpop.permute.xlu0 %1381
        %v1384 = vsel %vm572, %v1380, 0
        %v1387 = vsel %vm636, %v1382, 0
        %1389 = vmatprep.subr.bf16.mxu0 0
        %1390 = vmatpush1.bf16.msra.mxu0 %v1387
        %1391 = vmatprep.subr.bf16.mxu0 0
        %1392 = vmatpush1.bf16.msra.mxu0 0
        %1393 = vmatprep.subr.bf16.mxu0 0
        %1394 = vmatpush1.bf16.msra.mxu0 0
        %1395 = vmatprep.subr.bf16.mxu0 0
        %1396 = vmatpush1.bf16.msra.mxu0 0
        %1397 = vmatprep.subr.bf16.mxu0 0
        %1398 = vmatpush1.bf16.msra.mxu0 0
        %1399 = vmatprep.subr.bf16.mxu0 0
        %1400 = vmatpush1.bf16.msra.mxu0 0
        %1401 = vmatprep.subr.bf16.mxu0 0
        %1402 = vmatpush1.bf16.msra.mxu0 0
        %1403 = vmatprep.subr.bf16.mxu0 0
        %1404 = vmatpush1.bf16.msra.mxu0 0
        %1405 = vmatprep.subr.bf16.mxu0 0
        %1406 = vmatpush1.bf16.msra.mxu0 0
        %1407 = vmatprep.subr.bf16.mxu0 0
        %1408 = vmatpush1.bf16.msra.mxu0 0
        %1409 = vmatprep.subr.bf16.mxu0 0
        %1410 = vmatpush1.bf16.msra.mxu0 0
        %1411 = vmatprep.subr.bf16.mxu0 0
        %1412 = vmatpush1.bf16.msra.mxu0 0
        %1413 = vmatprep.subr.bf16.mxu0 0
        %1414 = vmatpush1.bf16.msra.mxu0 0
        %1415 = vmatprep.subr.bf16.mxu0 0
        %1416 = vmatpush1.bf16.msra.mxu0 0
        %1417 = vmatprep.subr.bf16.mxu0 0
        %1418 = vmatpush1.bf16.msra.mxu0 0
        %1419 = vmatprep.subr.bf16.mxu0 0
        %1420 = vmatpush1.bf16.msra.mxu0 0
        %1421 = vmatprep.mubr.bf16.mxu0 0
        %1422 = vmatmul.mubr.bf16.gmra.mrb[0].mxu0 %v1384
        %v1423 = vpop.f32.mrb[0].mxu0
        %v1424 = vadd.f32 0.0, %v1423
        %v1425 = vpop.f32.mrb[0].mxu0
        %v1426 = vpop.f32.mrb[0].mxu0
        %v1427 = vpop.f32.mrb[0].mxu0
        %1428 = vdwg.mxu0
        %v1429 = vpack.c.bf16 %v1424, %v1424
        %v1431 = vsel %vm572, %v1429, 0
        %1433 = vmatprep.subr.bf16.mxu0 0
        %1434 = vmatpush1.bf16.msra.mxu0 %v799
        %1435 = vmatprep.subr.bf16.mxu0 0
        %1436 = vmatpush1.bf16.msra.mxu0 0
        %1437 = vmatprep.subr.bf16.mxu0 0
        %1438 = vmatpush1.bf16.msra.mxu0 0
        %1439 = vmatprep.subr.bf16.mxu0 0
        %1440 = vmatpush1.bf16.msra.mxu0 0
        %1441 = vmatprep.subr.bf16.mxu0 0
        %1442 = vmatpush1.bf16.msra.mxu0 0
        %1443 = vmatprep.subr.bf16.mxu0 0
        %1444 = vmatpush1.bf16.msra.mxu0 0
        %1445 = vmatprep.subr.bf16.mxu0 0
        %1446 = vmatpush1.bf16.msra.mxu0 0
        %1447 = vmatprep.subr.bf16.mxu0 0
        %1448 = vmatpush1.bf16.msra.mxu0 0
        %1449 = vmatprep.subr.bf16.mxu0 0
        %1450 = vmatpush1.bf16.msra.mxu0 0
        %1451 = vmatprep.subr.bf16.mxu0 0
        %1452 = vmatpush1.bf16.msra.mxu0 0
        %1453 = vmatprep.subr.bf16.mxu0 0
        %1454 = vmatpush1.bf16.msra.mxu0 0
        %1455 = vmatprep.subr.bf16.mxu0 0
        %1456 = vmatpush1.bf16.msra.mxu0 0
        %1457 = vmatprep.subr.bf16.mxu0 0
        %1458 = vmatpush1.bf16.msra.mxu0 0
        %1459 = vmatprep.subr.bf16.mxu0 0
        %1460 = vmatpush1.bf16.msra.mxu0 0
        %1461 = vmatprep.subr.bf16.mxu0 0
        %1462 = vmatpush1.bf16.msra.mxu0 0
        %1463 = vmatprep.subr.bf16.mxu0 0
        %1464 = vmatpush1.bf16.msra.mxu0 0
        %1465 = vmatprep.mubr.bf16.mxu0 0
        %1466 = vmatmul.mubr.bf16.gmra.mrb[0].mxu0 %v1431
        %v1467 = vpop.f32.mrb[0].mxu0
        %v1468 = vadd.f32 0.0, %v1467
        %v1469 = vpop.f32.mrb[0].mxu0
        %v1470 = vpop.f32.mrb[0].mxu0
        %v1471 = vpop.f32.mrb[0].mxu0
        %1472 = vdwg.mxu0
        %v1474 = vsel %vm572, %v1317, 0
        %1476 = vmatprep.subr.bf16.mxu0 0
        %1477 = vmatpush1.bf16.msra.mxu0 %v845
        %1478 = vmatprep.subr.bf16.mxu0 0
        %1479 = vmatpush1.bf16.msra.mxu0 0
        %1480 = vmatprep.subr.bf16.mxu0 0
        %1481 = vmatpush1.bf16.msra.mxu0 0
        %1482 = vmatprep.subr.bf16.mxu0 0
        %1483 = vmatpush1.bf16.msra.mxu0 0
        %1484 = vmatprep.subr.bf16.mxu0 0
        %1485 = vmatpush1.bf16.msra.mxu0 0
        %1486 = vmatprep.subr.bf16.mxu0 0
        %1487 = vmatpush1.bf16.msra.mxu0 0
        %1488 = vmatprep.subr.bf16.mxu0 0
        %1489 = vmatpush1.bf16.msra.mxu0 0
        %1490 = vmatprep.subr.bf16.mxu0 0
        %1491 = vmatpush1.bf16.msra.mxu0 0
        %1492 = vmatprep.subr.bf16.mxu0 0
        %1493 = vmatpush1.bf16.msra.mxu0 0
        %1494 = vmatprep.subr.bf16.mxu0 0
        %1495 = vmatpush1.bf16.msra.mxu0 0
        %1496 = vmatprep.subr.bf16.mxu0 0
        %1497 = vmatpush1.bf16.msra.mxu0 0
        %1498 = vmatprep.subr.bf16.mxu0 0
        %1499 = vmatpush1.bf16.msra.mxu0 0
        %1500 = vmatprep.subr.bf16.mxu0 0
        %1501 = vmatpush1.bf16.msra.mxu0 0
        %1502 = vmatprep.subr.bf16.mxu0 0
        %1503 = vmatpush1.bf16.msra.mxu0 0
        %1504 = vmatprep.subr.bf16.mxu0 0
        %1505 = vmatpush1.bf16.msra.mxu0 0
        %1506 = vmatprep.subr.bf16.mxu0 0
        %1507 = vmatpush1.bf16.msra.mxu0 0
        %1508 = vmatprep.mubr.bf16.mxu0 0
        %1509 = vmatmul.mubr.bf16.gmra.mrb[0].mxu0 %v1474
        %v1510 = vpop.f32.mrb[0].mxu0
        %v1511 = vadd.f32 %v1468, %v1510
        %v1512 = vpop.f32.mrb[0].mxu0
        %v1513 = vpop.f32.mrb[0].mxu0
        %v1514 = vpop.f32.mrb[0].mxu0
        %1515 = vdwg.mxu0
        %1516 = vrot.lane.b32.xlu0 %v1206, 112
        %v1517 = vpop.permute.xlu0 %1516
        %1518 = vrot.lane.b32.xlu0 %v1207, 80
        %v1519 = vpop.permute.xlu0 %1518
        %v1521 = vsel %vm572, %v1517, 0
        %v1524 = vsel %vm572, %v1519, 0
        %1526 = vmatprep.subr.bf16.mxu0 0
        %1527 = vmatpush1.bf16.xpose.msra.mxu0 %v1524
        %1528 = vmatprep.subr.bf16.mxu0 0
        %1529 = vmatpush1.bf16.xpose.msra.mxu0 0
        %1530 = vmatprep.subr.bf16.mxu0 0
        %1531 = vmatpush1.bf16.xpose.msra.mxu0 0
        %1532 = vmatprep.subr.bf16.mxu0 0
        %1533 = vmatpush1.bf16.xpose.msra.mxu0 0
        %1534 = vmatprep.subr.bf16.mxu0 0
        %1535 = vmatpush1.bf16.xpose.msra.mxu0 0
        %1536 = vmatprep.subr.bf16.mxu0 0
        %1537 = vmatpush1.bf16.xpose.msra.mxu0 0
        %1538 = vmatprep.subr.bf16.mxu0 0
        %1539 = vmatpush1.bf16.xpose.msra.mxu0 0
        %1540 = vmatprep.subr.bf16.mxu0 0
        %1541 = vmatpush1.bf16.xpose.msra.mxu0 0
        %1542 = vmatprep.subr.bf16.mxu0 0
        %1543 = vmatpush1.bf16.xpose.msra.mxu0 0
        %1544 = vmatprep.subr.bf16.mxu0 0
        %1545 = vmatpush1.bf16.xpose.msra.mxu0 0
        %1546 = vmatprep.subr.bf16.mxu0 0
        %1547 = vmatpush1.bf16.xpose.msra.mxu0 0
        %1548 = vmatprep.subr.bf16.mxu0 0
        %1549 = vmatpush1.bf16.xpose.msra.mxu0 0
        %1550 = vmatprep.subr.bf16.mxu0 0
        %1551 = vmatpush1.bf16.xpose.msra.mxu0 0
        %1552 = vmatprep.subr.bf16.mxu0 0
        %1553 = vmatpush1.bf16.xpose.msra.mxu0 0
        %1554 = vmatprep.subr.bf16.mxu0 0
        %1555 = vmatpush1.bf16.xpose.msra.mxu0 0
        %1556 = vmatprep.subr.bf16.mxu0 0
        %1557 = vmatpush1.bf16.xpose.msra.mxu0 0
        %1558 = vmatprep.mubr.bf16.mxu0 0
        %1559 = vmatmul.mubr.bf16.gmra.mrb[0].mxu0 %v1521
        %v1560 = vpop.f32.mrb[0].mxu0
        %v1561 = vadd.f32 %v565, %v1560
        %v1562 = vpop.f32.mrb[0].mxu0
        %v1563 = vpop.f32.mrb[0].mxu0
        %v1564 = vpop.f32.mrb[0].mxu0
        %1565 = vdwg.mxu0
        %v1566 = vsel %vm572, %v1561, -inf
        %1567 = vmax.xlane.f32.xlu0 %v1566
        %v1568 = vpop.xlane.xlu0 %1567
        %v1569 = vsub.f32 %v1561, %v1568
        %v1570 = vmul.f32 %v1569, 1.442695
        %v1571 = vpow.pop %v1570
        %v1572 = vsel %vm572, %v1571, 0.0
        %1573 = vadd.xlane.f32.xlu0 %v1572
        %v1574 = vpop.xlane.xlu0 %1573
        %v1575 = vrcp.pop %v1574
        %v1576 = vmul.f32 %v1571, %v1575
        %v1577 = vpack.c.bf16 %v1576, %v1576
        %1578 = vrot.lane.b32.xlu0 %v1207, 48
        %v1579 = vpop.permute.xlu0 %1578
        %v1581 = vsel %vm572, %v1577, 0
        %v1584 = vsel %vm636, %v1579, 0
        %1586 = vmatprep.subr.bf16.mxu0 0
        %1587 = vmatpush1.bf16.msra.mxu0 %v1584
        %1588 = vmatprep.subr.bf16.mxu0 0
        %1589 = vmatpush1.bf16.msra.mxu0 0
        %1590 = vmatprep.subr.bf16.mxu0 0
        %1591 = vmatpush1.bf16.msra.mxu0 0
        %1592 = vmatprep.subr.bf16.mxu0 0
        %1593 = vmatpush1.bf16.msra.mxu0 0
        %1594 = vmatprep.subr.bf16.mxu0 0
        %1595 = vmatpush1.bf16.msra.mxu0 0
        %1596 = vmatprep.subr.bf16.mxu0 0
        %1597 = vmatpush1.bf16.msra.mxu0 0
        %1598 = vmatprep.subr.bf16.mxu0 0
        %1599 = vmatpush1.bf16.msra.mxu0 0
        %1600 = vmatprep.subr.bf16.mxu0 0
        %1601 = vmatpush1.bf16.msra.mxu0 0
        %1602 = vmatprep.subr.bf16.mxu0 0
        %1603 = vmatpush1.bf16.msra.mxu0 0
        %1604 = vmatprep.subr.bf16.mxu0 0
        %1605 = vmatpush1.bf16.msra.mxu0 0
        %1606 = vmatprep.subr.bf16.mxu0 0
        %1607 = vmatpush1.bf16.msra.mxu0 0
        %1608 = vmatprep.subr.bf16.mxu0 0
        %1609 = vmatpush1.bf16.msra.mxu0 0
        %1610 = vmatprep.subr.bf16.mxu0 0
        %1611 = vmatpush1.bf16.msra.mxu0 0
        %1612 = vmatprep.subr.bf16.mxu0 0
        %1613 = vmatpush1.bf16.msra.mxu0 0
        %1614 = vmatprep.subr.bf16.mxu0 0
        %1615 = vmatpush1.bf16.msra.mxu0 0
        %1616 = vmatprep.subr.bf16.mxu0 0
        %1617 = vmatpush1.bf16.msra.mxu0 0
        %1618 = vmatprep.mubr.bf16.mxu0 0
        %1619 = vmatmul.mubr.bf16.gmra.mrb[0].mxu0 %v1581
        %v1620 = vpop.f32.mrb[0].mxu0
        %v1621 = vadd.f32 0.0, %v1620
        %v1622 = vpop.f32.mrb[0].mxu0
        %v1623 = vpop.f32.mrb[0].mxu0
        %v1624 = vpop.f32.mrb[0].mxu0
        %1625 = vdwg.mxu0
        %v1626 = vpack.c.bf16 %v1621, %v1621
        %v1628 = vsel %vm572, %v1626, 0
        %1630 = vmatprep.subr.bf16.mxu0 0
        %1631 = vmatpush1.bf16.msra.mxu0 %v1003
        %1632 = vmatprep.subr.bf16.mxu0 0
        %1633 = vmatpush1.bf16.msra.mxu0 0
        %1634 = vmatprep.subr.bf16.mxu0 0
        %1635 = vmatpush1.bf16.msra.mxu0 0
        %1636 = vmatprep.subr.bf16.mxu0 0
        %1637 = vmatpush1.bf16.msra.mxu0 0
        %1638 = vmatprep.subr.bf16.mxu0 0
        %1639 = vmatpush1.bf16.msra.mxu0 0
        %1640 = vmatprep.subr.bf16.mxu0 0
        %1641 = vmatpush1.bf16.msra.mxu0 0
        %1642 = vmatprep.subr.bf16.mxu0 0
        %1643 = vmatpush1.bf16.msra.mxu0 0
        %1644 = vmatprep.subr.bf16.mxu0 0
        %1645 = vmatpush1.bf16.msra.mxu0 0
        %1646 = vmatprep.subr.bf16.mxu0 0
        %1647 = vmatpush1.bf16.msra.mxu0 0
        %1648 = vmatprep.subr.bf16.mxu0 0
        %1649 = vmatpush1.bf16.msra.mxu0 0
        %1650 = vmatprep.subr.bf16.mxu0 0
        %1651 = vmatpush1.bf16.msra.mxu0 0
        %1652 = vmatprep.subr.bf16.mxu0 0
        %1653 = vmatpush1.bf16.msra.mxu0 0
        %1654 = vmatprep.subr.bf16.mxu0 0
        %1655 = vmatpush1.bf16.msra.mxu0 0
        %1656 = vmatprep.subr.bf16.mxu0 0
        %1657 = vmatpush1.bf16.msra.mxu0 0
        %1658 = vmatprep.subr.bf16.mxu0 0
        %1659 = vmatpush1.bf16.msra.mxu0 0
        %1660 = vmatprep.subr.bf16.mxu0 0
        %1661 = vmatpush1.bf16.msra.mxu0 0
        %1662 = vmatprep.mubr.bf16.mxu0 0
        %1663 = vmatmul.mubr.bf16.gmra.mrb[0].mxu0 %v1628
        %v1664 = vpop.f32.mrb[0].mxu0
        %v1665 = vadd.f32 0.0, %v1664
        %v1666 = vpop.f32.mrb[0].mxu0
        %v1667 = vpop.f32.mrb[0].mxu0
        %v1668 = vpop.f32.mrb[0].mxu0
        %1669 = vdwg.mxu0
        %v1670 = vadd.f32 %v1511, %v1665
        %1671 = vrot.lane.b32.xlu0 %v1206, 104
        %v1672 = vpop.permute.xlu0 %1671
        %1673 = vrot.lane.b32.xlu0 %v1207, 72
        %v1674 = vpop.permute.xlu0 %1673
        %v1676 = vsel %vm572, %v1672, 0
        %v1679 = vsel %vm572, %v1674, 0
        %1681 = vmatprep.subr.bf16.mxu0 0
        %1682 = vmatpush1.bf16.xpose.msra.mxu0 %v1679
        %1683 = vmatprep.subr.bf16.mxu0 0
        %1684 = vmatpush1.bf16.xpose.msra.mxu0 0
        %1685 = vmatprep.subr.bf16.mxu0 0
        %1686 = vmatpush1.bf16.xpose.msra.mxu0 0
        %1687 = vmatprep.subr.bf16.mxu0 0
        %1688 = vmatpush1.bf16.xpose.msra.mxu0 0
        %1689 = vmatprep.subr.bf16.mxu0 0
        %1690 = vmatpush1.bf16.xpose.msra.mxu0 0
        %1691 = vmatprep.subr.bf16.mxu0 0
        %1692 = vmatpush1.bf16.xpose.msra.mxu0 0
        %1693 = vmatprep.subr.bf16.mxu0 0
        %1694 = vmatpush1.bf16.xpose.msra.mxu0 0
        %1695 = vmatprep.subr.bf16.mxu0 0
        %1696 = vmatpush1.bf16.xpose.msra.mxu0 0
        %1697 = vmatprep.subr.bf16.mxu0 0
        %1698 = vmatpush1.bf16.xpose.msra.mxu0 0
        %1699 = vmatprep.subr.bf16.mxu0 0
        %1700 = vmatpush1.bf16.xpose.msra.mxu0 0
        %1701 = vmatprep.subr.bf16.mxu0 0
        %1702 = vmatpush1.bf16.xpose.msra.mxu0 0
        %1703 = vmatprep.subr.bf16.mxu0 0
        %1704 = vmatpush1.bf16.xpose.msra.mxu0 0
        %1705 = vmatprep.subr.bf16.mxu0 0
        %1706 = vmatpush1.bf16.xpose.msra.mxu0 0
        %1707 = vmatprep.subr.bf16.mxu0 0
        %1708 = vmatpush1.bf16.xpose.msra.mxu0 0
        %1709 = vmatprep.subr.bf16.mxu0 0
        %1710 = vmatpush1.bf16.xpose.msra.mxu0 0
        %1711 = vmatprep.subr.bf16.mxu0 0
        %1712 = vmatpush1.bf16.xpose.msra.mxu0 0
        %1713 = vmatprep.mubr.bf16.mxu0 0
        %1714 = vmatmul.mubr.bf16.gmra.mrb[0].mxu0 %v1676
        %v1715 = vpop.f32.mrb[0].mxu0
        %v1716 = vadd.f32 %v565, %v1715
        %v1717 = vpop.f32.mrb[0].mxu0
        %v1718 = vpop.f32.mrb[0].mxu0
        %v1719 = vpop.f32.mrb[0].mxu0
        %1720 = vdwg.mxu0
        %v1721 = vsel %vm572, %v1716, -inf
        %1722 = vmax.xlane.f32.xlu0 %v1721
        %v1723 = vpop.xlane.xlu0 %1722
        %v1724 = vsub.f32 %v1716, %v1723
        %v1725 = vmul.f32 %v1724, 1.442695
        %v1726 = vpow.pop %v1725
        %v1727 = vsel %vm572, %v1726, 0.0
        %1728 = vadd.xlane.f32.xlu0 %v1727
        %v1729 = vpop.xlane.xlu0 %1728
        %v1730 = vrcp.pop %v1729
        %v1731 = vmul.f32 %v1726, %v1730
        %v1732 = vpack.c.bf16 %v1731, %v1731
        %1733 = vrot.lane.b32.xlu0 %v1207, 40
        %v1734 = vpop.permute.xlu0 %1733
        %v1736 = vsel %vm572, %v1732, 0
        %v1739 = vsel %vm636, %v1734, 0
        %1741 = vmatprep.subr.bf16.mxu0 0
        %1742 = vmatpush1.bf16.msra.mxu0 %v1739
        %1743 = vmatprep.subr.bf16.mxu0 0
        %1744 = vmatpush1.bf16.msra.mxu0 0
        %1745 = vmatprep.subr.bf16.mxu0 0
        %1746 = vmatpush1.bf16.msra.mxu0 0
        %1747 = vmatprep.subr.bf16.mxu0 0
        %1748 = vmatpush1.bf16.msra.mxu0 0
        %1749 = vmatprep.subr.bf16.mxu0 0
        %1750 = vmatpush1.bf16.msra.mxu0 0
        %1751 = vmatprep.subr.bf16.mxu0 0
        %1752 = vmatpush1.bf16.msra.mxu0 0
        %1753 = vmatprep.subr.bf16.mxu0 0
        %1754 = vmatpush1.bf16.msra.mxu0 0
        %1755 = vmatprep.subr.bf16.mxu0 0
        %1756 = vmatpush1.bf16.msra.mxu0 0
        %1757 = vmatprep.subr.bf16.mxu0 0
        %1758 = vmatpush1.bf16.msra.mxu0 0
        %1759 = vmatprep.subr.bf16.mxu0 0
        %1760 = vmatpush1.bf16.msra.mxu0 0
        %1761 = vmatprep.subr.bf16.mxu0 0
        %1762 = vmatpush1.bf16.msra.mxu0 0
        %1763 = vmatprep.subr.bf16.mxu0 0
        %1764 = vmatpush1.bf16.msra.mxu0 0
        %1765 = vmatprep.subr.bf16.mxu0 0
        %1766 = vmatpush1.bf16.msra.mxu0 0
        %1767 = vmatprep.subr.bf16.mxu0 0
        %1768 = vmatpush1.bf16.msra.mxu0 0
        %1769 = vmatprep.subr.bf16.mxu0 0
        %1770 = vmatpush1.bf16.msra.mxu0 0
        %1771 = vmatprep.subr.bf16.mxu0 0
        %1772 = vmatpush1.bf16.msra.mxu0 0
        %1773 = vmatprep.mubr.bf16.mxu0 0
        %1774 = vmatmul.mubr.bf16.gmra.mrb[0].mxu0 %v1736
        %v1775 = vpop.f32.mrb[0].mxu0
        %v1776 = vadd.f32 0.0, %v1775
        %v1777 = vpop.f32.mrb[0].mxu0
        %v1778 = vpop.f32.mrb[0].mxu0
        %v1779 = vpop.f32.mrb[0].mxu0
        %1780 = vdwg.mxu0
        %v1781 = vpack.c.bf16 %v1776, %v1776
        %v1783 = vsel %vm572, %v1781, 0
        %1785 = vmatprep.subr.bf16.mxu0 0
        %1786 = vmatpush1.bf16.msra.mxu0 %v1162
        %1787 = vmatprep.subr.bf16.mxu0 0
        %1788 = vmatpush1.bf16.msra.mxu0 0
        %1789 = vmatprep.subr.bf16.mxu0 0
        %1790 = vmatpush1.bf16.msra.mxu0 0
        %1791 = vmatprep.subr.bf16.mxu0 0
        %1792 = vmatpush1.bf16.msra.mxu0 0
        %1793 = vmatprep.subr.bf16.mxu0 0
        %1794 = vmatpush1.bf16.msra.mxu0 0
        %1795 = vmatprep.subr.bf16.mxu0 0
        %1796 = vmatpush1.bf16.msra.mxu0 0
        %1797 = vmatprep.subr.bf16.mxu0 0
        %1798 = vmatpush1.bf16.msra.mxu0 0
        %1799 = vmatprep.subr.bf16.mxu0 0
        %1800 = vmatpush1.bf16.msra.mxu0 0
        %1801 = vmatprep.subr.bf16.mxu0 0
        %1802 = vmatpush1.bf16.msra.mxu0 0
        %1803 = vmatprep.subr.bf16.mxu0 0
        %1804 = vmatpush1.bf16.msra.mxu0 0
        %1805 = vmatprep.subr.bf16.mxu0 0
        %1806 = vmatpush1.bf16.msra.mxu0 0
        %1807 = vmatprep.subr.bf16.mxu0 0
        %1808 = vmatpush1.bf16.msra.mxu0 0
        %1809 = vmatprep.subr.bf16.mxu0 0
        %1810 = vmatpush1.bf16.msra.mxu0 0
        %1811 = vmatprep.subr.bf16.mxu0 0
        %1812 = vmatpush1.bf16.msra.mxu0 0
        %1813 = vmatprep.subr.bf16.mxu0 0
        %1814 = vmatpush1.bf16.msra.mxu0 0
        %1815 = vmatprep.subr.bf16.mxu0 0
        %1816 = vmatpush1.bf16.msra.mxu0 0
        %1817 = vmatprep.mubr.bf16.mxu0 0
        %1818 = vmatmul.mubr.bf16.gmra.mrb[0].mxu0 %v1783
        %v1819 = vpop.f32.mrb[0].mxu0
        %v1820 = vadd.f32 0.0, %v1819
        %v1821 = vpop.f32.mrb[0].mxu0
        %v1822 = vpop.f32.mrb[0].mxu0
        %v1823 = vpop.f32.mrb[0].mxu0
        %1824 = vdwg.mxu0
        %v1825 = vadd.f32 %v1670, %v1820
        %v1826 = vadd.f32 %v456, %v1204
        %v1827 = vadd.f32 %v457, %v1825
        %v1828 = vld [vmem:[%s6] sm:$0x1]
        %v1830 = vlaneseq
        %v1831 = vshrl.u32 %v1830, 7
        %v1832 = vsub.s32 0, %v1831
        %v1833 = vrot.slane %v1828, %v1832
        %v1835 = vadd.f32 %v1826, %v1833
        %v1836 = vadd.f32 %v1827, %v1833
        %v1837 = vsel %vm458, %v1835, 0.0
        %1838 = vadd.xlane.f32.xlu0 %v1837
        %v1839 = vpop.xlane.xlu0 %1838
        %v1840 = vsel %vm458, %v1836, 0.0
        %1841 = vadd.xlane.f32.xlu0 %v1840
        %v1842 = vpop.xlane.xlu0 %1841
        %v1843 = vmul.f32 %v1839, %v465
        %v1844 = vmul.f32 %v1842, %v465
        %v1845 = vsub.f32 %v1835, %v1843
        %v1846 = vsub.f32 %v1836, %v1844
        %v1847 = vmul.f32 %v1845, %v1845
        %v1848 = vmul.f32 %v1846, %v1846
        %v1849 = vsel %vm458, %v1847, 0.0
        %1850 = vadd.xlane.f32.xlu0 %v1849
        %v1851 = vpop.xlane.xlu0 %1850
        %v1852 = vsel %vm458, %v1848, 0.0
        %1853 = vadd.xlane.f32.xlu0 %v1852
        %v1854 = vpop.xlane.xlu0 %1853
        %v1855 = vmul.f32 %v1851, %v465
        %v1856 = vmul.f32 %v1854, %v465
        %v1857 = vadd.f32 %v1855, 1e-05
        %v1858 = vadd.f32 %v1856, 1e-05
        %v1859 = vrsqrt.pop %v1857
        %v1860 = vrsqrt.pop %v1858
        %v1861 = vmul.f32 %v1845, %v1859
        %v1862 = vmul.f32 %v1846, %v1860
        %v1863 = vld [vmem:[%s7] sm:$0x1]
        %v1865 = vlaneseq
        %v1866 = vshrl.u32 %v1865, 7
        %v1867 = vsub.s32 0, %v1866
        %v1868 = vrot.slane %v1863, %v1867
        %v1870 = vmul.f32 %v1861, %v1868
        %v1871 = vmul.f32 %v1862, %v1868
        %v1872 = vld [vmem:[%s8] sm:$0x1]
        %v1874 = vlaneseq
        %v1875 = vshrl.u32 %v1874, 7
        %v1876 = vsub.s32 0, %v1875
        %v1877 = vrot.slane %v1872, %v1876
        %v1879 = vadd.f32 %v1870, %v1877
        %v1880 = vadd.f32 %v1871, %v1877
        %v1881 = vpack.c.bf16 %v1880, %v1879
        %v1882 = vld [vmem:[%s9] sm:$0xf]
        %v1883 = vld [vmem:[%s9 + $0x4] sm:$0xf]
        %v1884 = vld [vmem:[%s9 + $0x8] sm:$0xf]
        %v1885 = vld [vmem:[%s9 + $0xc] sm:$0xf]
        %v1886 = vld [vmem:[%s10] sm:$0x1]
        %v1888 = vlaneseq
        %v1889 = vshrl.u32 %v1888, 7
        %v1890 = vsub.s32 0, %v1889
        %v1891 = vrot.slane %v1886, %v1890
        %v1897 = vunpack.c.l.b16 %v1882
        %v1898 = vunpack.c.l.b16 %v1883
        %v1899 = vunpack.c.l.b16 %v1884
        %v1900 = vunpack.c.l.b16 %v1885
        %v1901 = vpack.c.b16 %v1898, %v1897
        %v1902 = vpack.c.b16 %v1900, %v1899
        %v1906 = vsel %vm458, %v1881, 0
        %1908 = vmatprep.subr.bf16.mxu0 0
        %1909 = vmatpush1.bf16.msra.mxu0 %v1901
        %1910 = vmatprep.subr.bf16.mxu0 0
        %1911 = vmatpush1.bf16.msra.mxu0 %v1902
        %1912 = vmatprep.subr.bf16.mxu0 0
        %1913 = vmatpush1.bf16.msra.mxu0 0
        %1914 = vmatprep.subr.bf16.mxu0 0
        %1915 = vmatpush1.bf16.msra.mxu0 0
        %1916 = vmatprep.subr.bf16.mxu0 0
        %1917 = vmatpush1.bf16.msra.mxu0 0
        %1918 = vmatprep.subr.bf16.mxu0 0
        %1919 = vmatpush1.bf16.msra.mxu0 0
        %1920 = vmatprep.subr.bf16.mxu0 0
        %1921 = vmatpush1.bf16.msra.mxu0 0
        %1922 = vmatprep.subr.bf16.mxu0 0
        %1923 = vmatpush1.bf16.msra.mxu0 0
        %1924 = vmatprep.subr.bf16.mxu0 0
        %1925 = vmatpush1.bf16.msra.mxu0 0
        %1926 = vmatprep.subr.bf16.mxu0 0
        %1927 = vmatpush1.bf16.msra.mxu0 0
        %1928 = vmatprep.subr.bf16.mxu0 0
        %1929 = vmatpush1.bf16.msra.mxu0 0
        %1930 = vmatprep.subr.bf16.mxu0 0
        %1931 = vmatpush1.bf16.msra.mxu0 0
        %1932 = vmatprep.subr.bf16.mxu0 0
        %1933 = vmatpush1.bf16.msra.mxu0 0
        %1934 = vmatprep.subr.bf16.mxu0 0
        %1935 = vmatpush1.bf16.msra.mxu0 0
        %1936 = vmatprep.subr.bf16.mxu0 0
        %1937 = vmatpush1.bf16.msra.mxu0 0
        %1938 = vmatprep.subr.bf16.mxu0 0
        %1939 = vmatpush1.bf16.msra.mxu0 0
        %1940 = vmatprep.mubr.bf16.mxu0 0
        %1941 = vmatmul.mubr.bf16.gmra.mrb[0].mxu0 %v1906
        %v1942 = vpop.f32.mrb[0].mxu0
        %v1943 = vadd.f32 %v1891, %v1942
        %v1944 = vpop.f32.mrb[0].mxu0
        %v1945 = vpop.f32.mrb[0].mxu0
        %v1946 = vadd.f32 %v1891, %v1945
        %v1947 = vpop.f32.mrb[0].mxu0
        %1948 = vdwg.mxu0
        %v1949 = vmax.f32 %v1943, 0.0
        %v1950 = vmax.f32 %v1946, 0.0
        %v1951 = vpack.c.bf16 %v1950, %v1949
        %v1952 = vld [vmem:[%s11] sm:$0xf]
        %v1953 = vld [vmem:[%s11 + $0x4] sm:$0xf]
        %v1954 = vld [vmem:[%s11 + $0x8] sm:$0xf]
        %v1955 = vld [vmem:[%s11 + $0xc] sm:$0xf]
        %v1956 = vld [vmem:[%s11 + $0x10] sm:$0xf]
        %v1957 = vld [vmem:[%s11 + $0x14] sm:$0xf]
        %v1958 = vld [vmem:[%s11 + $0x18] sm:$0xf]
        %v1959 = vld [vmem:[%s11 + $0x1c] sm:$0xf]
        %v1960 = vld [vmem:[%s11 + $0x20] sm:$0xf]
        %v1961 = vld [vmem:[%s11 + $0x24] sm:$0xf]
        %v1962 = vld [vmem:[%s11 + $0x28] sm:$0xf]
        %v1963 = vld [vmem:[%s11 + $0x2c] sm:$0xf]
        %v1964 = vld [vmem:[%s11 + $0x30] sm:$0xf]
        %v1965 = vld [vmem:[%s11 + $0x34] sm:$0xf]
        %v1966 = vld [vmem:[%s11 + $0x38] sm:$0xf]
        %v1967 = vld [vmem:[%s11 + $0x3c] sm:$0xf]
        %v1968 = vld [vmem:[%s12] sm:$0x1]
        %v1970 = vlaneseq
        %v1971 = vshrl.u32 %v1970, 7
        %v1972 = vsub.s32 0, %v1971
        %v1973 = vrot.slane %v1968, %v1972
        %v1991 = vunpack.c.l.b16 %v1952
        %v1992 = vunpack.c.l.b16 %v1953
        %v1993 = vunpack.c.l.b16 %v1954
        %v1994 = vunpack.c.l.b16 %v1955
        %v1995 = vunpack.c.l.b16 %v1956
        %v1996 = vunpack.c.l.b16 %v1957
        %v1997 = vunpack.c.l.b16 %v1958
        %v1998 = vunpack.c.l.b16 %v1959
        %v1999 = vunpack.c.l.b16 %v1960
        %v2000 = vunpack.c.l.b16 %v1961
        %v2001 = vunpack.c.l.b16 %v1962
        %v2002 = vunpack.c.l.b16 %v1963
        %v2003 = vunpack.c.l.b16 %v1964
        %v2004 = vunpack.c.l.b16 %v1965
        %v2005 = vunpack.c.l.b16 %v1966
        %v2006 = vunpack.c.l.b16 %v1967
        %v2007 = vpack.c.b16 %v1992, %v1991
        %v2008 = vpack.c.b16 %v1994, %v1993
        %v2009 = vpack.c.b16 %v1996, %v1995
        %v2010 = vpack.c.b16 %v1998, %v1997
        %v2011 = vpack.c.b16 %v2000, %v1999
        %v2012 = vpack.c.b16 %v2002, %v2001
        %v2013 = vpack.c.b16 %v2004, %v2003
        %v2014 = vpack.c.b16 %v2006, %v2005
        %2023 = vmatprep.subr.bf16.mxu0 0
        %2024 = vmatpush1.bf16.msra.mxu0 %v2007
        %2025 = vmatprep.subr.bf16.mxu0 0
        %2026 = vmatpush1.bf16.msra.mxu0 %v2008
        %2027 = vmatprep.subr.bf16.mxu0 0
        %2028 = vmatpush1.bf16.msra.mxu0 %v2009
        %2029 = vmatprep.subr.bf16.mxu0 0
        %2030 = vmatpush1.bf16.msra.mxu0 %v2010
        %2031 = vmatprep.subr.bf16.mxu0 0
        %2032 = vmatpush1.bf16.msra.mxu0 %v2011
        %2033 = vmatprep.subr.bf16.mxu0 0
        %2034 = vmatpush1.bf16.msra.mxu0 %v2012
        %2035 = vmatprep.subr.bf16.mxu0 0
        %2036 = vmatpush1.bf16.msra.mxu0 %v2013
        %2037 = vmatprep.subr.bf16.mxu0 0
        %2038 = vmatpush1.bf16.msra.mxu0 %v2014
        %2039 = vmatprep.subr.bf16.mxu0 0
        %2040 = vmatpush1.bf16.msra.mxu0 0
        %2041 = vmatprep.subr.bf16.mxu0 0
        %2042 = vmatpush1.bf16.msra.mxu0 0
        %2043 = vmatprep.subr.bf16.mxu0 0
        %2044 = vmatpush1.bf16.msra.mxu0 0
        %2045 = vmatprep.subr.bf16.mxu0 0
        %2046 = vmatpush1.bf16.msra.mxu0 0
        %2047 = vmatprep.subr.bf16.mxu0 0
        %2048 = vmatpush1.bf16.msra.mxu0 0
        %2049 = vmatprep.subr.bf16.mxu0 0
        %2050 = vmatpush1.bf16.msra.mxu0 0
        %2051 = vmatprep.subr.bf16.mxu0 0
        %2052 = vmatpush1.bf16.msra.mxu0 0
        %2053 = vmatprep.subr.bf16.mxu0 0
        %2054 = vmatpush1.bf16.msra.mxu0 0
        %2055 = vmatprep.mubr.bf16.mxu0 0
        %2056 = vmatmul.mubr.bf16.gmra.mrb[0].mxu0 %v1951
        %v2057 = vpop.f32.mrb[0].mxu0
        %v2058 = vadd.f32 %v1973, %v2057
        %v2059 = vpop.f32.mrb[0].mxu0
        %v2060 = vpop.f32.mrb[0].mxu0
        %v2061 = vadd.f32 %v1973, %v2060
        %v2062 = vpop.f32.mrb[0].mxu0
        %2063 = vdwg.mxu0
        %v2064 = vadd.f32 %v1835, %v2058
        %v2065 = vadd.f32 %v1836, %v2061
        %2066 = vst.msk [vmem:[%s447] sm:$0xff] %vm458, %v2064
        %2067 = vst.msk [vmem:[%s447 + $0x8] sm:$0xff] %vm458, %v2065
        %s2068 = sand.u32 %s314, 1
        %s2069 = scalar_lea.sflag [#allocation4], %s2068
        %s2070 = sand.u32 %s314, 1
        %s2071 = smul.addr %s2070, 16
        %s2072 = scalar_lea.vmem [#allocation5], %s2071
        // Predicated region
        $region77: #{tpu_custom_call.1} parent=71 // pred_check
          %p2073 = pneg %p324
        $region78: #{tpu_custom_call.1} parent=71 // pred_check_branch
          %2075 = sbr.rel (%p2073) target = $region80
        $region79: #{tpu_custom_call.1} parent=71 // pred_region
          %s2076 = smul.u32 2, %s28
          %s2078 = ssub.s32 256, 256
          %2079 = vsyncadd %s2069, %s2078
          %s2080 = smul.addr %s2076, 128
          %s2081 = scalar_lea.hbm %s13, %s2080
          %s2082 = sshll.u32 %s2072, 4
          %s2083 = int_to_ptr.vmem [resolvable:$true] %s2082
          %2088 = dma.vmem_to_hbm [thread:$0]  %s2083, 256, %s2081, %s2069, 128, 128, 8
        $region80: #{tpu_custom_call.1} parent=71 // pred_fallthru
          _
      $region72: #{tpu_custom_call.1} parent=5 // pred_fallthru
        _
      %p2089 = scmp.le.s32.totalorder 2, %s23
      // Predicated region
      $region81: #{tpu_custom_call.1} parent=5 // pred_check
        %p2090 = pneg %p2089
      $region82: #{tpu_custom_call.1} parent=5 // pred_check_branch
        %2092 = sbr.rel (%p2090) target = $region84
      $region83: #{tpu_custom_call.1} parent=5 // pred_region
        %s2093 = ssub.s32 %s23, 2
        // Predicated region
        $region85: #{tpu_custom_call.1} parent=83 // pred_check
          %p2094 = pneg %p330
        $region86: #{tpu_custom_call.1} parent=83 // pred_check_branch
          %2096 = sbr.rel (%p2094) target = $region88
        $region87: #{tpu_custom_call.1} parent=83 // pred_region
          %s2097 = sand.u32 %s315, 1
          %s2098 = scalar_lea.sflag [#allocation4], %s2097
          %s2099 = sand.u32 %s315, 1
          %s2100 = smul.addr %s2099, 16
          %s2101 = scalar_lea.vmem [#allocation5], %s2100
          %2102 = dma.done %s2098, 256
        $region88: #{tpu_custom_call.1} parent=83 // pred_fallthru
          _
      $region84: #{tpu_custom_call.1} parent=5 // pred_fallthru
        _
    $region6: #{tpu_custom_call.1} parent=1 // loop_footer
      %s27 = sadd.s32 1, %s23
    $region7: #{tpu_custom_call.1} parent=1 // loop_footer_branch
      %22 = sbr.rel target = $region3
    $region8: #{tpu_custom_call.1} parent=1 // loop_exit
      _
    %2103 = vsyncpa [#allocation3], 1
    %s2104 = scalar_lea.sflag [#allocation3], 1
    %2105 = vsyncpa %s2104, 1
    %2106 = vsyncpa [#allocation4], 1
    %s2107 = scalar_lea.sflag [#allocation4], 1
    %2108 = vsyncpa %s2107, 1

</llo_original>
